<compile_context>
chip_gen: v6e
topology: v6e:2x2x1
jax: 0.10.0
libtpu: 0.0.40
codegen_flags: <defaults>
</compile_context>

<pallas_src>
import functools

import jax
import jax.numpy as jnp
from jax.experimental import pallas as pl
from jax.experimental.pallas import tpu as pltpu

EPS = 1e-5


# --------------------------- pass 1: conv + stats ----------------------------
def _conv_stats_kernel(x_ref, w_ref, y_ref, sum_ref, sq_ref, xp_ref, *,
                       hi, wi, ho, wo, cin, cout, kh, kw, pad):
    # x_ref : (1, hi, wi, cin)   one image, f32
    # w_ref : (kh*kw, cin, cout) conv taps, bf16 (HWIO tap order)
    # y_ref : (1, ho, wo, cout)  raw conv output (pre-BN), f32
    # sum_ref / sq_ref : (1, cout) per-channel sum / sum-of-squares,
    #                    accumulated across the batch grid axis
    # xp_ref: (hi+2p, wi+2p, cin) VMEM scratch, halo ring zeroed once
    n = pl.program_id(0)

    if pad > 0:
        @pl.when(n == 0)
        def _zero_halo():
            # Halo ring is zeroed once; the interior is overwritten each step.
            xp_ref[...] = jnp.zeros(xp_ref.shape, jnp.float32)

    xp_ref[pad:pad + hi, pad:pad + wi, :] = x_ref[...].reshape(hi, wi, cin)

    # 3x3 conv as shifted (M, Cin) x (Cin, Cout) matmuls, bf16 in / f32 acc.
    acc = None
    for t in range(kh * kw):
        dy, dx = divmod(t, kw)
        xs = xp_ref[dy:dy + ho, dx:dx + wo, :].reshape(ho * wo, cin)
        part = jnp.dot(xs.astype(jnp.bfloat16), w_ref[t],
                       preferred_element_type=jnp.float32)
        acc = part if acc is None else acc + part      # seeded by first tap

    y_ref[...] = acc.reshape(1, ho, wo, cout)

    # Single-pass per-channel statistics for the two-phase BN reduction.
    s = jnp.sum(acc, axis=0, keepdims=True)            # (1, cout)
    ss = jnp.sum(acc * acc, axis=0, keepdims=True)     # (1, cout)

    @pl.when(n == 0)
    def _init_stats():
        sum_ref[...] = s
        sq_ref[...] = ss

    @pl.when(n > 0)
    def _acc_stats():
        sum_ref[...] = sum_ref[...] + s
        sq_ref[...] = sq_ref[...] + ss


# ----------------------- pass 2: normalize + affine + relu -------------------
def _bn_relu_kernel(y_ref, sum_ref, sq_ref, g_ref, b_ref, o_ref, *, m_total):
    _, ho, wo, cout = y_ref.shape
    inv_m = 1.0 / float(m_total)
    mean = sum_ref[...] * inv_m                                   # (1, cout)
    var = jnp.maximum(sq_ref[...] * inv_m - mean * mean, 0.0)     # biased var
    inv_std = jax.lax.rsqrt(var + EPS)
    scale = g_ref[...] * inv_std                                  # (1, cout)
    shift = b_ref[...] - mean * scale                             # (1, cout)

    y = y_ref[...].reshape(ho * wo, cout)
    out = jnp.maximum(y * scale + shift, 0.0)
    o_ref[...] = out.reshape(1, ho, wo, cout)


# --------------------------------- wrapper -----------------------------------
@functools.partial(jax.jit, static_argnames=("padding",))
def basic_conv(x_nchw, w_oihw, gamma, beta, *, padding=1):
    """BasicConv forward: relu(bn(conv(x))).  NCHW in / NCHW out."""
    N, Cin, H, W = x_nchw.shape
    Cout, Cin_w, KH, KW = w_oihw.shape
    assert Cin == Cin_w
    Ho = H + 2 * padding - KH + 1
    Wo = W + 2 * padding - KW + 1

    x = jnp.transpose(x_nchw, (0, 2, 3, 1)).astype(jnp.float32)        # NHWC
    # (Cout, Cin, KH, KW) -> (KH*KW, Cin, Cout), bf16 for the MXU.
    w_taps = (jnp.transpose(w_oihw, (2, 3, 1, 0))
              .reshape(KH * KW, Cin, Cout).astype(jnp.bfloat16))

    kern1 = functools.partial(
        _conv_stats_kernel, hi=H, wi=W, ho=Ho, wo=Wo,
        cin=Cin, cout=Cout, kh=KH, kw=KW, pad=padding)

    y, s_sum, s_sq = pl.pallas_call(
        kern1,
        grid=(N,),
        in_specs=[
            pl.BlockSpec((1, H, W, Cin), lambda n: (n, 0, 0, 0)),
            pl.BlockSpec((KH * KW, Cin, Cout), lambda n: (0, 0, 0)),
        ],
        out_specs=(
            pl.BlockSpec((1, Ho, Wo, Cout), lambda n: (n, 0, 0, 0)),
            pl.BlockSpec((1, Cout), lambda n: (0, 0)),
            pl.BlockSpec((1, Cout), lambda n: (0, 0)),
        ),
        out_shape=(
            jax.ShapeDtypeStruct((N, Ho, Wo, Cout), jnp.float32),
            jax.ShapeDtypeStruct((1, Cout), jnp.float32),
            jax.ShapeDtypeStruct((1, Cout), jnp.float32),
        ),
        scratch_shapes=[
            pltpu.VMEM((H + 2 * padding, W + 2 * padding, Cin), jnp.float32),
        ],
        # Stats accumulate across the batch axis -> must be "arbitrary".
        compiler_params=pltpu.CompilerParams(
            dimension_semantics=("arbitrary",)),
    )(x, w_taps)

    kern2 = functools.partial(_bn_relu_kernel, m_total=N * Ho * Wo)
    out = pl.pallas_call(
        kern2,
        grid=(N,),
        in_specs=[
            pl.BlockSpec((1, Ho, Wo, Cout), lambda n: (n, 0, 0, 0)),
            pl.BlockSpec((1, Cout), lambda n: (0, 0)),
            pl.BlockSpec((1, Cout), lambda n: (0, 0)),
            pl.BlockSpec((1, Cout), lambda n: (0, 0)),
            pl.BlockSpec((1, Cout), lambda n: (0, 0)),
        ],
        out_specs=pl.BlockSpec((1, Ho, Wo, Cout), lambda n: (n, 0, 0, 0)),
        out_shape=jax.ShapeDtypeStruct((N, Ho, Wo, Cout), jnp.float32),
        # Independent per-image work -> "parallel" (2nd TC on v7x).
        compiler_params=pltpu.CompilerParams(
            dimension_semantics=("parallel",)),
    )(y, s_sum, s_sq,
      gamma.reshape(1, Cout).astype(jnp.float32),
      beta.reshape(1, Cout).astype(jnp.float32))

    return jnp.transpose(out, (0, 3, 1, 2))                          # NCHW


# ----------------------------- pure-JAX reference ----------------------------
def _ref_forward(x_nchw, w_oihw, gamma, beta, padding=1):
    y = jax.lax.conv_general_dilated(
        x_nchw, w_oihw, window_strides=(1, 1),
        padding=((padding, padding), (padding, padding)),
        dimension_numbers=("NCHW", "OIHW", "NCHW"),
        precision=jax.lax.Precision.HIGHEST)
    m = y.mean(axis=(0, 2, 3), keepdims=True)
    v = ((y - m) ** 2).mean(axis=(0, 2, 3), keepdims=True)
    y = ((y - m) * jax.lax.rsqrt(v + EPS) * gamma.reshape(1, -1, 1, 1)
         + beta.reshape(1, -1, 1, 1))
    return jax.nn.relu(y)


if __name__ == "__main__":
    # BasicConv(in_planes=4, out_planes=8, kernel_size=3, stride=1, padding=1,
    #           relu=True, bn=True, bias=False)
    N, Cin, Cout, H, W = 2, 4, 8, 16, 16
    key = jax.random.PRNGKey(0)
    kx, kw, kg, kb = jax.random.split(key, 4)

    x = jax.random.normal(kx, (N, Cin, H, W), jnp.float32)
    w = jax.random.normal(kw, (Cout, Cin, 3, 3), jnp.float32) * 0.2
    # BatchNorm affine params (PyTorch inits to 1/0; perturbed to be non-trivial)
    gamma = 1.0 + 0.1 * jax.random.normal(kg, (Cout,), jnp.float32)
    beta = 0.1 * jax.random.normal(kb, (Cout,), jnp.float32)

    out = jax.block_until_ready(basic_conv(x, w, gamma, beta, padding=1))
    ref = jax.block_until_ready(_ref_forward(x, w, gamma, beta, padding=1))

    assert out.shape == (N, Cout, H, W), out.shape
    # bf16 MXU inputs (f32 accumulation) vs. an f32 HIGHEST reference.
    assert jnp.allclose(out, ref, atol=2e-2, rtol=2e-2), (
        float(jnp.max(jnp.abs(out - ref))))
    print("KERNEL_OK")
</pallas_src>

<mosaic_0001>
module attributes {stable_mosaic.version = 11 : i64} {
  func.func @_conv_stats_kernel(%arg0: i32, %arg1: memref<1x16x16x4xf32, #tpu.memory_space<vmem>>, %arg2: memref<9x4x8xbf16, #tpu.memory_space<vmem>>, %arg3: memref<1x16x16x8xf32, #tpu.memory_space<vmem>>, %arg4: memref<1x8xf32, #tpu.memory_space<vmem>>, %arg5: memref<1x8xf32, #tpu.memory_space<vmem>>, %arg6: memref<18x18x4xf32, #tpu.memory_space<vmem>>) attributes {dimension_semantics = [#tpu.dimension_semantics<arbitrary>], iteration_bounds = array<i64: 2>, scalar_prefetch = 0 : i64, scratch_operands = 1 : i64, tpu.core_type = #tpu.core_type<tc>, window_params = [{transform_indices = @transform_0, window_bounds = array<i64: 1, 16, 16, 4>}, {pipeline_mode = #tpu.pipeline_mode<synchronous>, transform_indices = @transform_1, window_bounds = array<i64: 9, 4, 8>}, {transform_indices = @transform_2, window_bounds = array<i64: 1, 16, 16, 8>}, {pipeline_mode = #tpu.pipeline_mode<synchronous>, transform_indices = @transform_3, window_bounds = array<i64: 1, 8>}, {pipeline_mode = #tpu.pipeline_mode<synchronous>, transform_indices = @transform_4, window_bounds = array<i64: 1, 8>}]} {
    %c0_i32 = arith.constant 0 : i32
    %0 = arith.cmpi eq, %arg0, %c0_i32 : i32
    %1 = arith.extui %0 : i1 to i32
    %c0_i32_0 = arith.constant 0 : i32
    %2 = arith.cmpi ne, %1, %c0_i32_0 : i32
    scf.if %2 {
      %cst_71 = arith.constant 0.000000e+00 : f32
      %81 = vector.broadcast %cst_71 : f32 to vector<18x18x4xf32>
      %c0_72 = arith.constant 0 : index
      %c0_73 = arith.constant 0 : index
      %c0_74 = arith.constant 0 : index
      %82 = vector.load %arg6[%c0_72, %c0_73, %c0_74] : memref<18x18x4xf32, #tpu.memory_space<vmem>>, vector<18x18x4xf32>
      tpu.vector_store %arg6[%c0_72, %c0_73, %c0_74], %81 {strides = array<i32>} : memref<18x18x4xf32, #tpu.memory_space<vmem>>, vector<18x18x4xf32>,
    } else {
    }
    %c0 = arith.constant 0 : index
    %c0_1 = arith.constant 0 : index
    %c0_2 = arith.constant 0 : index
    %c0_3 = arith.constant 0 : index
    %3 = vector.load %arg1[%c0, %c0_1, %c0_2, %c0_3] : memref<1x16x16x4xf32, #tpu.memory_space<vmem>>, vector<1x16x16x4xf32>
    %4 = vector.shape_cast %3 : vector<1x16x16x4xf32> to vector<16x16x4xf32>
    %c1 = arith.constant 1 : index
    %c1_4 = arith.constant 1 : index
    %c0_5 = arith.constant 0 : index
    %5 = vector.load %arg6[%c1, %c1_4, %c0_5] : memref<18x18x4xf32, #tpu.memory_space<vmem>>, vector<16x16x4xf32>
    tpu.vector_store %arg6[%c1, %c1_4, %c0_5], %4 {strides = array<i32>} : memref<18x18x4xf32, #tpu.memory_space<vmem>>, vector<16x16x4xf32>,
    %c0_6 = arith.constant 0 : index
    %c0_7 = arith.constant 0 : index
    %c0_8 = arith.constant 0 : index
    %6 = vector.load %arg6[%c0_6, %c0_7, %c0_8] : memref<18x18x4xf32, #tpu.memory_space<vmem>>, vector<16x16x4xf32>
    %7 = vector.shape_cast %6 : vector<16x16x4xf32> to vector<256x4xf32>
    %8 = arith.truncf %7 : vector<256x4xf32> to vector<256x4xbf16>
    %c0_9 = arith.constant 0 : index
    %c0_10 = arith.constant 0 : index
    %c0_11 = arith.constant 0 : index
    %9 = vector.load %arg2[%c0_9, %c0_10, %c0_11] : memref<9x4x8xbf16, #tpu.memory_space<vmem>>, vector<1x4x8xbf16>
    %10 = vector.shape_cast %9 : vector<1x4x8xbf16> to vector<4x8xbf16>
    %cst = arith.constant dense<0.000000e+00> : vector<256x8xf32>
    %11 = tpu.matmul %8, %10, %cst {dimension_numbers = #tpu.dot_dimension_numbers<[1], [0], [0], [1], [0, 0, 1, 1], [], []>} : vector<256x4xbf16>, vector<4x8xbf16>, vector<256x8xf32> -> vector<256x8xf32>
    %c0_12 = arith.constant 0 : index
    %c1_13 = arith.constant 1 : index
    %c0_14 = arith.constant 0 : index
    %12 = vector.load %arg6[%c0_12, %c1_13, %c0_14] : memref<18x18x4xf32, #tpu.memory_space<vmem>>, vector<16x16x4xf32>
    %13 = vector.shape_cast %12 : vector<16x16x4xf32> to vector<256x4xf32>
    %14 = arith.truncf %13 : vector<256x4xf32> to vector<256x4xbf16>
    %c1_15 = arith.constant 1 : index
    %c0_16 = arith.constant 0 : index
    %c0_17 = arith.constant 0 : index
    %15 = vector.load %arg2[%c1_15, %c0_16, %c0_17] : memref<9x4x8xbf16, #tpu.memory_space<vmem>>, vector<1x4x8xbf16>
    %16 = vector.shape_cast %15 : vector<1x4x8xbf16> to vector<4x8xbf16>
    %cst_18 = arith.constant dense<0.000000e+00> : vector<256x8xf32>
    %17 = tpu.matmul %14, %16, %cst_18 {dimension_numbers = #tpu.dot_dimension_numbers<[1], [0], [0], [1], [0, 0, 1, 1], [], []>} : vector<256x4xbf16>, vector<4x8xbf16>, vector<256x8xf32> -> vector<256x8xf32>
    %18 = arith.addf %11, %17 : vector<256x8xf32>
    %c0_19 = arith.constant 0 : index
    %c2 = arith.constant 2 : index
    %c0_20 = arith.constant 0 : index
    %19 = vector.load %arg6[%c0_19, %c2, %c0_20] : memref<18x18x4xf32, #tpu.memory_space<vmem>>, vector<16x16x4xf32>
    %20 = vector.shape_cast %19 : vector<16x16x4xf32> to vector<256x4xf32>
    %21 = arith.truncf %20 : vector<256x4xf32> to vector<256x4xbf16>
    %c2_21 = arith.constant 2 : index
    %c0_22 = arith.constant 0 : index
    %c0_23 = arith.constant 0 : index
    %22 = vector.load %arg2[%c2_21, %c0_22, %c0_23] : memref<9x4x8xbf16, #tpu.memory_space<vmem>>, vector<1x4x8xbf16>
    %23 = vector.shape_cast %22 : vector<1x4x8xbf16> to vector<4x8xbf16>
    %cst_24 = arith.constant dense<0.000000e+00> : vector<256x8xf32>
    %24 = tpu.matmul %21, %23, %cst_24 {dimension_numbers = #tpu.dot_dimension_numbers<[1], [0], [0], [1], [0, 0, 1, 1], [], []>} : vector<256x4xbf16>, vector<4x8xbf16>, vector<256x8xf32> -> vector<256x8xf32>
    %25 = arith.addf %18, %24 : vector<256x8xf32>
    %c1_25 = arith.constant 1 : index
    %c0_26 = arith.constant 0 : index
    %c0_27 = arith.constant 0 : index
    %26 = vector.load %arg6[%c1_25, %c0_26, %c0_27] : memref<18x18x4xf32, #tpu.memory_space<vmem>>, vector<16x16x4xf32>
    %27 = vector.shape_cast %26 : vector<16x16x4xf32> to vector<256x4xf32>
    %28 = arith.truncf %27 : vector<256x4xf32> to vector<256x4xbf16>
    %c3 = arith.constant 3 : index
    %c0_28 = arith.constant 0 : index
    %c0_29 = arith.constant 0 : index
    %29 = vector.load %arg2[%c3, %c0_28, %c0_29] : memref<9x4x8xbf16, #tpu.memory_space<vmem>>, vector<1x4x8xbf16>
    %30 = vector.shape_cast %29 : vector<1x4x8xbf16> to vector<4x8xbf16>
    %cst_30 = arith.constant dense<0.000000e+00> : vector<256x8xf32>
    %31 = tpu.matmul %28, %30, %cst_30 {dimension_numbers = #tpu.dot_dimension_numbers<[1], [0], [0], [1], [0, 0, 1, 1], [], []>} : vector<256x4xbf16>, vector<4x8xbf16>, vector<256x8xf32> -> vector<256x8xf32>
    %32 = arith.addf %25, %31 : vector<256x8xf32>
    %c1_31 = arith.constant 1 : index
    %c1_32 = arith.constant 1 : index
    %c0_33 = arith.constant 0 : index
    %33 = vector.load %arg6[%c1_31, %c1_32, %c0_33] : memref<18x18x4xf32, #tpu.memory_space<vmem>>, vector<16x16x4xf32>
    %34 = vector.shape_cast %33 : vector<16x16x4xf32> to vector<256x4xf32>
    %35 = arith.truncf %34 : vector<256x4xf32> to vector<256x4xbf16>
    %c4 = arith.constant 4 : index
    %c0_34 = arith.constant 0 : index
    %c0_35 = arith.constant 0 : index
    %36 = vector.load %arg2[%c4, %c0_34, %c0_35] : memref<9x4x8xbf16, #tpu.memory_space<vmem>>, vector<1x4x8xbf16>
    %37 = vector.shape_cast %36 : vector<1x4x8xbf16> to vector<4x8xbf16>
    %cst_36 = arith.constant dense<0.000000e+00> : vector<256x8xf32>
    %38 = tpu.matmul %35, %37, %cst_36 {dimension_numbers = #tpu.dot_dimension_numbers<[1], [0], [0], [1], [0, 0, 1, 1], [], []>} : vector<256x4xbf16>, vector<4x8xbf16>, vector<256x8xf32> -> vector<256x8xf32>
    %39 = arith.addf %32, %38 : vector<256x8xf32>
    %c1_37 = arith.constant 1 : index
    %c2_38 = arith.constant 2 : index
    %c0_39 = arith.constant 0 : index
    %40 = vector.load %arg6[%c1_37, %c2_38, %c0_39] : memref<18x18x4xf32, #tpu.memory_space<vmem>>, vector<16x16x4xf32>
    %41 = vector.shape_cast %40 : vector<16x16x4xf32> to vector<256x4xf32>
    %42 = arith.truncf %41 : vector<256x4xf32> to vector<256x4xbf16>
    %c5 = arith.constant 5 : index
    %c0_40 = arith.constant 0 : index
    %c0_41 = arith.constant 0 : index
    %43 = vector.load %arg2[%c5, %c0_40, %c0_41] : memref<9x4x8xbf16, #tpu.memory_space<vmem>>, vector<1x4x8xbf16>
    %44 = vector.shape_cast %43 : vector<1x4x8xbf16> to vector<4x8xbf16>
    %cst_42 = arith.constant dense<0.000000e+00> : vector<256x8xf32>
    %45 = tpu.matmul %42, %44, %cst_42 {dimension_numbers = #tpu.dot_dimension_numbers<[1], [0], [0], [1], [0, 0, 1, 1], [], []>} : vector<256x4xbf16>, vector<4x8xbf16>, vector<256x8xf32> -> vector<256x8xf32>
    %46 = arith.addf %39, %45 : vector<256x8xf32>
    %c2_43 = arith.constant 2 : index
    %c0_44 = arith.constant 0 : index
    %c0_45 = arith.constant 0 : index
    %47 = vector.load %arg6[%c2_43, %c0_44, %c0_45] : memref<18x18x4xf32, #tpu.memory_space<vmem>>, vector<16x16x4xf32>
    %48 = vector.shape_cast %47 : vector<16x16x4xf32> to vector<256x4xf32>
    %49 = arith.truncf %48 : vector<256x4xf32> to vector<256x4xbf16>
    %c6 = arith.constant 6 : index
    %c0_46 = arith.constant 0 : index
    %c0_47 = arith.constant 0 : index
    %50 = vector.load %arg2[%c6, %c0_46, %c0_47] : memref<9x4x8xbf16, #tpu.memory_space<vmem>>, vector<1x4x8xbf16>
    %51 = vector.shape_cast %50 : vector<1x4x8xbf16> to vector<4x8xbf16>
    %cst_48 = arith.constant dense<0.000000e+00> : vector<256x8xf32>
    %52 = tpu.matmul %49, %51, %cst_48 {dimension_numbers = #tpu.dot_dimension_numbers<[1], [0], [0], [1], [0, 0, 1, 1], [], []>} : vector<256x4xbf16>, vector<4x8xbf16>, vector<256x8xf32> -> vector<256x8xf32>
    %53 = arith.addf %46, %52 : vector<256x8xf32>
    %c2_49 = arith.constant 2 : index
    %c1_50 = arith.constant 1 : index
    %c0_51 = arith.constant 0 : index
    %54 = vector.load %arg6[%c2_49, %c1_50, %c0_51] : memref<18x18x4xf32, #tpu.memory_space<vmem>>, vector<16x16x4xf32>
    %55 = vector.shape_cast %54 : vector<16x16x4xf32> to vector<256x4xf32>
    %56 = arith.truncf %55 : vector<256x4xf32> to vector<256x4xbf16>
    %c7 = arith.constant 7 : index
    %c0_52 = arith.constant 0 : index
    %c0_53 = arith.constant 0 : index
    %57 = vector.load %arg2[%c7, %c0_52, %c0_53] : memref<9x4x8xbf16, #tpu.memory_space<vmem>>, vector<1x4x8xbf16>
    %58 = vector.shape_cast %57 : vector<1x4x8xbf16> to vector<4x8xbf16>
    %cst_54 = arith.constant dense<0.000000e+00> : vector<256x8xf32>
    %59 = tpu.matmul %56, %58, %cst_54 {dimension_numbers = #tpu.dot_dimension_numbers<[1], [0], [0], [1], [0, 0, 1, 1], [], []>} : vector<256x4xbf16>, vector<4x8xbf16>, vector<256x8xf32> -> vector<256x8xf32>
    %60 = arith.addf %53, %59 : vector<256x8xf32>
    %c2_55 = arith.constant 2 : index
    %c2_56 = arith.constant 2 : index
    %c0_57 = arith.constant 0 : index
    %61 = vector.load %arg6[%c2_55, %c2_56, %c0_57] : memref<18x18x4xf32, #tpu.memory_space<vmem>>, vector<16x16x4xf32>
    %62 = vector.shape_cast %61 : vector<16x16x4xf32> to vector<256x4xf32>
    %63 = arith.truncf %62 : vector<256x4xf32> to vector<256x4xbf16>
    %c8 = arith.constant 8 : index
    %c0_58 = arith.constant 0 : index
    %c0_59 = arith.constant 0 : index
    %64 = vector.load %arg2[%c8, %c0_58, %c0_59] : memref<9x4x8xbf16, #tpu.memory_space<vmem>>, vector<1x4x8xbf16>
    %65 = vector.shape_cast %64 : vector<1x4x8xbf16> to vector<4x8xbf16>
    %cst_60 = arith.constant dense<0.000000e+00> : vector<256x8xf32>
    %66 = tpu.matmul %63, %65, %cst_60 {dimension_numbers = #tpu.dot_dimension_numbers<[1], [0], [0], [1], [0, 0, 1, 1], [], []>} : vector<256x4xbf16>, vector<4x8xbf16>, vector<256x8xf32> -> vector<256x8xf32>
    %67 = arith.addf %60, %66 : vector<256x8xf32>
    %68 = vector.shape_cast %67 : vector<256x8xf32> to vector<1x16x16x8xf32>
    %c0_61 = arith.constant 0 : index
    %c0_62 = arith.constant 0 : index
    %c0_63 = arith.constant 0 : index
    %c0_64 = arith.constant 0 : index
    %69 = vector.load %arg3[%c0_61, %c0_62, %c0_63, %c0_64] : memref<1x16x16x8xf32, #tpu.memory_space<vmem>>, vector<1x16x16x8xf32>
    tpu.vector_store %arg3[%c0_61, %c0_62, %c0_63, %c0_64], %68 {strides = array<i32>} : memref<1x16x16x8xf32, #tpu.memory_space<vmem>>, vector<1x16x16x8xf32>,
    %cst_65 = arith.constant dense<0.000000e+00> : vector<8xf32>
    %70 = vector.multi_reduction <add>, %67, %cst_65 [0] : vector<256x8xf32> to vector<8xf32>
    %71 = vector.shape_cast %70 : vector<8xf32> to vector<1x8xf32>
    %72 = arith.mulf %67, %67 : vector<256x8xf32>
    %cst_66 = arith.constant dense<0.000000e+00> : vector<8xf32>
    %73 = vector.multi_reduction <add>, %72, %cst_66 [0] : vector<256x8xf32> to vector<8xf32>
    %74 = vector.shape_cast %73 : vector<8xf32> to vector<1x8xf32>
    %c0_i32_67 = arith.constant 0 : i32
    %75 = arith.cmpi eq, %arg0, %c0_i32_67 : i32
    %76 = arith.extui %75 : i1 to i32
    %c0_i32_68 = arith.constant 0 : i32
    %77 = arith.cmpi ne, %76, %c0_i32_68 : i32
    scf.if %77 {
      %c0_71 = arith.constant 0 : index
      %c0_72 = arith.constant 0 : index
      %81 = vector.load %arg4[%c0_71, %c0_72] : memref<1x8xf32, #tpu.memory_space<vmem>>, vector<1x8xf32>
      tpu.vector_store %arg4[%c0_71, %c0_72], %71 {strides = array<i32>} : memref<1x8xf32, #tpu.memory_space<vmem>>, vector<1x8xf32>,
      %c0_73 = arith.constant 0 : index
      %c0_74 = arith.constant 0 : index
      %82 = vector.load %arg5[%c0_73, %c0_74] : memref<1x8xf32, #tpu.memory_space<vmem>>, vector<1x8xf32>
      tpu.vector_store %arg5[%c0_73, %c0_74], %74 {strides = array<i32>} : memref<1x8xf32, #tpu.memory_space<vmem>>, vector<1x8xf32>,
    } else {
    }
    %c0_i32_69 = arith.constant 0 : i32
    %78 = arith.cmpi sgt, %arg0, %c0_i32_69 : i32
    %79 = arith.extui %78 : i1 to i32
    %c0_i32_70 = arith.constant 0 : i32
    %80 = arith.cmpi ne, %79, %c0_i32_70 : i32
    scf.if %80 {
      %c0_71 = arith.constant 0 : index
      %c0_72 = arith.constant 0 : index
      %81 = vector.load %arg4[%c0_71, %c0_72] : memref<1x8xf32, #tpu.memory_space<vmem>>, vector<1x8xf32>
      %82 = arith.addf %81, %71 : vector<1x8xf32>
      %c0_73 = arith.constant 0 : index
      %c0_74 = arith.constant 0 : index
      %83 = vector.load %arg4[%c0_73, %c0_74] : memref<1x8xf32, #tpu.memory_space<vmem>>, vector<1x8xf32>
      tpu.vector_store %arg4[%c0_73, %c0_74], %82 {strides = array<i32>} : memref<1x8xf32, #tpu.memory_space<vmem>>, vector<1x8xf32>,
      %c0_75 = arith.constant 0 : index
      %c0_76 = arith.constant 0 : index
      %84 = vector.load %arg5[%c0_75, %c0_76] : memref<1x8xf32, #tpu.memory_space<vmem>>, vector<1x8xf32>
      %85 = arith.addf %84, %74 : vector<1x8xf32>
      %c0_77 = arith.constant 0 : index
      %c0_78 = arith.constant 0 : index
      %86 = vector.load %arg5[%c0_77, %c0_78] : memref<1x8xf32, #tpu.memory_space<vmem>>, vector<1x8xf32>
      tpu.vector_store %arg5[%c0_77, %c0_78], %85 {strides = array<i32>} : memref<1x8xf32, #tpu.memory_space<vmem>>, vector<1x8xf32>,
    } else {
    }
    return
  }
  func.func @transform_0(%arg0: i32) -> (i32, i32, i32, i32) {
    %c0_i32 = arith.constant 0 : i32
    %c0_i32_0 = arith.constant 0 : i32
    %c0_i32_1 = arith.constant 0 : i32
    %c0_i32_2 = arith.constant 0 : i32
    return %arg0, %c0_i32, %c0_i32_0, %c0_i32_1 : i32, i32, i32, i32
  }
  func.func @transform_1(%arg0: i32) -> (i32, i32, i32) {
    %c0_i32 = arith.constant 0 : i32
    %c0_i32_0 = arith.constant 0 : i32
    %c0_i32_1 = arith.constant 0 : i32
    %c0_i32_2 = arith.constant 0 : i32
    return %c0_i32, %c0_i32_0, %c0_i32_1 : i32, i32, i32
  }
  func.func @transform_2(%arg0: i32) -> (i32, i32, i32, i32) {
    %c0_i32 = arith.constant 0 : i32
    %c0_i32_0 = arith.constant 0 : i32
    %c0_i32_1 = arith.constant 0 : i32
    %c0_i32_2 = arith.constant 0 : i32
    return %arg0, %c0_i32, %c0_i32_0, %c0_i32_1 : i32, i32, i32, i32
  }
  func.func @transform_3(%arg0: i32) -> (i32, i32) {
    %c0_i32 = arith.constant 0 : i32
    %c0_i32_0 = arith.constant 0 : i32
    %c0_i32_1 = arith.constant 0 : i32
    return %c0_i32, %c0_i32_0 : i32, i32
  }
  func.func @transform_4(%arg0: i32) -> (i32, i32) {
    %c0_i32 = arith.constant 0 : i32
    %c0_i32_0 = arith.constant 0 : i32
    %c0_i32_1 = arith.constant 0 : i32
    return %c0_i32, %c0_i32_0 : i32, i32
  }
}

module attributes {stable_mosaic.version = 11 : i64} {
  func.func @_bn_relu_kernel(%arg0: i32, %arg1: memref<1x16x16x8xf32, #tpu.memory_space<vmem>>, %arg2: memref<1x8xf32, #tpu.memory_space<vmem>>, %arg3: memref<1x8xf32, #tpu.memory_space<vmem>>, %arg4: memref<1x8xf32, #tpu.memory_space<vmem>>, %arg5: memref<1x8xf32, #tpu.memory_space<vmem>>, %arg6: memref<1x16x16x8xf32, #tpu.memory_space<vmem>>) attributes {dimension_semantics = [#tpu.dimension_semantics<parallel>], iteration_bounds = array<i64: 2>, scalar_prefetch = 0 : i64, scratch_operands = 0 : i64, tpu.core_type = #tpu.core_type<tc>, window_params = [{transform_indices = @transform_0, window_bounds = array<i64: 1, 16, 16, 8>}, {pipeline_mode = #tpu.pipeline_mode<synchronous>, transform_indices = @transform_1, window_bounds = array<i64: 1, 8>}, {pipeline_mode = #tpu.pipeline_mode<synchronous>, transform_indices = @transform_2, window_bounds = array<i64: 1, 8>}, {pipeline_mode = #tpu.pipeline_mode<synchronous>, transform_indices = @transform_3, window_bounds = array<i64: 1, 8>}, {pipeline_mode = #tpu.pipeline_mode<synchronous>, transform_indices = @transform_4, window_bounds = array<i64: 1, 8>}, {transform_indices = @transform_5, window_bounds = array<i64: 1, 16, 16, 8>}]} {
    %c0 = arith.constant 0 : index
    %c0_0 = arith.constant 0 : index
    %0 = vector.load %arg2[%c0, %c0_0] : memref<1x8xf32, #tpu.memory_space<vmem>>, vector<1x8xf32>
    %cst = arith.constant 0.001953125 : f32
    %1 = vector.broadcast %cst : f32 to vector<1x8xf32>
    %2 = arith.mulf %0, %1 : vector<1x8xf32>
    %c0_1 = arith.constant 0 : index
    %c0_2 = arith.constant 0 : index
    %3 = vector.load %arg3[%c0_1, %c0_2] : memref<1x8xf32, #tpu.memory_space<vmem>>, vector<1x8xf32>
    %cst_3 = arith.constant 0.001953125 : f32
    %4 = vector.broadcast %cst_3 : f32 to vector<1x8xf32>
    %5 = arith.mulf %3, %4 : vector<1x8xf32>
    %6 = arith.mulf %2, %2 : vector<1x8xf32>
    %7 = arith.subf %5, %6 : vector<1x8xf32>
    %cst_4 = arith.constant 0.000000e+00 : f32
    %8 = vector.broadcast %cst_4 : f32 to vector<1x8xf32>
    %9 = arith.maximumf %7, %8 : vector<1x8xf32>
    %cst_5 = arith.constant 9.99999974E-6 : f32
    %10 = vector.broadcast %cst_5 : f32 to vector<1x8xf32>
    %11 = arith.addf %9, %10 : vector<1x8xf32>
    %12 = math.rsqrt %11 : vector<1x8xf32>
    %c0_6 = arith.constant 0 : index
    %c0_7 = arith.constant 0 : index
    %13 = vector.load %arg4[%c0_6, %c0_7] : memref<1x8xf32, #tpu.memory_space<vmem>>, vector<1x8xf32>
    %14 = arith.mulf %13, %12 : vector<1x8xf32>
    %c0_8 = arith.constant 0 : index
    %c0_9 = arith.constant 0 : index
    %15 = vector.load %arg5[%c0_8, %c0_9] : memref<1x8xf32, #tpu.memory_space<vmem>>, vector<1x8xf32>
    %16 = arith.mulf %2, %14 : vector<1x8xf32>
    %17 = arith.subf %15, %16 : vector<1x8xf32>
    %c0_10 = arith.constant 0 : index
    %c0_11 = arith.constant 0 : index
    %c0_12 = arith.constant 0 : index
    %c0_13 = arith.constant 0 : index
    %18 = vector.load %arg1[%c0_10, %c0_11, %c0_12, %c0_13] : memref<1x16x16x8xf32, #tpu.memory_space<vmem>>, vector<1x16x16x8xf32>
    %19 = vector.shape_cast %18 : vector<1x16x16x8xf32> to vector<256x8xf32>
    %20 = vector.broadcast %14 : vector<1x8xf32> to vector<256x8xf32>
    %21 = arith.mulf %19, %20 : vector<256x8xf32>
    %22 = vector.broadcast %17 : vector<1x8xf32> to vector<256x8xf32>
    %23 = arith.addf %21, %22 : vector<256x8xf32>
    %cst_14 = arith.constant 0.000000e+00 : f32
    %24 = vector.broadcast %cst_14 : f32 to vector<256x8xf32>
    %25 = arith.maximumf %23, %24 : vector<256x8xf32>
    %26 = vector.shape_cast %25 : vector<256x8xf32> to vector<1x16x16x8xf32>
    %c0_15 = arith.constant 0 : index
    %c0_16 = arith.constant 0 : index
    %c0_17 = arith.constant 0 : index
    %c0_18 = arith.constant 0 : index
    %27 = vector.load %arg6[%c0_15, %c0_16, %c0_17, %c0_18] : memref<1x16x16x8xf32, #tpu.memory_space<vmem>>, vector<1x16x16x8xf32>
    tpu.vector_store %arg6[%c0_15, %c0_16, %c0_17, %c0_18], %26 {strides = array<i32>} : memref<1x16x16x8xf32, #tpu.memory_space<vmem>>, vector<1x16x16x8xf32>,
    return
  }
  func.func @transform_0(%arg0: i32) -> (i32, i32, i32, i32) {
    %c0_i32 = arith.constant 0 : i32
    %c0_i32_0 = arith.constant 0 : i32
    %c0_i32_1 = arith.constant 0 : i32
    %c0_i32_2 = arith.constant 0 : i32
    return %arg0, %c0_i32, %c0_i32_0, %c0_i32_1 : i32, i32, i32, i32
  }
  func.func @transform_1(%arg0: i32) -> (i32, i32) {
    %c0_i32 = arith.constant 0 : i32
    %c0_i32_0 = arith.constant 0 : i32
    %c0_i32_1 = arith.constant 0 : i32
    return %c0_i32, %c0_i32_0 : i32, i32
  }
  func.func @transform_2(%arg0: i32) -> (i32, i32) {
    %c0_i32 = arith.constant 0 : i32
    %c0_i32_0 = arith.constant 0 : i32
    %c0_i32_1 = arith.constant 0 : i32
    return %c0_i32, %c0_i32_0 : i32, i32
  }
  func.func @transform_3(%arg0: i32) -> (i32, i32) {
    %c0_i32 = arith.constant 0 : i32
    %c0_i32_0 = arith.constant 0 : i32
    %c0_i32_1 = arith.constant 0 : i32
    return %c0_i32, %c0_i32_0 : i32, i32
  }
  func.func @transform_4(%arg0: i32) -> (i32, i32) {
    %c0_i32 = arith.constant 0 : i32
    %c0_i32_0 = arith.constant 0 : i32
    %c0_i32_1 = arith.constant 0 : i32
    return %c0_i32, %c0_i32_0 : i32, i32
  }
  func.func @transform_5(%arg0: i32) -> (i32, i32, i32, i32) {
    %c0_i32 = arith.constant 0 : i32
    %c0_i32_0 = arith.constant 0 : i32
    %c0_i32_1 = arith.constant 0 : i32
    %c0_i32_2 = arith.constant 0 : i32
    return %arg0, %c0_i32, %c0_i32_0, %c0_i32_1 : i32, i32, i32, i32
  }
}

</mosaic_0001>

<llo_original>
// kernel: basic_conv.3
$region0: #{basic_conv.3}
  #allocation0 [shape = 'u32[]', space=smem, size = 0x4, offset = 0x4, fixed_abs, tag = 'smem constant byte address 0x4 - core index']
  #allocation1 [shape = 'u32[144,128]{1,0:T(1,128)}', space=vmem, size = 0x12000, scoped, tag = 'internal scratch']
  %s0 = inlined_call_operand.vmem [shape: f32[2,16,16,8], index: 0, kind: input, shape index: {}]
  %s1 = inlined_call_operand.vmem [shape: f32[1,8], index: 1, kind: input, shape index: {}]
  %s2 = inlined_call_operand.vmem [shape: f32[1,8], index: 2, kind: input, shape index: {}]
  %s3 = inlined_call_operand.vmem [shape: f32[1,8], index: 3, kind: input, shape index: {}]
  %s4 = inlined_call_operand.vmem [shape: f32[1,8], index: 4, kind: input, shape index: {}]
  %s5 = inlined_call_operand.vmem [shape: f32[2,16,16,8], index: 5, kind: output, shape index: {}]
  %s6 = sld [smem:[#allocation0]]
  $region53: #{basic_conv.3} parent=0
    _
  %s8 = ssub.s32 1, %s6
  %s9 = scalar_select 0, %s8, %s6
  loop: start=0, step=1, limit=4
  $region2: #{basic_conv.3} parent=0 // loop_pre_header
    _
  $region3: #{basic_conv.3} parent=0 // loop_header
    %s11 = sphi 0, %s15
    %p12 = scmp.ge.s32.totalorder %s11, 4
    %s21 = sphi 0, %s23
    %s24 = sphi 0, %s21
    %s25 = sphi 0, %s24
    %s41 = sphi 0, %s25
    %s45 = sphi 0, %s45
    %s47 = sphi 0, %s45
    %s48 = sphi 0, %s47
    %s62 = sphi 0, %s48
    %s66 = sphi 0, %s66
    %s68 = sphi 0, %s66
    %s69 = sphi 0, %s68
    %s83 = sphi 0, %s69
    %s87 = sphi 0, %s87
    %s89 = sphi 0, %s87
    %s90 = sphi 0, %s89
    %s104 = sphi 0, %s90
    %s108 = sphi 0, %s108
    %s110 = sphi 0, %s108
    %s111 = sphi 0, %s110
    %s125 = sphi 0, %s111
    %s131 = sphi 0, %s133
    %s134 = sphi 0, %s131
    %s135 = sphi 0, %s134
    %s151 = sphi 0, %s135
  $region4: #{basic_conv.3} parent=0 // loop_header_branch
    %14 = sbr.rel (%p12) target = $region8
  $region5: #{basic_conv.3} parent=0 // loop_body
    %s16 = ssub.s32 %s11, 1
    %s17 = ssub.s32 %s11, 2
    %s18 = sadd.s32 %s11, 1
    %s19 = ssub.s32 %s11, %s18
    %p20 = scmp.eq.s32.totalorder %s19, 0
    %s22 = sadd.s32 %s21, 1
    %s23 = scalar_select %p20, %s21, %s22
    %p26 = pneg %p20
    %p27 = scmp.eq.s32.totalorder %s11, 1
    %p28 = por %p26, %p27
    %p29 = scmp.ne.s32.totalorder %s21, %s24
    %p30 = scmp.eq.s32.totalorder %s11, 0
    %p31 = por %p29, %p30
    %p32 = scmp.ne.s32.totalorder %s21, %s24
    %p33 = scmp.eq.s32.totalorder %s16, 1
    %p34 = por %p32, %p33
    %p35 = scmp.ne.s32.totalorder %s24, %s25
    %p36 = scmp.eq.s32.totalorder %s16, 0
    %p37 = por %p35, %p36
    %p38 = scmp.ne.s32.totalorder %s24, %s25
    %p39 = scmp.eq.s32.totalorder %s17, 1
    %p40 = por %p38, %p39
    %p42 = scmp.ne.s32.totalorder %s25, %s41
    %p43 = scmp.eq.s32.totalorder %s17, 0
    %p44 = por %p42, %p43
    %s46 = sadd.s32 %s45, 1
    %p49 = scmp.eq.s32.totalorder %s11, 1
    %p50 = scmp.ne.s32.totalorder %s45, %s47
    %p51 = scmp.eq.s32.totalorder %s11, 0
    %p52 = por %p50, %p51
    %p53 = scmp.ne.s32.totalorder %s45, %s47
    %p54 = scmp.eq.s32.totalorder %s16, 1
    %p55 = por %p53, %p54
    %p56 = scmp.ne.s32.totalorder %s47, %s48
    %p57 = scmp.eq.s32.totalorder %s16, 0
    %p58 = por %p56, %p57
    %p59 = scmp.ne.s32.totalorder %s47, %s48
    %p60 = scmp.eq.s32.totalorder %s17, 1
    %p61 = por %p59, %p60
    %p63 = scmp.ne.s32.totalorder %s48, %s62
    %p64 = scmp.eq.s32.totalorder %s17, 0
    %p65 = por %p63, %p64
    %s67 = sadd.s32 %s66, 1
    %p70 = scmp.eq.s32.totalorder %s11, 1
    %p71 = scmp.ne.s32.totalorder %s66, %s68
    %p72 = scmp.eq.s32.totalorder %s11, 0
    %p73 = por %p71, %p72
    %p74 = scmp.ne.s32.totalorder %s66, %s68
    %p75 = scmp.eq.s32.totalorder %s16, 1
    %p76 = por %p74, %p75
    %p77 = scmp.ne.s32.totalorder %s68, %s69
    %p78 = scmp.eq.s32.totalorder %s16, 0
    %p79 = por %p77, %p78
    %p80 = scmp.ne.s32.totalorder %s68, %s69
    %p81 = scmp.eq.s32.totalorder %s17, 1
    %p82 = por %p80, %p81
    %p84 = scmp.ne.s32.totalorder %s69, %s83
    %p85 = scmp.eq.s32.totalorder %s17, 0
    %p86 = por %p84, %p85
    %s88 = sadd.s32 %s87, 1
    %p91 = scmp.eq.s32.totalorder %s11, 1
    %p92 = scmp.ne.s32.totalorder %s87, %s89
    %p93 = scmp.eq.s32.totalorder %s11, 0
    %p94 = por %p92, %p93
    %p95 = scmp.ne.s32.totalorder %s87, %s89
    %p96 = scmp.eq.s32.totalorder %s16, 1
    %p97 = por %p95, %p96
    %p98 = scmp.ne.s32.totalorder %s89, %s90
    %p99 = scmp.eq.s32.totalorder %s16, 0
    %p100 = por %p98, %p99
    %p101 = scmp.ne.s32.totalorder %s89, %s90
    %p102 = scmp.eq.s32.totalorder %s17, 1
    %p103 = por %p101, %p102
    %p105 = scmp.ne.s32.totalorder %s90, %s104
    %p106 = scmp.eq.s32.totalorder %s17, 0
    %p107 = por %p105, %p106
    %s109 = sadd.s32 %s108, 1
    %p112 = scmp.eq.s32.totalorder %s11, 1
    %p113 = scmp.ne.s32.totalorder %s108, %s110
    %p114 = scmp.eq.s32.totalorder %s11, 0
    %p115 = por %p113, %p114
    %p116 = scmp.ne.s32.totalorder %s108, %s110
    %p117 = scmp.eq.s32.totalorder %s16, 1
    %p118 = por %p116, %p117
    %p119 = scmp.ne.s32.totalorder %s110, %s111
    %p120 = scmp.eq.s32.totalorder %s16, 0
    %p121 = por %p119, %p120
    %p122 = scmp.ne.s32.totalorder %s110, %s111
    %p123 = scmp.eq.s32.totalorder %s17, 1
    %p124 = por %p122, %p123
    %p126 = scmp.ne.s32.totalorder %s111, %s125
    %p127 = scmp.eq.s32.totalorder %s17, 0
    %p128 = por %p126, %p127
    %s129 = ssub.s32 %s11, %s18
    %p130 = scmp.eq.s32.totalorder %s129, 0
    %s132 = sadd.s32 %s131, 1
    %s133 = scalar_select %p130, %s131, %s132
    %p136 = pneg %p130
    %p137 = scmp.eq.s32.totalorder %s11, 1
    %p138 = por %p136, %p137
    %p139 = scmp.ne.s32.totalorder %s131, %s134
    %p140 = scmp.eq.s32.totalorder %s11, 0
    %p141 = por %p139, %p140
    %p142 = scmp.ne.s32.totalorder %s131, %s134
    %p143 = scmp.eq.s32.totalorder %s16, 1
    %p144 = por %p142, %p143
    %p145 = scmp.ne.s32.totalorder %s134, %s135
    %p146 = scmp.eq.s32.totalorder %s16, 0
    %p147 = por %p145, %p146
    %p148 = scmp.ne.s32.totalorder %s134, %s135
    %p149 = scmp.eq.s32.totalorder %s17, 1
    %p150 = por %p148, %p149
    %p152 = scmp.ne.s32.totalorder %s135, %s151
    %p153 = scmp.eq.s32.totalorder %s17, 0
    %p154 = por %p152, %p153
    %p155 = scmp.le.s32.totalorder 1, %s11
    %p156 = scmp.lt.s32.totalorder %s11, 3
    %p157 = pnand %p155, %p156
    %p158 = pneg %p157
    // Predicated region
    $region9: #{basic_conv.3} parent=5 // pred_check
      _
    $region10: #{basic_conv.3} parent=5 // pred_check_branch
      %160 = sbr.rel (%p157) target = $region12
    $region11: #{basic_conv.3} parent=5 // pred_region
      %s161 = ssub.s32 %s11, 1
      // Predicated region
      $region13: #{basic_conv.3} parent=11 // pred_check
        %p162 = pneg %p58
      $region14: #{basic_conv.3} parent=11 // pred_check_branch
        %164 = sbr.rel (%p162) target = $region16
      $region15: #{basic_conv.3} parent=11 // pred_region
        _
      $region16: #{basic_conv.3} parent=11 // pred_fallthru
        _
      // Predicated region
      $region17: #{basic_conv.3} parent=11 // pred_check
        %p165 = pneg %p79
      $region18: #{basic_conv.3} parent=11 // pred_check_branch
        %167 = sbr.rel (%p165) target = $region20
      $region19: #{basic_conv.3} parent=11 // pred_region
        _
      $region20: #{basic_conv.3} parent=11 // pred_fallthru
        _
      // Predicated region
      $region21: #{basic_conv.3} parent=11 // pred_check
        %p168 = pneg %p100
      $region22: #{basic_conv.3} parent=11 // pred_check_branch
        %170 = sbr.rel (%p168) target = $region24
      $region23: #{basic_conv.3} parent=11 // pred_region
        _
      $region24: #{basic_conv.3} parent=11 // pred_fallthru
        _
      // Predicated region
      $region25: #{basic_conv.3} parent=11 // pred_check
        %p171 = pneg %p121
      $region26: #{basic_conv.3} parent=11 // pred_check_branch
        %173 = sbr.rel (%p171) target = $region28
      $region27: #{basic_conv.3} parent=11 // pred_region
        _
      $region28: #{basic_conv.3} parent=11 // pred_fallthru
        _
    $region12: #{basic_conv.3} parent=5 // pred_fallthru
      _
    %p174 = scmp.lt.s32.totalorder %s11, 2
    // Predicated region
    $region29: #{basic_conv.3} parent=5 // pred_check
      %p175 = pneg %p174
    $region30: #{basic_conv.3} parent=5 // pred_check_branch
      %177 = sbr.rel (%p175) target = $region32
    $region31: #{basic_conv.3} parent=5 // pred_region
      // Predicated region
      $region33: #{basic_conv.3} parent=31 // pred_check
        %p178 = pneg %p31
      $region34: #{basic_conv.3} parent=31 // pred_check_branch
        %180 = sbr.rel (%p178) target = $region36
      $region35: #{basic_conv.3} parent=31 // pred_region
        %p181 = scmp.lt.s32.totalorder %s11, 1
        %s182 = scalar_select %p181, %s11, 1
        %s183 = smul.addr %s182, 32
        %s184 = smul.addr %s183, 8
        %s185 = scalar_lea.vmem %s0, %s184
      $region36: #{basic_conv.3} parent=31 // pred_fallthru
        _
    $region32: #{basic_conv.3} parent=5 // pred_fallthru
      _
    %p186 = scmp.le.s32.totalorder 1, %s11
    %p187 = scmp.lt.s32.totalorder %s11, 3
    %p188 = pnand %p186, %p187
    %p189 = pneg %p188
    // Predicated region
    $region37: #{basic_conv.3} parent=5 // pred_check
      _
    $region38: #{basic_conv.3} parent=5 // pred_check_branch
      %191 = sbr.rel (%p188) target = $region40
    $region39: #{basic_conv.3} parent=5 // pred_region
      %s192 = ssub.s32 %s11, 1
      %p193 = scmp.lt.s32.totalorder %s16, 1
      %s194 = scalar_select %p193, %s16, 1
      %s195 = smul.addr %s194, 32
      %s196 = smul.addr %s195, 8
      %s197 = scalar_lea.vmem %s0, %s196
      %p198 = pneg %p37
      %p199 = pneg %p34
      %p200 = pneg %p58
      %p201 = pneg %p55
      %p202 = pneg %p79
      %p203 = pneg %p76
      %p204 = pneg %p100
      %p205 = pneg %p97
      %p206 = pneg %p121
      %p207 = pneg %p118
      %p208 = pneg %p147
      %p209 = pneg %p144
      %p210 = scmp.lt.s32.totalorder %s16, 1
      %s211 = scalar_select %p210, %s16, 1
      %s212 = smul.addr %s211, 32
      %s213 = smul.addr %s212, 8
      %s214 = scalar_lea.vmem %s5, %s213
      %p215 = scmp.lt.s32.totalorder %s16, 1
      %s216 = scalar_select %p215, %s16, 1
      %s217 = smul.addr %s216, 32
      %s218 = smul.addr %s217, 8
      %s219 = scalar_lea.vmem %s0, %s218
      %p220 = scmp.lt.s32.totalorder %s16, 1
      %s221 = scalar_select %p220, %s16, 1
      %s222 = smul.addr %s221, 32
      %s223 = smul.addr %s222, 8
      %s224 = scalar_lea.vmem %s5, %s223
      %v225 = vld [vmem:[%s1] sm:$0x1]
      %v226 = vmul.f32 %v225, 0.001953125
      %v227 = vld [vmem:[%s2] sm:$0x1]
      %v228 = vmul.f32 %v227, 0.001953125
      %v229 = vmul.f32 %v226, %v226
      %v230 = vsub.f32 %v228, %v229
      %v231 = vmax.f32 %v230, 0.0
      %v232 = vadd.f32 %v231, 1e-05
      %v233 = vrsqrt.pop %v232
      %v234 = vld [vmem:[%s3] sm:$0x1]
      %v235 = vmul.f32 %v234, %v233
      %v236 = vld [vmem:[%s4] sm:$0x1]
      %v237 = vmul.f32 %v226, %v235
      %v238 = vsub.f32 %v236, %v237
      %v239 = vld [vmem:[%s219] sm:$0xff]
      %v240 = vld [vmem:[%s219 + $0x8] sm:$0xff]
      %v241 = vld [vmem:[%s219 + $0x10] sm:$0xff]
      %v242 = vld [vmem:[%s219 + $0x18] sm:$0xff]
      %v243 = vld [vmem:[%s219 + $0x20] sm:$0xff]
      %v244 = vld [vmem:[%s219 + $0x28] sm:$0xff]
      %v245 = vld [vmem:[%s219 + $0x30] sm:$0xff]
      %v246 = vld [vmem:[%s219 + $0x38] sm:$0xff]
      %v247 = vld [vmem:[%s219 + $0x40] sm:$0xff]
      %v248 = vld [vmem:[%s219 + $0x48] sm:$0xff]
      %v249 = vld [vmem:[%s219 + $0x50] sm:$0xff]
      %v250 = vld [vmem:[%s219 + $0x58] sm:$0xff]
      %v251 = vld [vmem:[%s219 + $0x60] sm:$0xff]
      %v252 = vld [vmem:[%s219 + $0x68] sm:$0xff]
      %v253 = vld [vmem:[%s219 + $0x70] sm:$0xff]
      %v254 = vld [vmem:[%s219 + $0x78] sm:$0xff]
      %v255 = vld [vmem:[%s219 + $0x80] sm:$0xff]
      %v256 = vld [vmem:[%s219 + $0x88] sm:$0xff]
      %v257 = vld [vmem:[%s219 + $0x90] sm:$0xff]
      %v258 = vld [vmem:[%s219 + $0x98] sm:$0xff]
      %v259 = vld [vmem:[%s219 + $0xa0] sm:$0xff]
      %v260 = vld [vmem:[%s219 + $0xa8] sm:$0xff]
      %v261 = vld [vmem:[%s219 + $0xb0] sm:$0xff]
      %v262 = vld [vmem:[%s219 + $0xb8] sm:$0xff]
      %v263 = vld [vmem:[%s219 + $0xc0] sm:$0xff]
      %v264 = vld [vmem:[%s219 + $0xc8] sm:$0xff]
      %v265 = vld [vmem:[%s219 + $0xd0] sm:$0xff]
      %v266 = vld [vmem:[%s219 + $0xd8] sm:$0xff]
      %v267 = vld [vmem:[%s219 + $0xe0] sm:$0xff]
      %v268 = vld [vmem:[%s219 + $0xe8] sm:$0xff]
      %v269 = vld [vmem:[%s219 + $0xf0] sm:$0xff]
      %v270 = vld [vmem:[%s219 + $0xf8] sm:$0xff]
      %v272 = vlaneseq
      %v273 = vshrl.u32 %v272, 7
      %v274 = vsub.s32 0, %v273
      %v275 = vrot.slane %v235, %v274
      %v277 = vmul.f32 %v239, %v275
      %v278 = vmul.f32 %v240, %v275
      %v279 = vmul.f32 %v241, %v275
      %v280 = vmul.f32 %v242, %v275
      %v281 = vmul.f32 %v243, %v275
      %v282 = vmul.f32 %v244, %v275
      %v283 = vmul.f32 %v245, %v275
      %v284 = vmul.f32 %v246, %v275
      %v285 = vmul.f32 %v247, %v275
      %v286 = vmul.f32 %v248, %v275
      %v287 = vmul.f32 %v249, %v275
      %v288 = vmul.f32 %v250, %v275
      %v289 = vmul.f32 %v251, %v275
      %v290 = vmul.f32 %v252, %v275
      %v291 = vmul.f32 %v253, %v275
      %v292 = vmul.f32 %v254, %v275
      %v293 = vmul.f32 %v255, %v275
      %v294 = vmul.f32 %v256, %v275
      %v295 = vmul.f32 %v257, %v275
      %v296 = vmul.f32 %v258, %v275
      %v297 = vmul.f32 %v259, %v275
      %v298 = vmul.f32 %v260, %v275
      %v299 = vmul.f32 %v261, %v275
      %v300 = vmul.f32 %v262, %v275
      %v301 = vmul.f32 %v263, %v275
      %v302 = vmul.f32 %v264, %v275
      %v303 = vmul.f32 %v265, %v275
      %v304 = vmul.f32 %v266, %v275
      %v305 = vmul.f32 %v267, %v275
      %v306 = vmul.f32 %v268, %v275
      %v307 = vmul.f32 %v269, %v275
      %v308 = vmul.f32 %v270, %v275
      %v310 = vlaneseq
      %v311 = vshrl.u32 %v310, 7
      %v312 = vsub.s32 0, %v311
      %v313 = vrot.slane %v238, %v312
      %v315 = vadd.f32 %v277, %v313
      %v316 = vadd.f32 %v278, %v313
      %v317 = vadd.f32 %v279, %v313
      %v318 = vadd.f32 %v280, %v313
      %v319 = vadd.f32 %v281, %v313
      %v320 = vadd.f32 %v282, %v313
      %v321 = vadd.f32 %v283, %v313
      %v322 = vadd.f32 %v284, %v313
      %v323 = vadd.f32 %v285, %v313
      %v324 = vadd.f32 %v286, %v313
      %v325 = vadd.f32 %v287, %v313
      %v326 = vadd.f32 %v288, %v313
      %v327 = vadd.f32 %v289, %v313
      %v328 = vadd.f32 %v290, %v313
      %v329 = vadd.f32 %v291, %v313
      %v330 = vadd.f32 %v292, %v313
      %v331 = vadd.f32 %v293, %v313
      %v332 = vadd.f32 %v294, %v313
      %v333 = vadd.f32 %v295, %v313
      %v334 = vadd.f32 %v296, %v313
      %v335 = vadd.f32 %v297, %v313
      %v336 = vadd.f32 %v298, %v313
      %v337 = vadd.f32 %v299, %v313
      %v338 = vadd.f32 %v300, %v313
      %v339 = vadd.f32 %v301, %v313
      %v340 = vadd.f32 %v302, %v313
      %v341 = vadd.f32 %v303, %v313
      %v342 = vadd.f32 %v304, %v313
      %v343 = vadd.f32 %v305, %v313
      %v344 = vadd.f32 %v306, %v313
      %v345 = vadd.f32 %v307, %v313
      %v346 = vadd.f32 %v308, %v313
      %v347 = vmax.f32 %v315, 0.0
      %v348 = vmax.f32 %v316, 0.0
      %v349 = vmax.f32 %v317, 0.0
      %v350 = vmax.f32 %v318, 0.0
      %v351 = vmax.f32 %v319, 0.0
      %v352 = vmax.f32 %v320, 0.0
      %v353 = vmax.f32 %v321, 0.0
      %v354 = vmax.f32 %v322, 0.0
      %v355 = vmax.f32 %v323, 0.0
      %v356 = vmax.f32 %v324, 0.0
      %v357 = vmax.f32 %v325, 0.0
      %v358 = vmax.f32 %v326, 0.0
      %v359 = vmax.f32 %v327, 0.0
      %v360 = vmax.f32 %v328, 0.0
      %v361 = vmax.f32 %v329, 0.0
      %v362 = vmax.f32 %v330, 0.0
      %v363 = vmax.f32 %v331, 0.0
      %v364 = vmax.f32 %v332, 0.0
      %v365 = vmax.f32 %v333, 0.0
      %v366 = vmax.f32 %v334, 0.0
      %v367 = vmax.f32 %v335, 0.0
      %v368 = vmax.f32 %v336, 0.0
      %v369 = vmax.f32 %v337, 0.0
      %v370 = vmax.f32 %v338, 0.0
      %v371 = vmax.f32 %v339, 0.0
      %v372 = vmax.f32 %v340, 0.0
      %v373 = vmax.f32 %v341, 0.0
      %v374 = vmax.f32 %v342, 0.0
      %v375 = vmax.f32 %v343, 0.0
      %v376 = vmax.f32 %v344, 0.0
      %v377 = vmax.f32 %v345, 0.0
      %v378 = vmax.f32 %v346, 0.0
      %vm379 = vcmask 64512
      %380 = vst.msk [vmem:[%s224] sm:$0xff] %vm379, %v347
      %381 = vst.msk [vmem:[%s224 + $0x8] sm:$0xff] %vm379, %v348
      %382 = vst.msk [vmem:[%s224 + $0x10] sm:$0xff] %vm379, %v349
      %383 = vst.msk [vmem:[%s224 + $0x18] sm:$0xff] %vm379, %v350
      %384 = vst.msk [vmem:[%s224 + $0x20] sm:$0xff] %vm379, %v351
      %385 = vst.msk [vmem:[%s224 + $0x28] sm:$0xff] %vm379, %v352
      %386 = vst.msk [vmem:[%s224 + $0x30] sm:$0xff] %vm379, %v353
      %387 = vst.msk [vmem:[%s224 + $0x38] sm:$0xff] %vm379, %v354
      %388 = vst.msk [vmem:[%s224 + $0x40] sm:$0xff] %vm379, %v355
      %389 = vst.msk [vmem:[%s224 + $0x48] sm:$0xff] %vm379, %v356
      %390 = vst.msk [vmem:[%s224 + $0x50] sm:$0xff] %vm379, %v357
      %391 = vst.msk [vmem:[%s224 + $0x58] sm:$0xff] %vm379, %v358
      %392 = vst.msk [vmem:[%s224 + $0x60] sm:$0xff] %vm379, %v359
      %393 = vst.msk [vmem:[%s224 + $0x68] sm:$0xff] %vm379, %v360
      %394 = vst.msk [vmem:[%s224 + $0x70] sm:$0xff] %vm379, %v361
      %395 = vst.msk [vmem:[%s224 + $0x78] sm:$0xff] %vm379, %v362
      %396 = vst.msk [vmem:[%s224 + $0x80] sm:$0xff] %vm379, %v363
      %397 = vst.msk [vmem:[%s224 + $0x88] sm:$0xff] %vm379, %v364
      %398 = vst.msk [vmem:[%s224 + $0x90] sm:$0xff] %vm379, %v365
      %399 = vst.msk [vmem:[%s224 + $0x98] sm:$0xff] %vm379, %v366
      %400 = vst.msk [vmem:[%s224 + $0xa0] sm:$0xff] %vm379, %v367
      %401 = vst.msk [vmem:[%s224 + $0xa8] sm:$0xff] %vm379, %v368
      %402 = vst.msk [vmem:[%s224 + $0xb0] sm:$0xff] %vm379, %v369
      %403 = vst.msk [vmem:[%s224 + $0xb8] sm:$0xff] %vm379, %v370
      %404 = vst.msk [vmem:[%s224 + $0xc0] sm:$0xff] %vm379, %v371
      %405 = vst.msk [vmem:[%s224 + $0xc8] sm:$0xff] %vm379, %v372
      %406 = vst.msk [vmem:[%s224 + $0xd0] sm:$0xff] %vm379, %v373
      %407 = vst.msk [vmem:[%s224 + $0xd8] sm:$0xff] %vm379, %v374
      %408 = vst.msk [vmem:[%s224 + $0xe0] sm:$0xff] %vm379, %v375
      %409 = vst.msk [vmem:[%s224 + $0xe8] sm:$0xff] %vm379, %v376
      %410 = vst.msk [vmem:[%s224 + $0xf0] sm:$0xff] %vm379, %v377
      %411 = vst.msk [vmem:[%s224 + $0xf8] sm:$0xff] %vm379, %v378
      %p412 = scmp.lt.s32.totalorder %s16, 1
      %s413 = scalar_select %p412, %s16, 1
      %s414 = smul.addr %s413, 32
      %s415 = smul.addr %s414, 8
      %s416 = scalar_lea.vmem %s5, %s415
      // Predicated region
      $region41: #{basic_conv.3} parent=39 // pred_check
        %p417 = pneg %p144
      $region42: #{basic_conv.3} parent=39 // pred_check_branch
        %419 = sbr.rel (%p417) target = $region44
      $region43: #{basic_conv.3} parent=39 // pred_region
        _
      $region44: #{basic_conv.3} parent=39 // pred_fallthru
        _
    $region40: #{basic_conv.3} parent=5 // pred_fallthru
      _
    %p420 = scmp.le.s32.totalorder 2, %s11
    // Predicated region
    $region45: #{basic_conv.3} parent=5 // pred_check
      %p421 = pneg %p420
    $region46: #{basic_conv.3} parent=5 // pred_check_branch
      %423 = sbr.rel (%p421) target = $region48
    $region47: #{basic_conv.3} parent=5 // pred_region
      %s424 = ssub.s32 %s11, 2
      // Predicated region
      $region49: #{basic_conv.3} parent=47 // pred_check
        %p425 = pneg %p150
      $region50: #{basic_conv.3} parent=47 // pred_check_branch
        %427 = sbr.rel (%p425) target = $region52
      $region51: #{basic_conv.3} parent=47 // pred_region
        %p428 = scmp.lt.s32.totalorder %s17, 1
        %s429 = scalar_select %p428, %s17, 1
        %s430 = smul.addr %s429, 32
        %s431 = smul.addr %s430, 8
        %s432 = scalar_lea.vmem %s5, %s431
      $region52: #{basic_conv.3} parent=47 // pred_fallthru
        _
    $region48: #{basic_conv.3} parent=5 // pred_fallthru
      _
  $region6: #{basic_conv.3} parent=0 // loop_footer
    %s15 = sadd.s32 1, %s11
  $region7: #{basic_conv.3} parent=0 // loop_footer_branch
    %10 = sbr.rel target = $region3
  $region8: #{basic_conv.3} parent=0 // loop_exit
    _

// kernel: basic_conv.2
$region0: #{basic_conv.2}
  #allocation0 [shape = 'u32[]', space=smem, size = 0x4, offset = 0x4, fixed_abs, tag = 'smem constant byte address 0x4 - core index']
  #allocation1 [shape = 'u32[144,128]{1,0:T(1,128)}', space=vmem, size = 0x12000, scoped, tag = 'internal scratch']
  #allocation2 [shape = 'f32[18,18,4]{2,1,0:T(8,128)}', space=vmem, size = 0x36000, scoped, tag = 'scratch operand']
  %s0 = inlined_call_operand.vmem [shape: f32[2,16,16,4], index: 0, kind: input, shape index: {}]
  %s1 = inlined_call_operand.vmem [shape: bf16[9,4,8], index: 1, kind: input, shape index: {}]
  %s2 = inlined_call_operand.vmem [shape: f32[2,16,16,8], index: 2, kind: output, shape index: {0}]
  %s3 = inlined_call_operand.vmem [shape: f32[1,8], index: 3, kind: output, shape index: {1}]
  %s4 = inlined_call_operand.vmem [shape: f32[1,8], index: 4, kind: output, shape index: {2}]
  %5 = xla_tuple %s2, %s3, %s4
  %s6 = sld [smem:[#allocation0]]
  $region69: #{basic_conv.2} parent=0
    _
  %s8 = ssub.s32 1, %s6
  %s9 = scalar_select 0, %s8, %s6
  loop: start=0, step=1, limit=4
  $region2: #{basic_conv.2} parent=0 // loop_pre_header
    _
  $region3: #{basic_conv.2} parent=0 // loop_header
    %s11 = sphi 0, %s15
    %p12 = scmp.ge.s32.totalorder %s11, 4
    %s21 = sphi 0, %s23
    %s24 = sphi 0, %s21
    %s25 = sphi 0, %s24
    %s41 = sphi 0, %s25
    %s45 = sphi 0, %s45
    %s47 = sphi 0, %s45
    %s48 = sphi 0, %s47
    %s62 = sphi 0, %s48
    %s68 = sphi 0, %s70
    %s71 = sphi 0, %s68
    %s72 = sphi 0, %s71
    %s88 = sphi 0, %s72
    %s92 = sphi 0, %s92
    %s94 = sphi 0, %s92
    %s95 = sphi 0, %s94
    %s109 = sphi 0, %s95
    %s113 = sphi 0, %s113
    %s115 = sphi 0, %s113
    %s116 = sphi 0, %s115
    %s130 = sphi 0, %s116
  $region4: #{basic_conv.2} parent=0 // loop_header_branch
    %14 = sbr.rel (%p12) target = $region8
  $region5: #{basic_conv.2} parent=0 // loop_body
    %s16 = ssub.s32 %s11, 1
    %s17 = ssub.s32 %s11, 2
    %s18 = sadd.s32 %s11, 1
    %s19 = ssub.s32 %s11, %s18
    %p20 = scmp.eq.s32.totalorder %s19, 0
    %s22 = sadd.s32 %s21, 1
    %s23 = scalar_select %p20, %s21, %s22
    %p26 = pneg %p20
    %p27 = scmp.eq.s32.totalorder %s11, 1
    %p28 = por %p26, %p27
    %p29 = scmp.ne.s32.totalorder %s21, %s24
    %p30 = scmp.eq.s32.totalorder %s11, 0
    %p31 = por %p29, %p30
    %p32 = scmp.ne.s32.totalorder %s21, %s24
    %p33 = scmp.eq.s32.totalorder %s16, 1
    %p34 = por %p32, %p33
    %p35 = scmp.ne.s32.totalorder %s24, %s25
    %p36 = scmp.eq.s32.totalorder %s16, 0
    %p37 = por %p35, %p36
    %p38 = scmp.ne.s32.totalorder %s24, %s25
    %p39 = scmp.eq.s32.totalorder %s17, 1
    %p40 = por %p38, %p39
    %p42 = scmp.ne.s32.totalorder %s25, %s41
    %p43 = scmp.eq.s32.totalorder %s17, 0
    %p44 = por %p42, %p43
    %s46 = sadd.s32 %s45, 1
    %p49 = scmp.eq.s32.totalorder %s11, 1
    %p50 = scmp.ne.s32.totalorder %s45, %s47
    %p51 = scmp.eq.s32.totalorder %s11, 0
    %p52 = por %p50, %p51
    %p53 = scmp.ne.s32.totalorder %s45, %s47
    %p54 = scmp.eq.s32.totalorder %s16, 1
    %p55 = por %p53, %p54
    %p56 = scmp.ne.s32.totalorder %s47, %s48
    %p57 = scmp.eq.s32.totalorder %s16, 0
    %p58 = por %p56, %p57
    %p59 = scmp.ne.s32.totalorder %s47, %s48
    %p60 = scmp.eq.s32.totalorder %s17, 1
    %p61 = por %p59, %p60
    %p63 = scmp.ne.s32.totalorder %s48, %s62
    %p64 = scmp.eq.s32.totalorder %s17, 0
    %p65 = por %p63, %p64
    %s66 = ssub.s32 %s11, %s18
    %p67 = scmp.eq.s32.totalorder %s66, 0
    %s69 = sadd.s32 %s68, 1
    %s70 = scalar_select %p67, %s68, %s69
    %p73 = pneg %p67
    %p74 = scmp.eq.s32.totalorder %s11, 1
    %p75 = por %p73, %p74
    %p76 = scmp.ne.s32.totalorder %s68, %s71
    %p77 = scmp.eq.s32.totalorder %s11, 0
    %p78 = por %p76, %p77
    %p79 = scmp.ne.s32.totalorder %s68, %s71
    %p80 = scmp.eq.s32.totalorder %s16, 1
    %p81 = por %p79, %p80
    %p82 = scmp.ne.s32.totalorder %s71, %s72
    %p83 = scmp.eq.s32.totalorder %s16, 0
    %p84 = por %p82, %p83
    %p85 = scmp.ne.s32.totalorder %s71, %s72
    %p86 = scmp.eq.s32.totalorder %s17, 1
    %p87 = por %p85, %p86
    %p89 = scmp.ne.s32.totalorder %s72, %s88
    %p90 = scmp.eq.s32.totalorder %s17, 0
    %p91 = por %p89, %p90
    %s93 = sadd.s32 %s92, 1
    %p96 = scmp.eq.s32.totalorder %s11, 1
    %p97 = scmp.ne.s32.totalorder %s92, %s94
    %p98 = scmp.eq.s32.totalorder %s11, 0
    %p99 = por %p97, %p98
    %p100 = scmp.ne.s32.totalorder %s92, %s94
    %p101 = scmp.eq.s32.totalorder %s16, 1
    %p102 = por %p100, %p101
    %p103 = scmp.ne.s32.totalorder %s94, %s95
    %p104 = scmp.eq.s32.totalorder %s16, 0
    %p105 = por %p103, %p104
    %p106 = scmp.ne.s32.totalorder %s94, %s95
    %p107 = scmp.eq.s32.totalorder %s17, 1
    %p108 = por %p106, %p107
    %p110 = scmp.ne.s32.totalorder %s95, %s109
    %p111 = scmp.eq.s32.totalorder %s17, 0
    %p112 = por %p110, %p111
    %s114 = sadd.s32 %s113, 1
    %p117 = scmp.eq.s32.totalorder %s11, 1
    %p118 = scmp.ne.s32.totalorder %s113, %s115
    %p119 = scmp.eq.s32.totalorder %s11, 0
    %p120 = por %p118, %p119
    %p121 = scmp.ne.s32.totalorder %s113, %s115
    %p122 = scmp.eq.s32.totalorder %s16, 1
    %p123 = por %p121, %p122
    %p124 = scmp.ne.s32.totalorder %s115, %s116
    %p125 = scmp.eq.s32.totalorder %s16, 0
    %p126 = por %p124, %p125
    %p127 = scmp.ne.s32.totalorder %s115, %s116
    %p128 = scmp.eq.s32.totalorder %s17, 1
    %p129 = por %p127, %p128
    %p131 = scmp.ne.s32.totalorder %s116, %s130
    %p132 = scmp.eq.s32.totalorder %s17, 0
    %p133 = por %p131, %p132
    %p134 = scmp.le.s32.totalorder 1, %s11
    %p135 = scmp.lt.s32.totalorder %s11, 3
    %p136 = pnand %p134, %p135
    %p137 = pneg %p136
    // Predicated region
    $region9: #{basic_conv.2} parent=5 // pred_check
      _
    $region10: #{basic_conv.2} parent=5 // pred_check_branch
      %139 = sbr.rel (%p136) target = $region12
    $region11: #{basic_conv.2} parent=5 // pred_region
      %s140 = ssub.s32 %s11, 1
      // Predicated region
      $region13: #{basic_conv.2} parent=11 // pred_check
        %p141 = pneg %p58
      $region14: #{basic_conv.2} parent=11 // pred_check_branch
        %143 = sbr.rel (%p141) target = $region16
      $region15: #{basic_conv.2} parent=11 // pred_region
        _
      $region16: #{basic_conv.2} parent=11 // pred_fallthru
        _
    $region12: #{basic_conv.2} parent=5 // pred_fallthru
      _
    %p144 = scmp.lt.s32.totalorder %s11, 2
    // Predicated region
    $region17: #{basic_conv.2} parent=5 // pred_check
      %p145 = pneg %p144
    $region18: #{basic_conv.2} parent=5 // pred_check_branch
      %147 = sbr.rel (%p145) target = $region20
    $region19: #{basic_conv.2} parent=5 // pred_region
      // Predicated region
      $region21: #{basic_conv.2} parent=19 // pred_check
        %p148 = pneg %p31
      $region22: #{basic_conv.2} parent=19 // pred_check_branch
        %150 = sbr.rel (%p148) target = $region24
      $region23: #{basic_conv.2} parent=19 // pred_region
        %p151 = scmp.lt.s32.totalorder %s11, 1
        %s152 = scalar_select %p151, %s11, 1
        %s153 = smul.addr %s152, 32
        %s154 = smul.addr %s153, 8
        %s155 = scalar_lea.vmem %s0, %s154
      $region24: #{basic_conv.2} parent=19 // pred_fallthru
        _
    $region20: #{basic_conv.2} parent=5 // pred_fallthru
      _
    %p156 = scmp.le.s32.totalorder 1, %s11
    %p157 = scmp.lt.s32.totalorder %s11, 3
    %p158 = pnand %p156, %p157
    %p159 = pneg %p158
    // Predicated region
    $region25: #{basic_conv.2} parent=5 // pred_check
      _
    $region26: #{basic_conv.2} parent=5 // pred_check_branch
      %161 = sbr.rel (%p158) target = $region28
    $region27: #{basic_conv.2} parent=5 // pred_region
      %s162 = ssub.s32 %s11, 1
      %p163 = scmp.lt.s32.totalorder %s16, 1
      %s164 = scalar_select %p163, %s16, 1
      %s165 = smul.addr %s164, 32
      %s166 = smul.addr %s165, 8
      %s167 = scalar_lea.vmem %s0, %s166
      %p168 = pneg %p37
      %p169 = pneg %p34
      %p170 = pneg %p58
      %p171 = pneg %p55
      %p172 = pneg %p84
      %p173 = pneg %p81
      %p174 = scmp.lt.s32.totalorder %s16, 1
      %s175 = scalar_select %p174, %s16, 1
      %s176 = smul.addr %s175, 32
      %s177 = smul.addr %s176, 8
      %s178 = scalar_lea.vmem %s2, %s177
      %p179 = pneg %p105
      %p180 = pneg %p102
      %p181 = pneg %p126
      %p182 = pneg %p123
      %p183 = scmp.lt.s32.totalorder %s16, 1
      %s184 = scalar_select %p183, %s16, 1
      %s185 = smul.addr %s184, 32
      %s186 = smul.addr %s185, 8
      %s187 = scalar_lea.vmem %s0, %s186
      %p188 = scmp.lt.s32.totalorder %s16, 1
      %s189 = scalar_select %p188, %s16, 1
      %s190 = smul.addr %s189, 32
      %s191 = smul.addr %s190, 8
      %s192 = scalar_lea.vmem %s2, %s191
      %p194 = scmp.eq.s32.totalorder %s16, 0
      // Predicated region
      $region29: #{basic_conv.2} parent=27 // pred_check
        %p195 = pneg %p194
      $region30: #{basic_conv.2} parent=27 // pred_check_branch
        %197 = sbr.rel (%p195) target = $region32
      $region31: #{basic_conv.2} parent=27 // pred_region
        %vm198 = vcmask 31744
        %199 = vst.msk [vmem:[#allocation2] sm:$0xff] %vm198, 0.0
        %200 = vst.msk [vmem:[#allocation2 + $0x8] sm:$0xff] %vm198, 0.0
        %vm201 = vcmask 25600
        %202 = vst.msk [vmem:[#allocation2 + $0x10] sm:$0x3] %vm201, 0.0
        %203 = vst.msk [vmem:[#allocation2 + $0x18] sm:$0xff] %vm198, 0.0
        %204 = vst.msk [vmem:[#allocation2 + $0x20] sm:$0xff] %vm198, 0.0
        %205 = vst.msk [vmem:[#allocation2 + $0x28] sm:$0x3] %vm201, 0.0
        %206 = vst.msk [vmem:[#allocation2 + $0x30] sm:$0xff] %vm198, 0.0
        %207 = vst.msk [vmem:[#allocation2 + $0x38] sm:$0xff] %vm198, 0.0
        %208 = vst.msk [vmem:[#allocation2 + $0x40] sm:$0x3] %vm201, 0.0
        %209 = vst.msk [vmem:[#allocation2 + $0x48] sm:$0xff] %vm198, 0.0
        %210 = vst.msk [vmem:[#allocation2 + $0x50] sm:$0xff] %vm198, 0.0
        %211 = vst.msk [vmem:[#allocation2 + $0x58] sm:$0x3] %vm201, 0.0
        %212 = vst.msk [vmem:[#allocation2 + $0x60] sm:$0xff] %vm198, 0.0
        %213 = vst.msk [vmem:[#allocation2 + $0x68] sm:$0xff] %vm198, 0.0
        %214 = vst.msk [vmem:[#allocation2 + $0x70] sm:$0x3] %vm201, 0.0
        %215 = vst.msk [vmem:[#allocation2 + $0x78] sm:$0xff] %vm198, 0.0
        %216 = vst.msk [vmem:[#allocation2 + $0x80] sm:$0xff] %vm198, 0.0
        %217 = vst.msk [vmem:[#allocation2 + $0x88] sm:$0x3] %vm201, 0.0
        %218 = vst.msk [vmem:[#allocation2 + $0x90] sm:$0xff] %vm198, 0.0
        %219 = vst.msk [vmem:[#allocation2 + $0x98] sm:$0xff] %vm198, 0.0
        %220 = vst.msk [vmem:[#allocation2 + $0xa0] sm:$0x3] %vm201, 0.0
        %221 = vst.msk [vmem:[#allocation2 + $0xa8] sm:$0xff] %vm198, 0.0
        %222 = vst.msk [vmem:[#allocation2 + $0xb0] sm:$0xff] %vm198, 0.0
        %223 = vst.msk [vmem:[#allocation2 + $0xb8] sm:$0x3] %vm201, 0.0
        %224 = vst.msk [vmem:[#allocation2 + $0xc0] sm:$0xff] %vm198, 0.0
        %225 = vst.msk [vmem:[#allocation2 + $0xc8] sm:$0xff] %vm198, 0.0
        %226 = vst.msk [vmem:[#allocation2 + $0xd0] sm:$0x3] %vm201, 0.0
        %227 = vst.msk [vmem:[#allocation2 + $0xd8] sm:$0xff] %vm198, 0.0
        %228 = vst.msk [vmem:[#allocation2 + $0xe0] sm:$0xff] %vm198, 0.0
        %229 = vst.msk [vmem:[#allocation2 + $0xe8] sm:$0x3] %vm201, 0.0
        %230 = vst.msk [vmem:[#allocation2 + $0xf0] sm:$0xff] %vm198, 0.0
        %231 = vst.msk [vmem:[#allocation2 + $0xf8] sm:$0xff] %vm198, 0.0
        %232 = vst.msk [vmem:[#allocation2 + $0x100] sm:$0x3] %vm201, 0.0
        %233 = vst.msk [vmem:[#allocation2 + $0x108] sm:$0xff] %vm198, 0.0
        %234 = vst.msk [vmem:[#allocation2 + $0x110] sm:$0xff] %vm198, 0.0
        %235 = vst.msk [vmem:[#allocation2 + $0x118] sm:$0x3] %vm201, 0.0
        %236 = vst.msk [vmem:[#allocation2 + $0x120] sm:$0xff] %vm198, 0.0
        %237 = vst.msk [vmem:[#allocation2 + $0x128] sm:$0xff] %vm198, 0.0
        %238 = vst.msk [vmem:[#allocation2 + $0x130] sm:$0x3] %vm201, 0.0
        %239 = vst.msk [vmem:[#allocation2 + $0x138] sm:$0xff] %vm198, 0.0
        %240 = vst.msk [vmem:[#allocation2 + $0x140] sm:$0xff] %vm198, 0.0
        %241 = vst.msk [vmem:[#allocation2 + $0x148] sm:$0x3] %vm201, 0.0
        %242 = vst.msk [vmem:[#allocation2 + $0x150] sm:$0xff] %vm198, 0.0
        %243 = vst.msk [vmem:[#allocation2 + $0x158] sm:$0xff] %vm198, 0.0
        %244 = vst.msk [vmem:[#allocation2 + $0x160] sm:$0x3] %vm201, 0.0
        %245 = vst.msk [vmem:[#allocation2 + $0x168] sm:$0xff] %vm198, 0.0
        %246 = vst.msk [vmem:[#allocation2 + $0x170] sm:$0xff] %vm198, 0.0
        %247 = vst.msk [vmem:[#allocation2 + $0x178] sm:$0x3] %vm201, 0.0
        %248 = vst.msk [vmem:[#allocation2 + $0x180] sm:$0xff] %vm198, 0.0
        %249 = vst.msk [vmem:[#allocation2 + $0x188] sm:$0xff] %vm198, 0.0
        %250 = vst.msk [vmem:[#allocation2 + $0x190] sm:$0x3] %vm201, 0.0
        %251 = vst.msk [vmem:[#allocation2 + $0x198] sm:$0xff] %vm198, 0.0
        %252 = vst.msk [vmem:[#allocation2 + $0x1a0] sm:$0xff] %vm198, 0.0
        %253 = vst.msk [vmem:[#allocation2 + $0x1a8] sm:$0x3] %vm201, 0.0
      $region32: #{basic_conv.2} parent=27 // pred_fallthru
        _
      %v254 = vld [vmem:[%s187] sm:$0xff]
      %v255 = vld [vmem:[%s187 + $0x8] sm:$0xff]
      %v256 = vld [vmem:[%s187 + $0x10] sm:$0xff]
      %v257 = vld [vmem:[%s187 + $0x18] sm:$0xff]
      %v258 = vld [vmem:[%s187 + $0x20] sm:$0xff]
      %v259 = vld [vmem:[%s187 + $0x28] sm:$0xff]
      %v260 = vld [vmem:[%s187 + $0x30] sm:$0xff]
      %v261 = vld [vmem:[%s187 + $0x38] sm:$0xff]
      %v262 = vld [vmem:[%s187 + $0x40] sm:$0xff]
      %v263 = vld [vmem:[%s187 + $0x48] sm:$0xff]
      %v264 = vld [vmem:[%s187 + $0x50] sm:$0xff]
      %v265 = vld [vmem:[%s187 + $0x58] sm:$0xff]
      %v266 = vld [vmem:[%s187 + $0x60] sm:$0xff]
      %v267 = vld [vmem:[%s187 + $0x68] sm:$0xff]
      %v268 = vld [vmem:[%s187 + $0x70] sm:$0xff]
      %v269 = vld [vmem:[%s187 + $0x78] sm:$0xff]
      %v270 = vld [vmem:[%s187 + $0x80] sm:$0xff]
      %v271 = vld [vmem:[%s187 + $0x88] sm:$0xff]
      %v272 = vld [vmem:[%s187 + $0x90] sm:$0xff]
      %v273 = vld [vmem:[%s187 + $0x98] sm:$0xff]
      %v274 = vld [vmem:[%s187 + $0xa0] sm:$0xff]
      %v275 = vld [vmem:[%s187 + $0xa8] sm:$0xff]
      %v276 = vld [vmem:[%s187 + $0xb0] sm:$0xff]
      %v277 = vld [vmem:[%s187 + $0xb8] sm:$0xff]
      %v278 = vld [vmem:[%s187 + $0xc0] sm:$0xff]
      %v279 = vld [vmem:[%s187 + $0xc8] sm:$0xff]
      %v280 = vld [vmem:[%s187 + $0xd0] sm:$0xff]
      %v281 = vld [vmem:[%s187 + $0xd8] sm:$0xff]
      %v282 = vld [vmem:[%s187 + $0xe0] sm:$0xff]
      %v283 = vld [vmem:[%s187 + $0xe8] sm:$0xff]
      %v284 = vld [vmem:[%s187 + $0xf0] sm:$0xff]
      %v285 = vld [vmem:[%s187 + $0xf8] sm:$0xff]
      %s286 = scalar_lea.vmem [#allocation2], 24
      %vm287 = vcmask 31744
      %288 = vst.msk [vmem:[%s286 + $0x1] sm:$0xff] %vm287, %v254
      %289 = vst.msk [vmem:[%s286 + $0x9] sm:$0xff] %vm287, %v255
      %290 = vst.msk [vmem:[%s286 + $0x19] sm:$0xff] %vm287, %v256
      %291 = vst.msk [vmem:[%s286 + $0x21] sm:$0xff] %vm287, %v257
      %292 = vst.msk [vmem:[%s286 + $0x31] sm:$0xff] %vm287, %v258
      %293 = vst.msk [vmem:[%s286 + $0x39] sm:$0xff] %vm287, %v259
      %294 = vst.msk [vmem:[%s286 + $0x49] sm:$0xff] %vm287, %v260
      %295 = vst.msk [vmem:[%s286 + $0x51] sm:$0xff] %vm287, %v261
      %296 = vst.msk [vmem:[%s286 + $0x61] sm:$0xff] %vm287, %v262
      %297 = vst.msk [vmem:[%s286 + $0x69] sm:$0xff] %vm287, %v263
      %298 = vst.msk [vmem:[%s286 + $0x79] sm:$0xff] %vm287, %v264
      %299 = vst.msk [vmem:[%s286 + $0x81] sm:$0xff] %vm287, %v265
      %300 = vst.msk [vmem:[%s286 + $0x91] sm:$0xff] %vm287, %v266
      %301 = vst.msk [vmem:[%s286 + $0x99] sm:$0xff] %vm287, %v267
      %302 = vst.msk [vmem:[%s286 + $0xa9] sm:$0xff] %vm287, %v268
      %303 = vst.msk [vmem:[%s286 + $0xb1] sm:$0xff] %vm287, %v269
      %304 = vst.msk [vmem:[%s286 + $0xc1] sm:$0xff] %vm287, %v270
      %305 = vst.msk [vmem:[%s286 + $0xc9] sm:$0xff] %vm287, %v271
      %306 = vst.msk [vmem:[%s286 + $0xd9] sm:$0xff] %vm287, %v272
      %307 = vst.msk [vmem:[%s286 + $0xe1] sm:$0xff] %vm287, %v273
      %308 = vst.msk [vmem:[%s286 + $0xf1] sm:$0xff] %vm287, %v274
      %309 = vst.msk [vmem:[%s286 + $0xf9] sm:$0xff] %vm287, %v275
      %310 = vst.msk [vmem:[%s286 + $0x109] sm:$0xff] %vm287, %v276
      %311 = vst.msk [vmem:[%s286 + $0x111] sm:$0xff] %vm287, %v277
      %312 = vst.msk [vmem:[%s286 + $0x121] sm:$0xff] %vm287, %v278
      %313 = vst.msk [vmem:[%s286 + $0x129] sm:$0xff] %vm287, %v279
      %314 = vst.msk [vmem:[%s286 + $0x139] sm:$0xff] %vm287, %v280
      %315 = vst.msk [vmem:[%s286 + $0x141] sm:$0xff] %vm287, %v281
      %316 = vst.msk [vmem:[%s286 + $0x151] sm:$0xff] %vm287, %v282
      %317 = vst.msk [vmem:[%s286 + $0x159] sm:$0xff] %vm287, %v283
      %318 = vst.msk [vmem:[%s286 + $0x169] sm:$0xff] %vm287, %v284
      %319 = vst.msk [vmem:[%s286 + $0x171] sm:$0xff] %vm287, %v285
      %v320 = vld [vmem:[#allocation2] sm:$0xff]
      %v321 = vld [vmem:[#allocation2 + $0x8] sm:$0xff]
      %v322 = vld [vmem:[#allocation2 + $0x18] sm:$0xff]
      %v323 = vld [vmem:[#allocation2 + $0x20] sm:$0xff]
      %v324 = vld [vmem:[#allocation2 + $0x30] sm:$0xff]
      %v325 = vld [vmem:[#allocation2 + $0x38] sm:$0xff]
      %v326 = vld [vmem:[#allocation2 + $0x48] sm:$0xff]
      %v327 = vld [vmem:[#allocation2 + $0x50] sm:$0xff]
      %v328 = vld [vmem:[#allocation2 + $0x60] sm:$0xff]
      %v329 = vld [vmem:[#allocation2 + $0x68] sm:$0xff]
      %v330 = vld [vmem:[#allocation2 + $0x78] sm:$0xff]
      %v331 = vld [vmem:[#allocation2 + $0x80] sm:$0xff]
      %v332 = vld [vmem:[#allocation2 + $0x90] sm:$0xff]
      %v333 = vld [vmem:[#allocation2 + $0x98] sm:$0xff]
      %v334 = vld [vmem:[#allocation2 + $0xa8] sm:$0xff]
      %v335 = vld [vmem:[#allocation2 + $0xb0] sm:$0xff]
      %v336 = vld [vmem:[#allocation2 + $0xc0] sm:$0xff]
      %v337 = vld [vmem:[#allocation2 + $0xc8] sm:$0xff]
      %v338 = vld [vmem:[#allocation2 + $0xd8] sm:$0xff]
      %v339 = vld [vmem:[#allocation2 + $0xe0] sm:$0xff]
      %v340 = vld [vmem:[#allocation2 + $0xf0] sm:$0xff]
      %v341 = vld [vmem:[#allocation2 + $0xf8] sm:$0xff]
      %v342 = vld [vmem:[#allocation2 + $0x108] sm:$0xff]
      %v343 = vld [vmem:[#allocation2 + $0x110] sm:$0xff]
      %v344 = vld [vmem:[#allocation2 + $0x120] sm:$0xff]
      %v345 = vld [vmem:[#allocation2 + $0x128] sm:$0xff]
      %v346 = vld [vmem:[#allocation2 + $0x138] sm:$0xff]
      %v347 = vld [vmem:[#allocation2 + $0x140] sm:$0xff]
      %v348 = vld [vmem:[#allocation2 + $0x150] sm:$0xff]
      %v349 = vld [vmem:[#allocation2 + $0x158] sm:$0xff]
      %v350 = vld [vmem:[#allocation2 + $0x168] sm:$0xff]
      %v351 = vld [vmem:[#allocation2 + $0x170] sm:$0xff]
      %v352 = vpack.c.bf16 %v321, %v320
      %v353 = vpack.c.bf16 %v323, %v322
      %v354 = vpack.c.bf16 %v325, %v324
      %v355 = vpack.c.bf16 %v327, %v326
      %v356 = vpack.c.bf16 %v329, %v328
      %v357 = vpack.c.bf16 %v331, %v330
      %v358 = vpack.c.bf16 %v333, %v332
      %v359 = vpack.c.bf16 %v335, %v334
      %v360 = vpack.c.bf16 %v337, %v336
      %v361 = vpack.c.bf16 %v339, %v338
      %v362 = vpack.c.bf16 %v341, %v340
      %v363 = vpack.c.bf16 %v343, %v342
      %v364 = vpack.c.bf16 %v345, %v344
      %v365 = vpack.c.bf16 %v347, %v346
      %v366 = vpack.c.bf16 %v349, %v348
      %v367 = vpack.c.bf16 %v351, %v350
      %v368 = vld [vmem:[%s1] sm:$0x3]
      %v369 = vld [vmem:[#allocation2 + $0x1] sm:$0xff]
      %v370 = vld [vmem:[#allocation2 + $0x9] sm:$0xff]
      %v371 = vld [vmem:[#allocation2 + $0x19] sm:$0xff]
      %v372 = vld [vmem:[#allocation2 + $0x21] sm:$0xff]
      %v373 = vld [vmem:[#allocation2 + $0x31] sm:$0xff]
      %v374 = vld [vmem:[#allocation2 + $0x39] sm:$0xff]
      %v375 = vld [vmem:[#allocation2 + $0x49] sm:$0xff]
      %v376 = vld [vmem:[#allocation2 + $0x51] sm:$0xff]
      %v377 = vld [vmem:[#allocation2 + $0x61] sm:$0xff]
      %v378 = vld [vmem:[#allocation2 + $0x69] sm:$0xff]
      %v379 = vld [vmem:[#allocation2 + $0x79] sm:$0xff]
      %v380 = vld [vmem:[#allocation2 + $0x81] sm:$0xff]
      %v381 = vld [vmem:[#allocation2 + $0x91] sm:$0xff]
      %v382 = vld [vmem:[#allocation2 + $0x99] sm:$0xff]
      %v383 = vld [vmem:[#allocation2 + $0xa9] sm:$0xff]
      %v384 = vld [vmem:[#allocation2 + $0xb1] sm:$0xff]
      %v385 = vld [vmem:[#allocation2 + $0xc1] sm:$0xff]
      %v386 = vld [vmem:[#allocation2 + $0xc9] sm:$0xff]
      %v387 = vld [vmem:[#allocation2 + $0xd9] sm:$0xff]
      %v388 = vld [vmem:[#allocation2 + $0xe1] sm:$0xff]
      %v389 = vld [vmem:[#allocation2 + $0xf1] sm:$0xff]
      %v390 = vld [vmem:[#allocation2 + $0xf9] sm:$0xff]
      %v391 = vld [vmem:[#allocation2 + $0x109] sm:$0xff]
      %v392 = vld [vmem:[#allocation2 + $0x111] sm:$0xff]
      %v393 = vld [vmem:[#allocation2 + $0x121] sm:$0xff]
      %v394 = vld [vmem:[#allocation2 + $0x129] sm:$0xff]
      %v395 = vld [vmem:[#allocation2 + $0x139] sm:$0xff]
      %v396 = vld [vmem:[#allocation2 + $0x141] sm:$0xff]
      %v397 = vld [vmem:[#allocation2 + $0x151] sm:$0xff]
      %v398 = vld [vmem:[#allocation2 + $0x159] sm:$0xff]
      %v399 = vld [vmem:[#allocation2 + $0x169] sm:$0xff]
      %v400 = vld [vmem:[#allocation2 + $0x171] sm:$0xff]
      %v401 = vpack.c.bf16 %v370, %v369
      %v402 = vpack.c.bf16 %v372, %v371
      %v403 = vpack.c.bf16 %v374, %v373
      %v404 = vpack.c.bf16 %v376, %v375
      %v405 = vpack.c.bf16 %v378, %v377
      %v406 = vpack.c.bf16 %v380, %v379
      %v407 = vpack.c.bf16 %v382, %v381
      %v408 = vpack.c.bf16 %v384, %v383
      %v409 = vpack.c.bf16 %v386, %v385
      %v410 = vpack.c.bf16 %v388, %v387
      %v411 = vpack.c.bf16 %v390, %v389
      %v412 = vpack.c.bf16 %v392, %v391
      %v413 = vpack.c.bf16 %v394, %v393
      %v414 = vpack.c.bf16 %v396, %v395
      %v415 = vpack.c.bf16 %v398, %v397
      %v416 = vpack.c.bf16 %v400, %v399
      %s417 = scalar_lea.vmem %s1, 2
      %v418 = vld [vmem:[%s417] sm:$0x3]
      %v420 = vsel %vm287, %v401, 0
      %v423 = vsel %vm287, %v402, 0
      %v426 = vsel %vm287, %v403, 0
      %v429 = vsel %vm287, %v404, 0
      %v432 = vsel %vm287, %v405, 0
      %v435 = vsel %vm287, %v406, 0
      %v438 = vsel %vm287, %v407, 0
      %v441 = vsel %vm287, %v408, 0
      %v444 = vsel %vm287, %v409, 0
      %v447 = vsel %vm287, %v410, 0
      %v450 = vsel %vm287, %v411, 0
      %v453 = vsel %vm287, %v412, 0
      %v456 = vsel %vm287, %v413, 0
      %v459 = vsel %vm287, %v414, 0
      %v462 = vsel %vm287, %v415, 0
      %v465 = vsel %vm287, %v416, 0
      %vm467 = vcmask 1041408
      %v469 = vsel %vm467, %v418, 0
      %471 = vmatprep.subr.bf16.mxu0 0
      %472 = vmatpush1.bf16.msra.mxu0 0
      %473 = vmatprep.subr.bf16.mxu0 0
      %474 = vmatpush1.bf16.msra.mxu0 0
      %475 = vmatprep.subr.bf16.mxu0 0
      %476 = vmatpush1.bf16.msra.mxu0 0
      %477 = vmatprep.subr.bf16.mxu0 0
      %478 = vmatpush1.bf16.msra.mxu0 0
      %479 = vmatprep.subr.bf16.mxu0 0
      %480 = vmatpush1.bf16.msra.mxu0 0
      %481 = vmatprep.subr.bf16.mxu0 0
      %482 = vmatpush1.bf16.msra.mxu0 0
      %483 = vmatprep.subr.bf16.mxu0 0
      %484 = vmatpush1.bf16.msra.mxu0 0
      %485 = vmatprep.subr.bf16.mxu0 0
      %486 = vmatpush1.bf16.msra.mxu0 %v469
      %487 = vmatprep.subr.bf16.mxu0 0
      %488 = vmatpush2.bf16.msra.mxu0 0
      %489 = vmatprep.subr.bf16.mxu0 0
      %490 = vmatpush2.bf16.msra.mxu0 0
      %491 = vmatprep.subr.bf16.mxu0 0
      %492 = vmatpush2.bf16.msra.mxu0 0
      %493 = vmatprep.subr.bf16.mxu0 0
      %494 = vmatpush2.bf16.msra.mxu0 0
      %495 = vmatprep.subr.bf16.mxu0 0
      %496 = vmatpush2.bf16.msra.mxu0 0
      %497 = vmatprep.subr.bf16.mxu0 0
      %498 = vmatpush2.bf16.msra.mxu0 0
      %499 = vmatprep.subr.bf16.mxu0 0
      %500 = vmatpush2.bf16.msra.mxu0 0
      %501 = vmatprep.subr.bf16.mxu0 0
      %502 = vmatpush2.bf16.msra.mxu0 0
      %503 = vmatprep.mubr.bf16.mxu0 0
      %504 = vmatmul.mubr.bf16.gmra.mxu0 %v420
      %v505 = vpop.f32.mrf.mxu0
      %v506 = vadd.f32 0.0, %v505
      %v507 = vpop.f32.mrf.mxu0
      %v508 = vpop.f32.mrf.mxu0
      %v509 = vadd.f32 0.0, %v508
      %v510 = vpop.f32.mrf.mxu0
      %511 = vmatprep.mubr.bf16.mxu0 0
      %512 = vmatmul.mubr.bf16.gmra.mxu0 %v423
      %v513 = vpop.f32.mrf.mxu0
      %v514 = vadd.f32 0.0, %v513
      %v515 = vpop.f32.mrf.mxu0
      %v516 = vpop.f32.mrf.mxu0
      %v517 = vadd.f32 0.0, %v516
      %v518 = vpop.f32.mrf.mxu0
      %519 = vmatprep.mubr.bf16.mxu0 0
      %520 = vmatmul.mubr.bf16.gmra.mxu0 %v426
      %v521 = vpop.f32.mrf.mxu0
      %v522 = vadd.f32 0.0, %v521
      %v523 = vpop.f32.mrf.mxu0
      %v524 = vpop.f32.mrf.mxu0
      %v525 = vadd.f32 0.0, %v524
      %v526 = vpop.f32.mrf.mxu0
      %527 = vmatprep.mubr.bf16.mxu0 0
      %528 = vmatmul.mubr.bf16.gmra.mxu0 %v429
      %v529 = vpop.f32.mrf.mxu0
      %v530 = vadd.f32 0.0, %v529
      %v531 = vpop.f32.mrf.mxu0
      %v532 = vpop.f32.mrf.mxu0
      %v533 = vadd.f32 0.0, %v532
      %v534 = vpop.f32.mrf.mxu0
      %535 = vmatprep.mubr.bf16.mxu0 0
      %536 = vmatmul.mubr.bf16.gmra.mxu0 %v432
      %v537 = vpop.f32.mrf.mxu0
      %v538 = vadd.f32 0.0, %v537
      %v539 = vpop.f32.mrf.mxu0
      %v540 = vpop.f32.mrf.mxu0
      %v541 = vadd.f32 0.0, %v540
      %v542 = vpop.f32.mrf.mxu0
      %543 = vmatprep.mubr.bf16.mxu0 0
      %544 = vmatmul.mubr.bf16.gmra.mxu0 %v435
      %v545 = vpop.f32.mrf.mxu0
      %v546 = vadd.f32 0.0, %v545
      %v547 = vpop.f32.mrf.mxu0
      %v548 = vpop.f32.mrf.mxu0
      %v549 = vadd.f32 0.0, %v548
      %v550 = vpop.f32.mrf.mxu0
      %551 = vmatprep.mubr.bf16.mxu0 0
      %552 = vmatmul.mubr.bf16.gmra.mxu0 %v438
      %v553 = vpop.f32.mrf.mxu0
      %v554 = vadd.f32 0.0, %v553
      %v555 = vpop.f32.mrf.mxu0
      %v556 = vpop.f32.mrf.mxu0
      %v557 = vadd.f32 0.0, %v556
      %v558 = vpop.f32.mrf.mxu0
      %559 = vmatprep.mubr.bf16.mxu0 0
      %560 = vmatmul.mubr.bf16.gmra.mxu0 %v441
      %v561 = vpop.f32.mrf.mxu0
      %v562 = vadd.f32 0.0, %v561
      %v563 = vpop.f32.mrf.mxu0
      %v564 = vpop.f32.mrf.mxu0
      %v565 = vadd.f32 0.0, %v564
      %v566 = vpop.f32.mrf.mxu0
      %567 = vmatprep.mubr.bf16.mxu0 0
      %568 = vmatmul.mubr.bf16.gmra.mxu0 %v444
      %v569 = vpop.f32.mrf.mxu0
      %v570 = vadd.f32 0.0, %v569
      %v571 = vpop.f32.mrf.mxu0
      %v572 = vpop.f32.mrf.mxu0
      %v573 = vadd.f32 0.0, %v572
      %v574 = vpop.f32.mrf.mxu0
      %575 = vmatprep.mubr.bf16.mxu0 0
      %576 = vmatmul.mubr.bf16.gmra.mxu0 %v447
      %v577 = vpop.f32.mrf.mxu0
      %v578 = vadd.f32 0.0, %v577
      %v579 = vpop.f32.mrf.mxu0
      %v580 = vpop.f32.mrf.mxu0
      %v581 = vadd.f32 0.0, %v580
      %v582 = vpop.f32.mrf.mxu0
      %583 = vmatprep.mubr.bf16.mxu0 0
      %584 = vmatmul.mubr.bf16.gmra.mxu0 %v450
      %v585 = vpop.f32.mrf.mxu0
      %v586 = vadd.f32 0.0, %v585
      %v587 = vpop.f32.mrf.mxu0
      %v588 = vpop.f32.mrf.mxu0
      %v589 = vadd.f32 0.0, %v588
      %v590 = vpop.f32.mrf.mxu0
      %591 = vmatprep.mubr.bf16.mxu0 0
      %592 = vmatmul.mubr.bf16.gmra.mxu0 %v453
      %v593 = vpop.f32.mrf.mxu0
      %v594 = vadd.f32 0.0, %v593
      %v595 = vpop.f32.mrf.mxu0
      %v596 = vpop.f32.mrf.mxu0
      %v597 = vadd.f32 0.0, %v596
      %v598 = vpop.f32.mrf.mxu0
      %599 = vmatprep.mubr.bf16.mxu0 0
      %600 = vmatmul.mubr.bf16.gmra.mxu0 %v456
      %v601 = vpop.f32.mrf.mxu0
      %v602 = vadd.f32 0.0, %v601
      %v603 = vpop.f32.mrf.mxu0
      %v604 = vpop.f32.mrf.mxu0
      %v605 = vadd.f32 0.0, %v604
      %v606 = vpop.f32.mrf.mxu0
      %607 = vmatprep.mubr.bf16.mxu0 0
      %608 = vmatmul.mubr.bf16.gmra.mxu0 %v459
      %v609 = vpop.f32.mrf.mxu0
      %v610 = vadd.f32 0.0, %v609
      %v611 = vpop.f32.mrf.mxu0
      %v612 = vpop.f32.mrf.mxu0
      %v613 = vadd.f32 0.0, %v612
      %v614 = vpop.f32.mrf.mxu0
      %615 = vmatprep.mubr.bf16.mxu0 0
      %616 = vmatmul.mubr.bf16.gmra.mxu0 %v462
      %v617 = vpop.f32.mrf.mxu0
      %v618 = vadd.f32 0.0, %v617
      %v619 = vpop.f32.mrf.mxu0
      %v620 = vpop.f32.mrf.mxu0
      %v621 = vadd.f32 0.0, %v620
      %v622 = vpop.f32.mrf.mxu0
      %623 = vmatprep.mubr.bf16.mxu0 0
      %624 = vmatmul.mubr.bf16.gmra.mxu0 %v465
      %v625 = vpop.f32.mrf.mxu0
      %v626 = vadd.f32 0.0, %v625
      %v627 = vpop.f32.mrf.mxu0
      %v628 = vpop.f32.mrf.mxu0
      %v629 = vadd.f32 0.0, %v628
      %v630 = vpop.f32.mrf.mxu0
      %631 = vdwg.mxu0
      %v633 = vsel %vm287, %v352, 0
      %v636 = vsel %vm287, %v353, 0
      %v639 = vsel %vm287, %v354, 0
      %v642 = vsel %vm287, %v355, 0
      %v645 = vsel %vm287, %v356, 0
      %v648 = vsel %vm287, %v357, 0
      %v651 = vsel %vm287, %v358, 0
      %v654 = vsel %vm287, %v359, 0
      %v657 = vsel %vm287, %v360, 0
      %v660 = vsel %vm287, %v361, 0
      %v663 = vsel %vm287, %v362, 0
      %v666 = vsel %vm287, %v363, 0
      %v669 = vsel %vm287, %v364, 0
      %v672 = vsel %vm287, %v365, 0
      %v675 = vsel %vm287, %v366, 0
      %v678 = vsel %vm287, %v367, 0
      %v681 = vsel %vm467, %v368, 0
      %683 = vmatprep.subr.bf16.mxu0 0
      %684 = vmatpush1.bf16.msra.mxu0 0
      %685 = vmatprep.subr.bf16.mxu0 0
      %686 = vmatpush1.bf16.msra.mxu0 0
      %687 = vmatprep.subr.bf16.mxu0 0
      %688 = vmatpush1.bf16.msra.mxu0 0
      %689 = vmatprep.subr.bf16.mxu0 0
      %690 = vmatpush1.bf16.msra.mxu0 0
      %691 = vmatprep.subr.bf16.mxu0 0
      %692 = vmatpush1.bf16.msra.mxu0 0
      %693 = vmatprep.subr.bf16.mxu0 0
      %694 = vmatpush1.bf16.msra.mxu0 0
      %695 = vmatprep.subr.bf16.mxu0 0
      %696 = vmatpush1.bf16.msra.mxu0 0
      %697 = vmatprep.subr.bf16.mxu0 0
      %698 = vmatpush1.bf16.msra.mxu0 %v681
      %699 = vmatprep.subr.bf16.mxu0 0
      %700 = vmatpush2.bf16.msra.mxu0 0
      %701 = vmatprep.subr.bf16.mxu0 0
      %702 = vmatpush2.bf16.msra.mxu0 0
      %703 = vmatprep.subr.bf16.mxu0 0
      %704 = vmatpush2.bf16.msra.mxu0 0
      %705 = vmatprep.subr.bf16.mxu0 0
      %706 = vmatpush2.bf16.msra.mxu0 0
      %707 = vmatprep.subr.bf16.mxu0 0
      %708 = vmatpush2.bf16.msra.mxu0 0
      %709 = vmatprep.subr.bf16.mxu0 0
      %710 = vmatpush2.bf16.msra.mxu0 0
      %711 = vmatprep.subr.bf16.mxu0 0
      %712 = vmatpush2.bf16.msra.mxu0 0
      %713 = vmatprep.subr.bf16.mxu0 0
      %714 = vmatpush2.bf16.msra.mxu0 0
      %715 = vmatprep.mubr.bf16.mxu0 0
      %716 = vmatmul.mubr.bf16.gmra.mxu0 %v633
      %v717 = vpop.f32.mrf.mxu0
      %v718 = vadd.f32 %v506, %v717
      %v719 = vpop.f32.mrf.mxu0
      %v720 = vpop.f32.mrf.mxu0
      %v721 = vadd.f32 %v509, %v720
      %v722 = vpop.f32.mrf.mxu0
      %723 = vmatprep.mubr.bf16.mxu0 0
      %724 = vmatmul.mubr.bf16.gmra.mxu0 %v636
      %v725 = vpop.f32.mrf.mxu0
      %v726 = vadd.f32 %v514, %v725
      %v727 = vpop.f32.mrf.mxu0
      %v728 = vpop.f32.mrf.mxu0
      %v729 = vadd.f32 %v517, %v728
      %v730 = vpop.f32.mrf.mxu0
      %731 = vmatprep.mubr.bf16.mxu0 0
      %732 = vmatmul.mubr.bf16.gmra.mxu0 %v639
      %v733 = vpop.f32.mrf.mxu0
      %v734 = vadd.f32 %v522, %v733
      %v735 = vpop.f32.mrf.mxu0
      %v736 = vpop.f32.mrf.mxu0
      %v737 = vadd.f32 %v525, %v736
      %v738 = vpop.f32.mrf.mxu0
      %739 = vmatprep.mubr.bf16.mxu0 0
      %740 = vmatmul.mubr.bf16.gmra.mxu0 %v642
      %v741 = vpop.f32.mrf.mxu0
      %v742 = vadd.f32 %v530, %v741
      %v743 = vpop.f32.mrf.mxu0
      %v744 = vpop.f32.mrf.mxu0
      %v745 = vadd.f32 %v533, %v744
      %v746 = vpop.f32.mrf.mxu0
      %747 = vmatprep.mubr.bf16.mxu0 0
      %748 = vmatmul.mubr.bf16.gmra.mxu0 %v645
      %v749 = vpop.f32.mrf.mxu0
      %v750 = vadd.f32 %v538, %v749
      %v751 = vpop.f32.mrf.mxu0
      %v752 = vpop.f32.mrf.mxu0
      %v753 = vadd.f32 %v541, %v752
      %v754 = vpop.f32.mrf.mxu0
      %755 = vmatprep.mubr.bf16.mxu0 0
      %756 = vmatmul.mubr.bf16.gmra.mxu0 %v648
      %v757 = vpop.f32.mrf.mxu0
      %v758 = vadd.f32 %v546, %v757
      %v759 = vpop.f32.mrf.mxu0
      %v760 = vpop.f32.mrf.mxu0
      %v761 = vadd.f32 %v549, %v760
      %v762 = vpop.f32.mrf.mxu0
      %763 = vmatprep.mubr.bf16.mxu0 0
      %764 = vmatmul.mubr.bf16.gmra.mxu0 %v651
      %v765 = vpop.f32.mrf.mxu0
      %v766 = vadd.f32 %v554, %v765
      %v767 = vpop.f32.mrf.mxu0
      %v768 = vpop.f32.mrf.mxu0
      %v769 = vadd.f32 %v557, %v768
      %v770 = vpop.f32.mrf.mxu0
      %771 = vmatprep.mubr.bf16.mxu0 0
      %772 = vmatmul.mubr.bf16.gmra.mxu0 %v654
      %v773 = vpop.f32.mrf.mxu0
      %v774 = vadd.f32 %v562, %v773
      %v775 = vpop.f32.mrf.mxu0
      %v776 = vpop.f32.mrf.mxu0
      %v777 = vadd.f32 %v565, %v776
      %v778 = vpop.f32.mrf.mxu0
      %779 = vmatprep.mubr.bf16.mxu0 0
      %780 = vmatmul.mubr.bf16.gmra.mxu0 %v657
      %v781 = vpop.f32.mrf.mxu0
      %v782 = vadd.f32 %v570, %v781
      %v783 = vpop.f32.mrf.mxu0
      %v784 = vpop.f32.mrf.mxu0
      %v785 = vadd.f32 %v573, %v784
      %v786 = vpop.f32.mrf.mxu0
      %787 = vmatprep.mubr.bf16.mxu0 0
      %788 = vmatmul.mubr.bf16.gmra.mxu0 %v660
      %v789 = vpop.f32.mrf.mxu0
      %v790 = vadd.f32 %v578, %v789
      %v791 = vpop.f32.mrf.mxu0
      %v792 = vpop.f32.mrf.mxu0
      %v793 = vadd.f32 %v581, %v792
      %v794 = vpop.f32.mrf.mxu0
      %795 = vmatprep.mubr.bf16.mxu0 0
      %796 = vmatmul.mubr.bf16.gmra.mxu0 %v663
      %v797 = vpop.f32.mrf.mxu0
      %v798 = vadd.f32 %v586, %v797
      %v799 = vpop.f32.mrf.mxu0
      %v800 = vpop.f32.mrf.mxu0
      %v801 = vadd.f32 %v589, %v800
      %v802 = vpop.f32.mrf.mxu0
      %803 = vmatprep.mubr.bf16.mxu0 0
      %804 = vmatmul.mubr.bf16.gmra.mxu0 %v666
      %v805 = vpop.f32.mrf.mxu0
      %v806 = vadd.f32 %v594, %v805
      %v807 = vpop.f32.mrf.mxu0
      %v808 = vpop.f32.mrf.mxu0
      %v809 = vadd.f32 %v597, %v808
      %v810 = vpop.f32.mrf.mxu0
      %811 = vmatprep.mubr.bf16.mxu0 0
      %812 = vmatmul.mubr.bf16.gmra.mxu0 %v669
      %v813 = vpop.f32.mrf.mxu0
      %v814 = vadd.f32 %v602, %v813
      %v815 = vpop.f32.mrf.mxu0
      %v816 = vpop.f32.mrf.mxu0
      %v817 = vadd.f32 %v605, %v816
      %v818 = vpop.f32.mrf.mxu0
      %819 = vmatprep.mubr.bf16.mxu0 0
      %820 = vmatmul.mubr.bf16.gmra.mxu0 %v672
      %v821 = vpop.f32.mrf.mxu0
      %v822 = vadd.f32 %v610, %v821
      %v823 = vpop.f32.mrf.mxu0
      %v824 = vpop.f32.mrf.mxu0
      %v825 = vadd.f32 %v613, %v824
      %v826 = vpop.f32.mrf.mxu0
      %827 = vmatprep.mubr.bf16.mxu0 0
      %828 = vmatmul.mubr.bf16.gmra.mxu0 %v675
      %v829 = vpop.f32.mrf.mxu0
      %v830 = vadd.f32 %v618, %v829
      %v831 = vpop.f32.mrf.mxu0
      %v832 = vpop.f32.mrf.mxu0
      %v833 = vadd.f32 %v621, %v832
      %v834 = vpop.f32.mrf.mxu0
      %835 = vmatprep.mubr.bf16.mxu0 0
      %836 = vmatmul.mubr.bf16.gmra.mxu0 %v678
      %v837 = vpop.f32.mrf.mxu0
      %v838 = vadd.f32 %v626, %v837
      %v839 = vpop.f32.mrf.mxu0
      %v840 = vpop.f32.mrf.mxu0
      %v841 = vadd.f32 %v629, %v840
      %v842 = vpop.f32.mrf.mxu0
      %843 = vdwg.mxu0
      %v844 = vld [vmem:[#allocation2 + $0x2] sm:$0xff]
      %v845 = vld [vmem:[#allocation2 + $0xa] sm:$0xff]
      %v846 = vld [vmem:[#allocation2 + $0x1a] sm:$0xff]
      %v847 = vld [vmem:[#allocation2 + $0x22] sm:$0xff]
      %v848 = vld [vmem:[#allocation2 + $0x32] sm:$0xff]
      %v849 = vld [vmem:[#allocation2 + $0x3a] sm:$0xff]
      %v850 = vld [vmem:[#allocation2 + $0x4a] sm:$0xff]
      %v851 = vld [vmem:[#allocation2 + $0x52] sm:$0xff]
      %v852 = vld [vmem:[#allocation2 + $0x62] sm:$0xff]
      %v853 = vld [vmem:[#allocation2 + $0x6a] sm:$0xff]
      %v854 = vld [vmem:[#allocation2 + $0x7a] sm:$0xff]
      %v855 = vld [vmem:[#allocation2 + $0x82] sm:$0xff]
      %v856 = vld [vmem:[#allocation2 + $0x92] sm:$0xff]
      %v857 = vld [vmem:[#allocation2 + $0x9a] sm:$0xff]
      %v858 = vld [vmem:[#allocation2 + $0xaa] sm:$0xff]
      %v859 = vld [vmem:[#allocation2 + $0xb2] sm:$0xff]
      %v860 = vld [vmem:[#allocation2 + $0xc2] sm:$0xff]
      %v861 = vld [vmem:[#allocation2 + $0xca] sm:$0xff]
      %v862 = vld [vmem:[#allocation2 + $0xda] sm:$0xff]
      %v863 = vld [vmem:[#allocation2 + $0xe2] sm:$0xff]
      %v864 = vld [vmem:[#allocation2 + $0xf2] sm:$0xff]
      %v865 = vld [vmem:[#allocation2 + $0xfa] sm:$0xff]
      %v866 = vld [vmem:[#allocation2 + $0x10a] sm:$0xff]
      %v867 = vld [vmem:[#allocation2 + $0x112] sm:$0xff]
      %v868 = vld [vmem:[#allocation2 + $0x122] sm:$0xff]
      %v869 = vld [vmem:[#allocation2 + $0x12a] sm:$0xff]
      %v870 = vld [vmem:[#allocation2 + $0x13a] sm:$0xff]
      %v871 = vld [vmem:[#allocation2 + $0x142] sm:$0xff]
      %v872 = vld [vmem:[#allocation2 + $0x152] sm:$0xff]
      %v873 = vld [vmem:[#allocation2 + $0x15a] sm:$0xff]
      %v874 = vld [vmem:[#allocation2 + $0x16a] sm:$0xff]
      %v875 = vld [vmem:[#allocation2 + $0x172] sm:$0xff]
      %v876 = vpack.c.bf16 %v845, %v844
      %v877 = vpack.c.bf16 %v847, %v846
      %v878 = vpack.c.bf16 %v849, %v848
      %v879 = vpack.c.bf16 %v851, %v850
      %v880 = vpack.c.bf16 %v853, %v852
      %v881 = vpack.c.bf16 %v855, %v854
      %v882 = vpack.c.bf16 %v857, %v856
      %v883 = vpack.c.bf16 %v859, %v858
      %v884 = vpack.c.bf16 %v861, %v860
      %v885 = vpack.c.bf16 %v863, %v862
      %v886 = vpack.c.bf16 %v865, %v864
      %v887 = vpack.c.bf16 %v867, %v866
      %v888 = vpack.c.bf16 %v869, %v868
      %v889 = vpack.c.bf16 %v871, %v870
      %v890 = vpack.c.bf16 %v873, %v872
      %v891 = vpack.c.bf16 %v875, %v874
      %s892 = scalar_lea.vmem %s1, 4
      %v893 = vld [vmem:[%s892] sm:$0x3]
      %v895 = vsel %vm287, %v876, 0
      %v898 = vsel %vm287, %v877, 0
      %v901 = vsel %vm287, %v878, 0
      %v904 = vsel %vm287, %v879, 0
      %v907 = vsel %vm287, %v880, 0
      %v910 = vsel %vm287, %v881, 0
      %v913 = vsel %vm287, %v882, 0
      %v916 = vsel %vm287, %v883, 0
      %v919 = vsel %vm287, %v884, 0
      %v922 = vsel %vm287, %v885, 0
      %v925 = vsel %vm287, %v886, 0
      %v928 = vsel %vm287, %v887, 0
      %v931 = vsel %vm287, %v888, 0
      %v934 = vsel %vm287, %v889, 0
      %v937 = vsel %vm287, %v890, 0
      %v940 = vsel %vm287, %v891, 0
      %v943 = vsel %vm467, %v893, 0
      %945 = vmatprep.subr.bf16.mxu0 0
      %946 = vmatpush1.bf16.msra.mxu0 0
      %947 = vmatprep.subr.bf16.mxu0 0
      %948 = vmatpush1.bf16.msra.mxu0 0
      %949 = vmatprep.subr.bf16.mxu0 0
      %950 = vmatpush1.bf16.msra.mxu0 0
      %951 = vmatprep.subr.bf16.mxu0 0
      %952 = vmatpush1.bf16.msra.mxu0 0
      %953 = vmatprep.subr.bf16.mxu0 0
      %954 = vmatpush1.bf16.msra.mxu0 0
      %955 = vmatprep.subr.bf16.mxu0 0
      %956 = vmatpush1.bf16.msra.mxu0 0
      %957 = vmatprep.subr.bf16.mxu0 0
      %958 = vmatpush1.bf16.msra.mxu0 0
      %959 = vmatprep.subr.bf16.mxu0 0
      %960 = vmatpush1.bf16.msra.mxu0 %v943
      %961 = vmatprep.subr.bf16.mxu0 0
      %962 = vmatpush2.bf16.msra.mxu0 0
      %963 = vmatprep.subr.bf16.mxu0 0
      %964 = vmatpush2.bf16.msra.mxu0 0
      %965 = vmatprep.subr.bf16.mxu0 0
      %966 = vmatpush2.bf16.msra.mxu0 0
      %967 = vmatprep.subr.bf16.mxu0 0
      %968 = vmatpush2.bf16.msra.mxu0 0
      %969 = vmatprep.subr.bf16.mxu0 0
      %970 = vmatpush2.bf16.msra.mxu0 0
      %971 = vmatprep.subr.bf16.mxu0 0
      %972 = vmatpush2.bf16.msra.mxu0 0
      %973 = vmatprep.subr.bf16.mxu0 0
      %974 = vmatpush2.bf16.msra.mxu0 0
      %975 = vmatprep.subr.bf16.mxu0 0
      %976 = vmatpush2.bf16.msra.mxu0 0
      %977 = vmatprep.mubr.bf16.mxu0 0
      %978 = vmatmul.mubr.bf16.gmra.mxu0 %v895
      %v979 = vpop.f32.mrf.mxu0
      %v980 = vadd.f32 0.0, %v979
      %v981 = vpop.f32.mrf.mxu0
      %v982 = vpop.f32.mrf.mxu0
      %v983 = vadd.f32 0.0, %v982
      %v984 = vpop.f32.mrf.mxu0
      %985 = vmatprep.mubr.bf16.mxu0 0
      %986 = vmatmul.mubr.bf16.gmra.mxu0 %v898
      %v987 = vpop.f32.mrf.mxu0
      %v988 = vadd.f32 0.0, %v987
      %v989 = vpop.f32.mrf.mxu0
      %v990 = vpop.f32.mrf.mxu0
      %v991 = vadd.f32 0.0, %v990
      %v992 = vpop.f32.mrf.mxu0
      %993 = vmatprep.mubr.bf16.mxu0 0
      %994 = vmatmul.mubr.bf16.gmra.mxu0 %v901
      %v995 = vpop.f32.mrf.mxu0
      %v996 = vadd.f32 0.0, %v995
      %v997 = vpop.f32.mrf.mxu0
      %v998 = vpop.f32.mrf.mxu0
      %v999 = vadd.f32 0.0, %v998
      %v1000 = vpop.f32.mrf.mxu0
      %1001 = vmatprep.mubr.bf16.mxu0 0
      %1002 = vmatmul.mubr.bf16.gmra.mxu0 %v904
      %v1003 = vpop.f32.mrf.mxu0
      %v1004 = vadd.f32 0.0, %v1003
      %v1005 = vpop.f32.mrf.mxu0
      %v1006 = vpop.f32.mrf.mxu0
      %v1007 = vadd.f32 0.0, %v1006
      %v1008 = vpop.f32.mrf.mxu0
      %1009 = vmatprep.mubr.bf16.mxu0 0
      %1010 = vmatmul.mubr.bf16.gmra.mxu0 %v907
      %v1011 = vpop.f32.mrf.mxu0
      %v1012 = vadd.f32 0.0, %v1011
      %v1013 = vpop.f32.mrf.mxu0
      %v1014 = vpop.f32.mrf.mxu0
      %v1015 = vadd.f32 0.0, %v1014
      %v1016 = vpop.f32.mrf.mxu0
      %1017 = vmatprep.mubr.bf16.mxu0 0
      %1018 = vmatmul.mubr.bf16.gmra.mxu0 %v910
      %v1019 = vpop.f32.mrf.mxu0
      %v1020 = vadd.f32 0.0, %v1019
      %v1021 = vpop.f32.mrf.mxu0
      %v1022 = vpop.f32.mrf.mxu0
      %v1023 = vadd.f32 0.0, %v1022
      %v1024 = vpop.f32.mrf.mxu0
      %1025 = vmatprep.mubr.bf16.mxu0 0
      %1026 = vmatmul.mubr.bf16.gmra.mxu0 %v913
      %v1027 = vpop.f32.mrf.mxu0
      %v1028 = vadd.f32 0.0, %v1027
      %v1029 = vpop.f32.mrf.mxu0
      %v1030 = vpop.f32.mrf.mxu0
      %v1031 = vadd.f32 0.0, %v1030
      %v1032 = vpop.f32.mrf.mxu0
      %1033 = vmatprep.mubr.bf16.mxu0 0
      %1034 = vmatmul.mubr.bf16.gmra.mxu0 %v916
      %v1035 = vpop.f32.mrf.mxu0
      %v1036 = vadd.f32 0.0, %v1035
      %v1037 = vpop.f32.mrf.mxu0
      %v1038 = vpop.f32.mrf.mxu0
      %v1039 = vadd.f32 0.0, %v1038
      %v1040 = vpop.f32.mrf.mxu0
      %1041 = vmatprep.mubr.bf16.mxu0 0
      %1042 = vmatmul.mubr.bf16.gmra.mxu0 %v919
      %v1043 = vpop.f32.mrf.mxu0
      %v1044 = vadd.f32 0.0, %v1043
      %v1045 = vpop.f32.mrf.mxu0
      %v1046 = vpop.f32.mrf.mxu0
      %v1047 = vadd.f32 0.0, %v1046
      %v1048 = vpop.f32.mrf.mxu0
      %1049 = vmatprep.mubr.bf16.mxu0 0
      %1050 = vmatmul.mubr.bf16.gmra.mxu0 %v922
      %v1051 = vpop.f32.mrf.mxu0
      %v1052 = vadd.f32 0.0, %v1051
      %v1053 = vpop.f32.mrf.mxu0
      %v1054 = vpop.f32.mrf.mxu0
      %v1055 = vadd.f32 0.0, %v1054
      %v1056 = vpop.f32.mrf.mxu0
      %1057 = vmatprep.mubr.bf16.mxu0 0
      %1058 = vmatmul.mubr.bf16.gmra.mxu0 %v925
      %v1059 = vpop.f32.mrf.mxu0
      %v1060 = vadd.f32 0.0, %v1059
      %v1061 = vpop.f32.mrf.mxu0
      %v1062 = vpop.f32.mrf.mxu0
      %v1063 = vadd.f32 0.0, %v1062
      %v1064 = vpop.f32.mrf.mxu0
      %1065 = vmatprep.mubr.bf16.mxu0 0
      %1066 = vmatmul.mubr.bf16.gmra.mxu0 %v928
      %v1067 = vpop.f32.mrf.mxu0
      %v1068 = vadd.f32 0.0, %v1067
      %v1069 = vpop.f32.mrf.mxu0
      %v1070 = vpop.f32.mrf.mxu0
      %v1071 = vadd.f32 0.0, %v1070
      %v1072 = vpop.f32.mrf.mxu0
      %1073 = vmatprep.mubr.bf16.mxu0 0
      %1074 = vmatmul.mubr.bf16.gmra.mxu0 %v931
      %v1075 = vpop.f32.mrf.mxu0
      %v1076 = vadd.f32 0.0, %v1075
      %v1077 = vpop.f32.mrf.mxu0
      %v1078 = vpop.f32.mrf.mxu0
      %v1079 = vadd.f32 0.0, %v1078
      %v1080 = vpop.f32.mrf.mxu0
      %1081 = vmatprep.mubr.bf16.mxu0 0
      %1082 = vmatmul.mubr.bf16.gmra.mxu0 %v934
      %v1083 = vpop.f32.mrf.mxu0
      %v1084 = vadd.f32 0.0, %v1083
      %v1085 = vpop.f32.mrf.mxu0
      %v1086 = vpop.f32.mrf.mxu0
      %v1087 = vadd.f32 0.0, %v1086
      %v1088 = vpop.f32.mrf.mxu0
      %1089 = vmatprep.mubr.bf16.mxu0 0
      %1090 = vmatmul.mubr.bf16.gmra.mxu0 %v937
      %v1091 = vpop.f32.mrf.mxu0
      %v1092 = vadd.f32 0.0, %v1091
      %v1093 = vpop.f32.mrf.mxu0
      %v1094 = vpop.f32.mrf.mxu0
      %v1095 = vadd.f32 0.0, %v1094
      %v1096 = vpop.f32.mrf.mxu0
      %1097 = vmatprep.mubr.bf16.mxu0 0
      %1098 = vmatmul.mubr.bf16.gmra.mxu0 %v940
      %v1099 = vpop.f32.mrf.mxu0
      %v1100 = vadd.f32 0.0, %v1099
      %v1101 = vpop.f32.mrf.mxu0
      %v1102 = vpop.f32.mrf.mxu0
      %v1103 = vadd.f32 0.0, %v1102
      %v1104 = vpop.f32.mrf.mxu0
      %1105 = vdwg.mxu0
      %v1106 = vadd.f32 %v718, %v980
      %v1107 = vadd.f32 %v721, %v983
      %v1108 = vadd.f32 %v726, %v988
      %v1109 = vadd.f32 %v729, %v991
      %v1110 = vadd.f32 %v734, %v996
      %v1111 = vadd.f32 %v737, %v999
      %v1112 = vadd.f32 %v742, %v1004
      %v1113 = vadd.f32 %v745, %v1007
      %v1114 = vadd.f32 %v750, %v1012
      %v1115 = vadd.f32 %v753, %v1015
      %v1116 = vadd.f32 %v758, %v1020
      %v1117 = vadd.f32 %v761, %v1023
      %v1118 = vadd.f32 %v766, %v1028
      %v1119 = vadd.f32 %v769, %v1031
      %v1120 = vadd.f32 %v774, %v1036
      %v1121 = vadd.f32 %v777, %v1039
      %v1122 = vadd.f32 %v782, %v1044
      %v1123 = vadd.f32 %v785, %v1047
      %v1124 = vadd.f32 %v790, %v1052
      %v1125 = vadd.f32 %v793, %v1055
      %v1126 = vadd.f32 %v798, %v1060
      %v1127 = vadd.f32 %v801, %v1063
      %v1128 = vadd.f32 %v806, %v1068
      %v1129 = vadd.f32 %v809, %v1071
      %v1130 = vadd.f32 %v814, %v1076
      %v1131 = vadd.f32 %v817, %v1079
      %v1132 = vadd.f32 %v822, %v1084
      %v1133 = vadd.f32 %v825, %v1087
      %v1134 = vadd.f32 %v830, %v1092
      %v1135 = vadd.f32 %v833, %v1095
      %v1136 = vadd.f32 %v838, %v1100
      %v1137 = vadd.f32 %v841, %v1103
      %v1138 = vld [vmem:[%s286] sm:$0xff]
      %v1139 = vld [vmem:[%s286 + $0x8] sm:$0xff]
      %v1140 = vld [vmem:[%s286 + $0x18] sm:$0xff]
      %v1141 = vld [vmem:[%s286 + $0x20] sm:$0xff]
      %v1142 = vld [vmem:[%s286 + $0x30] sm:$0xff]
      %v1143 = vld [vmem:[%s286 + $0x38] sm:$0xff]
      %v1144 = vld [vmem:[%s286 + $0x48] sm:$0xff]
      %v1145 = vld [vmem:[%s286 + $0x50] sm:$0xff]
      %v1146 = vld [vmem:[%s286 + $0x60] sm:$0xff]
      %v1147 = vld [vmem:[%s286 + $0x68] sm:$0xff]
      %v1148 = vld [vmem:[%s286 + $0x78] sm:$0xff]
      %v1149 = vld [vmem:[%s286 + $0x80] sm:$0xff]
      %v1150 = vld [vmem:[%s286 + $0x90] sm:$0xff]
      %v1151 = vld [vmem:[%s286 + $0x98] sm:$0xff]
      %v1152 = vld [vmem:[%s286 + $0xa8] sm:$0xff]
      %v1153 = vld [vmem:[%s286 + $0xb0] sm:$0xff]
      %v1154 = vld [vmem:[%s286 + $0xc0] sm:$0xff]
      %v1155 = vld [vmem:[%s286 + $0xc8] sm:$0xff]
      %v1156 = vld [vmem:[%s286 + $0xd8] sm:$0xff]
      %v1157 = vld [vmem:[%s286 + $0xe0] sm:$0xff]
      %v1158 = vld [vmem:[%s286 + $0xf0] sm:$0xff]
      %v1159 = vld [vmem:[%s286 + $0xf8] sm:$0xff]
      %v1160 = vld [vmem:[%s286 + $0x108] sm:$0xff]
      %v1161 = vld [vmem:[%s286 + $0x110] sm:$0xff]
      %v1162 = vld [vmem:[%s286 + $0x120] sm:$0xff]
      %v1163 = vld [vmem:[%s286 + $0x128] sm:$0xff]
      %v1164 = vld [vmem:[%s286 + $0x138] sm:$0xff]
      %v1165 = vld [vmem:[%s286 + $0x140] sm:$0xff]
      %v1166 = vld [vmem:[%s286 + $0x150] sm:$0xff]
      %v1167 = vld [vmem:[%s286 + $0x158] sm:$0xff]
      %v1168 = vld [vmem:[%s286 + $0x168] sm:$0xff]
      %v1169 = vld [vmem:[%s286 + $0x170] sm:$0xff]
      %v1170 = vpack.c.bf16 %v1139, %v1138
      %v1171 = vpack.c.bf16 %v1141, %v1140
      %v1172 = vpack.c.bf16 %v1143, %v1142
      %v1173 = vpack.c.bf16 %v1145, %v1144
      %v1174 = vpack.c.bf16 %v1147, %v1146
      %v1175 = vpack.c.bf16 %v1149, %v1148
      %v1176 = vpack.c.bf16 %v1151, %v1150
      %v1177 = vpack.c.bf16 %v1153, %v1152
      %v1178 = vpack.c.bf16 %v1155, %v1154
      %v1179 = vpack.c.bf16 %v1157, %v1156
      %v1180 = vpack.c.bf16 %v1159, %v1158
      %v1181 = vpack.c.bf16 %v1161, %v1160
      %v1182 = vpack.c.bf16 %v1163, %v1162
      %v1183 = vpack.c.bf16 %v1165, %v1164
      %v1184 = vpack.c.bf16 %v1167, %v1166
      %v1185 = vpack.c.bf16 %v1169, %v1168
      %s1186 = scalar_lea.vmem %s1, 6
      %v1187 = vld [vmem:[%s1186] sm:$0x3]
      %v1189 = vsel %vm287, %v1170, 0
      %v1192 = vsel %vm287, %v1171, 0
      %v1195 = vsel %vm287, %v1172, 0
      %v1198 = vsel %vm287, %v1173, 0
      %v1201 = vsel %vm287, %v1174, 0
      %v1204 = vsel %vm287, %v1175, 0
      %v1207 = vsel %vm287, %v1176, 0
      %v1210 = vsel %vm287, %v1177, 0
      %v1213 = vsel %vm287, %v1178, 0
      %v1216 = vsel %vm287, %v1179, 0
      %v1219 = vsel %vm287, %v1180, 0
      %v1222 = vsel %vm287, %v1181, 0
      %v1225 = vsel %vm287, %v1182, 0
      %v1228 = vsel %vm287, %v1183, 0
      %v1231 = vsel %vm287, %v1184, 0
      %v1234 = vsel %vm287, %v1185, 0
      %v1237 = vsel %vm467, %v1187, 0
      %1239 = vmatprep.subr.bf16.mxu0 0
      %1240 = vmatpush1.bf16.msra.mxu0 0
      %1241 = vmatprep.subr.bf16.mxu0 0
      %1242 = vmatpush1.bf16.msra.mxu0 0
      %1243 = vmatprep.subr.bf16.mxu0 0
      %1244 = vmatpush1.bf16.msra.mxu0 0
      %1245 = vmatprep.subr.bf16.mxu0 0
      %1246 = vmatpush1.bf16.msra.mxu0 0
      %1247 = vmatprep.subr.bf16.mxu0 0
      %1248 = vmatpush1.bf16.msra.mxu0 0
      %1249 = vmatprep.subr.bf16.mxu0 0
      %1250 = vmatpush1.bf16.msra.mxu0 0
      %1251 = vmatprep.subr.bf16.mxu0 0
      %1252 = vmatpush1.bf16.msra.mxu0 0
      %1253 = vmatprep.subr.bf16.mxu0 0
      %1254 = vmatpush1.bf16.msra.mxu0 %v1237
      %1255 = vmatprep.subr.bf16.mxu0 0
      %1256 = vmatpush2.bf16.msra.mxu0 0
      %1257 = vmatprep.subr.bf16.mxu0 0
      %1258 = vmatpush2.bf16.msra.mxu0 0
      %1259 = vmatprep.subr.bf16.mxu0 0
      %1260 = vmatpush2.bf16.msra.mxu0 0
      %1261 = vmatprep.subr.bf16.mxu0 0
      %1262 = vmatpush2.bf16.msra.mxu0 0
      %1263 = vmatprep.subr.bf16.mxu0 0
      %1264 = vmatpush2.bf16.msra.mxu0 0
      %1265 = vmatprep.subr.bf16.mxu0 0
      %1266 = vmatpush2.bf16.msra.mxu0 0
      %1267 = vmatprep.subr.bf16.mxu0 0
      %1268 = vmatpush2.bf16.msra.mxu0 0
      %1269 = vmatprep.subr.bf16.mxu0 0
      %1270 = vmatpush2.bf16.msra.mxu0 0
      %1271 = vmatprep.mubr.bf16.mxu0 0
      %1272 = vmatmul.mubr.bf16.gmra.mxu0 %v1189
      %v1273 = vpop.f32.mrf.mxu0
      %v1274 = vadd.f32 0.0, %v1273
      %v1275 = vpop.f32.mrf.mxu0
      %v1276 = vpop.f32.mrf.mxu0
      %v1277 = vadd.f32 0.0, %v1276
      %v1278 = vpop.f32.mrf.mxu0
      %1279 = vmatprep.mubr.bf16.mxu0 0
      %1280 = vmatmul.mubr.bf16.gmra.mxu0 %v1192
      %v1281 = vpop.f32.mrf.mxu0
      %v1282 = vadd.f32 0.0, %v1281
      %v1283 = vpop.f32.mrf.mxu0
      %v1284 = vpop.f32.mrf.mxu0
      %v1285 = vadd.f32 0.0, %v1284
      %v1286 = vpop.f32.mrf.mxu0
      %1287 = vmatprep.mubr.bf16.mxu0 0
      %1288 = vmatmul.mubr.bf16.gmra.mxu0 %v1195
      %v1289 = vpop.f32.mrf.mxu0
      %v1290 = vadd.f32 0.0, %v1289
      %v1291 = vpop.f32.mrf.mxu0
      %v1292 = vpop.f32.mrf.mxu0
      %v1293 = vadd.f32 0.0, %v1292
      %v1294 = vpop.f32.mrf.mxu0
      %1295 = vmatprep.mubr.bf16.mxu0 0
      %1296 = vmatmul.mubr.bf16.gmra.mxu0 %v1198
      %v1297 = vpop.f32.mrf.mxu0
      %v1298 = vadd.f32 0.0, %v1297
      %v1299 = vpop.f32.mrf.mxu0
      %v1300 = vpop.f32.mrf.mxu0
      %v1301 = vadd.f32 0.0, %v1300
      %v1302 = vpop.f32.mrf.mxu0
      %1303 = vmatprep.mubr.bf16.mxu0 0
      %1304 = vmatmul.mubr.bf16.gmra.mxu0 %v1201
      %v1305 = vpop.f32.mrf.mxu0
      %v1306 = vadd.f32 0.0, %v1305
      %v1307 = vpop.f32.mrf.mxu0
      %v1308 = vpop.f32.mrf.mxu0
      %v1309 = vadd.f32 0.0, %v1308
      %v1310 = vpop.f32.mrf.mxu0
      %1311 = vmatprep.mubr.bf16.mxu0 0
      %1312 = vmatmul.mubr.bf16.gmra.mxu0 %v1204
      %v1313 = vpop.f32.mrf.mxu0
      %v1314 = vadd.f32 0.0, %v1313
      %v1315 = vpop.f32.mrf.mxu0
      %v1316 = vpop.f32.mrf.mxu0
      %v1317 = vadd.f32 0.0, %v1316
      %v1318 = vpop.f32.mrf.mxu0
      %1319 = vmatprep.mubr.bf16.mxu0 0
      %1320 = vmatmul.mubr.bf16.gmra.mxu0 %v1207
      %v1321 = vpop.f32.mrf.mxu0
      %v1322 = vadd.f32 0.0, %v1321
      %v1323 = vpop.f32.mrf.mxu0
      %v1324 = vpop.f32.mrf.mxu0
      %v1325 = vadd.f32 0.0, %v1324
      %v1326 = vpop.f32.mrf.mxu0
      %1327 = vmatprep.mubr.bf16.mxu0 0
      %1328 = vmatmul.mubr.bf16.gmra.mxu0 %v1210
      %v1329 = vpop.f32.mrf.mxu0
      %v1330 = vadd.f32 0.0, %v1329
      %v1331 = vpop.f32.mrf.mxu0
      %v1332 = vpop.f32.mrf.mxu0
      %v1333 = vadd.f32 0.0, %v1332
      %v1334 = vpop.f32.mrf.mxu0
      %1335 = vmatprep.mubr.bf16.mxu0 0
      %1336 = vmatmul.mubr.bf16.gmra.mxu0 %v1213
      %v1337 = vpop.f32.mrf.mxu0
      %v1338 = vadd.f32 0.0, %v1337
      %v1339 = vpop.f32.mrf.mxu0
      %v1340 = vpop.f32.mrf.mxu0
      %v1341 = vadd.f32 0.0, %v1340
      %v1342 = vpop.f32.mrf.mxu0
      %1343 = vmatprep.mubr.bf16.mxu0 0
      %1344 = vmatmul.mubr.bf16.gmra.mxu0 %v1216
      %v1345 = vpop.f32.mrf.mxu0
      %v1346 = vadd.f32 0.0, %v1345
      %v1347 = vpop.f32.mrf.mxu0
      %v1348 = vpop.f32.mrf.mxu0
      %v1349 = vadd.f32 0.0, %v1348
      %v1350 = vpop.f32.mrf.mxu0
      %1351 = vmatprep.mubr.bf16.mxu0 0
      %1352 = vmatmul.mubr.bf16.gmra.mxu0 %v1219
      %v1353 = vpop.f32.mrf.mxu0
      %v1354 = vadd.f32 0.0, %v1353
      %v1355 = vpop.f32.mrf.mxu0
      %v1356 = vpop.f32.mrf.mxu0
      %v1357 = vadd.f32 0.0, %v1356
      %v1358 = vpop.f32.mrf.mxu0
      %1359 = vmatprep.mubr.bf16.mxu0 0
      %1360 = vmatmul.mubr.bf16.gmra.mxu0 %v1222
      %v1361 = vpop.f32.mrf.mxu0
      %v1362 = vadd.f32 0.0, %v1361
      %v1363 = vpop.f32.mrf.mxu0
      %v1364 = vpop.f32.mrf.mxu0
      %v1365 = vadd.f32 0.0, %v1364
      %v1366 = vpop.f32.mrf.mxu0
      %1367 = vmatprep.mubr.bf16.mxu0 0
      %1368 = vmatmul.mubr.bf16.gmra.mxu0 %v1225
      %v1369 = vpop.f32.mrf.mxu0
      %v1370 = vadd.f32 0.0, %v1369
      %v1371 = vpop.f32.mrf.mxu0
      %v1372 = vpop.f32.mrf.mxu0
      %v1373 = vadd.f32 0.0, %v1372
      %v1374 = vpop.f32.mrf.mxu0
      %1375 = vmatprep.mubr.bf16.mxu0 0
      %1376 = vmatmul.mubr.bf16.gmra.mxu0 %v1228
      %v1377 = vpop.f32.mrf.mxu0
      %v1378 = vadd.f32 0.0, %v1377
      %v1379 = vpop.f32.mrf.mxu0
      %v1380 = vpop.f32.mrf.mxu0
      %v1381 = vadd.f32 0.0, %v1380
      %v1382 = vpop.f32.mrf.mxu0
      %1383 = vmatprep.mubr.bf16.mxu0 0
      %1384 = vmatmul.mubr.bf16.gmra.mxu0 %v1231
      %v1385 = vpop.f32.mrf.mxu0
      %v1386 = vadd.f32 0.0, %v1385
      %v1387 = vpop.f32.mrf.mxu0
      %v1388 = vpop.f32.mrf.mxu0
      %v1389 = vadd.f32 0.0, %v1388
      %v1390 = vpop.f32.mrf.mxu0
      %1391 = vmatprep.mubr.bf16.mxu0 0
      %1392 = vmatmul.mubr.bf16.gmra.mxu0 %v1234
      %v1393 = vpop.f32.mrf.mxu0
      %v1394 = vadd.f32 0.0, %v1393
      %v1395 = vpop.f32.mrf.mxu0
      %v1396 = vpop.f32.mrf.mxu0
      %v1397 = vadd.f32 0.0, %v1396
      %v1398 = vpop.f32.mrf.mxu0
      %1399 = vdwg.mxu0
      %v1400 = vadd.f32 %v1106, %v1274
      %v1401 = vadd.f32 %v1107, %v1277
      %v1402 = vadd.f32 %v1108, %v1282
      %v1403 = vadd.f32 %v1109, %v1285
      %v1404 = vadd.f32 %v1110, %v1290
      %v1405 = vadd.f32 %v1111, %v1293
      %v1406 = vadd.f32 %v1112, %v1298
      %v1407 = vadd.f32 %v1113, %v1301
      %v1408 = vadd.f32 %v1114, %v1306
      %v1409 = vadd.f32 %v1115, %v1309
      %v1410 = vadd.f32 %v1116, %v1314
      %v1411 = vadd.f32 %v1117, %v1317
      %v1412 = vadd.f32 %v1118, %v1322
      %v1413 = vadd.f32 %v1119, %v1325
      %v1414 = vadd.f32 %v1120, %v1330
      %v1415 = vadd.f32 %v1121, %v1333
      %v1416 = vadd.f32 %v1122, %v1338
      %v1417 = vadd.f32 %v1123, %v1341
      %v1418 = vadd.f32 %v1124, %v1346
      %v1419 = vadd.f32 %v1125, %v1349
      %v1420 = vadd.f32 %v1126, %v1354
      %v1421 = vadd.f32 %v1127, %v1357
      %v1422 = vadd.f32 %v1128, %v1362
      %v1423 = vadd.f32 %v1129, %v1365
      %v1424 = vadd.f32 %v1130, %v1370
      %v1425 = vadd.f32 %v1131, %v1373
      %v1426 = vadd.f32 %v1132, %v1378
      %v1427 = vadd.f32 %v1133, %v1381
      %v1428 = vadd.f32 %v1134, %v1386
      %v1429 = vadd.f32 %v1135, %v1389
      %v1430 = vadd.f32 %v1136, %v1394
      %v1431 = vadd.f32 %v1137, %v1397
      %v1432 = vld [vmem:[%s286 + $0x1] sm:$0xff]
      %v1433 = vld [vmem:[%s286 + $0x9] sm:$0xff]
      %v1434 = vld [vmem:[%s286 + $0x19] sm:$0xff]
      %v1435 = vld [vmem:[%s286 + $0x21] sm:$0xff]
      %v1436 = vld [vmem:[%s286 + $0x31] sm:$0xff]
      %v1437 = vld [vmem:[%s286 + $0x39] sm:$0xff]
      %v1438 = vld [vmem:[%s286 + $0x49] sm:$0xff]
      %v1439 = vld [vmem:[%s286 + $0x51] sm:$0xff]
      %v1440 = vld [vmem:[%s286 + $0x61] sm:$0xff]
      %v1441 = vld [vmem:[%s286 + $0x69] sm:$0xff]
      %v1442 = vld [vmem:[%s286 + $0x79] sm:$0xff]
      %v1443 = vld [vmem:[%s286 + $0x81] sm:$0xff]
      %v1444 = vld [vmem:[%s286 + $0x91] sm:$0xff]
      %v1445 = vld [vmem:[%s286 + $0x99] sm:$0xff]
      %v1446 = vld [vmem:[%s286 + $0xa9] sm:$0xff]
      %v1447 = vld [vmem:[%s286 + $0xb1] sm:$0xff]
      %v1448 = vld [vmem:[%s286 + $0xc1] sm:$0xff]
      %v1449 = vld [vmem:[%s286 + $0xc9] sm:$0xff]
      %v1450 = vld [vmem:[%s286 + $0xd9] sm:$0xff]
      %v1451 = vld [vmem:[%s286 + $0xe1] sm:$0xff]
      %v1452 = vld [vmem:[%s286 + $0xf1] sm:$0xff]
      %v1453 = vld [vmem:[%s286 + $0xf9] sm:$0xff]
      %v1454 = vld [vmem:[%s286 + $0x109] sm:$0xff]
      %v1455 = vld [vmem:[%s286 + $0x111] sm:$0xff]
      %v1456 = vld [vmem:[%s286 + $0x121] sm:$0xff]
      %v1457 = vld [vmem:[%s286 + $0x129] sm:$0xff]
      %v1458 = vld [vmem:[%s286 + $0x139] sm:$0xff]
      %v1459 = vld [vmem:[%s286 + $0x141] sm:$0xff]
      %v1460 = vld [vmem:[%s286 + $0x151] sm:$0xff]
      %v1461 = vld [vmem:[%s286 + $0x159] sm:$0xff]
      %v1462 = vld [vmem:[%s286 + $0x169] sm:$0xff]
      %v1463 = vld [vmem:[%s286 + $0x171] sm:$0xff]
      %v1464 = vpack.c.bf16 %v1433, %v1432
      %v1465 = vpack.c.bf16 %v1435, %v1434
      %v1466 = vpack.c.bf16 %v1437, %v1436
      %v1467 = vpack.c.bf16 %v1439, %v1438
      %v1468 = vpack.c.bf16 %v1441, %v1440
      %v1469 = vpack.c.bf16 %v1443, %v1442
      %v1470 = vpack.c.bf16 %v1445, %v1444
      %v1471 = vpack.c.bf16 %v1447, %v1446
      %v1472 = vpack.c.bf16 %v1449, %v1448
      %v1473 = vpack.c.bf16 %v1451, %v1450
      %v1474 = vpack.c.bf16 %v1453, %v1452
      %v1475 = vpack.c.bf16 %v1455, %v1454
      %v1476 = vpack.c.bf16 %v1457, %v1456
      %v1477 = vpack.c.bf16 %v1459, %v1458
      %v1478 = vpack.c.bf16 %v1461, %v1460
      %v1479 = vpack.c.bf16 %v1463, %v1462
      %s1480 = scalar_lea.vmem %s1, 8
      %v1481 = vld [vmem:[%s1480] sm:$0x3]
      %v1483 = vsel %vm287, %v1464, 0
      %v1486 = vsel %vm287, %v1465, 0
      %v1489 = vsel %vm287, %v1466, 0
      %v1492 = vsel %vm287, %v1467, 0
      %v1495 = vsel %vm287, %v1468, 0
      %v1498 = vsel %vm287, %v1469, 0
      %v1501 = vsel %vm287, %v1470, 0
      %v1504 = vsel %vm287, %v1471, 0
      %v1507 = vsel %vm287, %v1472, 0
      %v1510 = vsel %vm287, %v1473, 0
      %v1513 = vsel %vm287, %v1474, 0
      %v1516 = vsel %vm287, %v1475, 0
      %v1519 = vsel %vm287, %v1476, 0
      %v1522 = vsel %vm287, %v1477, 0
      %v1525 = vsel %vm287, %v1478, 0
      %v1528 = vsel %vm287, %v1479, 0
      %v1531 = vsel %vm467, %v1481, 0
      %1533 = vmatprep.subr.bf16.mxu0 0
      %1534 = vmatpush1.bf16.msra.mxu0 0
      %1535 = vmatprep.subr.bf16.mxu0 0
      %1536 = vmatpush1.bf16.msra.mxu0 0
      %1537 = vmatprep.subr.bf16.mxu0 0
      %1538 = vmatpush1.bf16.msra.mxu0 0
      %1539 = vmatprep.subr.bf16.mxu0 0
      %1540 = vmatpush1.bf16.msra.mxu0 0
      %1541 = vmatprep.subr.bf16.mxu0 0
      %1542 = vmatpush1.bf16.msra.mxu0 0
      %1543 = vmatprep.subr.bf16.mxu0 0
      %1544 = vmatpush1.bf16.msra.mxu0 0
      %1545 = vmatprep.subr.bf16.mxu0 0
      %1546 = vmatpush1.bf16.msra.mxu0 0
      %1547 = vmatprep.subr.bf16.mxu0 0
      %1548 = vmatpush1.bf16.msra.mxu0 %v1531
      %1549 = vmatprep.subr.bf16.mxu0 0
      %1550 = vmatpush2.bf16.msra.mxu0 0
      %1551 = vmatprep.subr.bf16.mxu0 0
      %1552 = vmatpush2.bf16.msra.mxu0 0
      %1553 = vmatprep.subr.bf16.mxu0 0
      %1554 = vmatpush2.bf16.msra.mxu0 0
      %1555 = vmatprep.subr.bf16.mxu0 0
      %1556 = vmatpush2.bf16.msra.mxu0 0
      %1557 = vmatprep.subr.bf16.mxu0 0
      %1558 = vmatpush2.bf16.msra.mxu0 0
      %1559 = vmatprep.subr.bf16.mxu0 0
      %1560 = vmatpush2.bf16.msra.mxu0 0
      %1561 = vmatprep.subr.bf16.mxu0 0
      %1562 = vmatpush2.bf16.msra.mxu0 0
      %1563 = vmatprep.subr.bf16.mxu0 0
      %1564 = vmatpush2.bf16.msra.mxu0 0
      %1565 = vmatprep.mubr.bf16.mxu0 0
      %1566 = vmatmul.mubr.bf16.gmra.mxu0 %v1483
      %v1567 = vpop.f32.mrf.mxu0
      %v1568 = vadd.f32 0.0, %v1567
      %v1569 = vpop.f32.mrf.mxu0
      %v1570 = vpop.f32.mrf.mxu0
      %v1571 = vadd.f32 0.0, %v1570
      %v1572 = vpop.f32.mrf.mxu0
      %1573 = vmatprep.mubr.bf16.mxu0 0
      %1574 = vmatmul.mubr.bf16.gmra.mxu0 %v1486
      %v1575 = vpop.f32.mrf.mxu0
      %v1576 = vadd.f32 0.0, %v1575
      %v1577 = vpop.f32.mrf.mxu0
      %v1578 = vpop.f32.mrf.mxu0
      %v1579 = vadd.f32 0.0, %v1578
      %v1580 = vpop.f32.mrf.mxu0
      %1581 = vmatprep.mubr.bf16.mxu0 0
      %1582 = vmatmul.mubr.bf16.gmra.mxu0 %v1489
      %v1583 = vpop.f32.mrf.mxu0
      %v1584 = vadd.f32 0.0, %v1583
      %v1585 = vpop.f32.mrf.mxu0
      %v1586 = vpop.f32.mrf.mxu0
      %v1587 = vadd.f32 0.0, %v1586
      %v1588 = vpop.f32.mrf.mxu0
      %1589 = vmatprep.mubr.bf16.mxu0 0
      %1590 = vmatmul.mubr.bf16.gmra.mxu0 %v1492
      %v1591 = vpop.f32.mrf.mxu0
      %v1592 = vadd.f32 0.0, %v1591
      %v1593 = vpop.f32.mrf.mxu0
      %v1594 = vpop.f32.mrf.mxu0
      %v1595 = vadd.f32 0.0, %v1594
      %v1596 = vpop.f32.mrf.mxu0
      %1597 = vmatprep.mubr.bf16.mxu0 0
      %1598 = vmatmul.mubr.bf16.gmra.mxu0 %v1495
      %v1599 = vpop.f32.mrf.mxu0
      %v1600 = vadd.f32 0.0, %v1599
      %v1601 = vpop.f32.mrf.mxu0
      %v1602 = vpop.f32.mrf.mxu0
      %v1603 = vadd.f32 0.0, %v1602
      %v1604 = vpop.f32.mrf.mxu0
      %1605 = vmatprep.mubr.bf16.mxu0 0
      %1606 = vmatmul.mubr.bf16.gmra.mxu0 %v1498
      %v1607 = vpop.f32.mrf.mxu0
      %v1608 = vadd.f32 0.0, %v1607
      %v1609 = vpop.f32.mrf.mxu0
      %v1610 = vpop.f32.mrf.mxu0
      %v1611 = vadd.f32 0.0, %v1610
      %v1612 = vpop.f32.mrf.mxu0
      %1613 = vmatprep.mubr.bf16.mxu0 0
      %1614 = vmatmul.mubr.bf16.gmra.mxu0 %v1501
      %v1615 = vpop.f32.mrf.mxu0
      %v1616 = vadd.f32 0.0, %v1615
      %v1617 = vpop.f32.mrf.mxu0
      %v1618 = vpop.f32.mrf.mxu0
      %v1619 = vadd.f32 0.0, %v1618
      %v1620 = vpop.f32.mrf.mxu0
      %1621 = vmatprep.mubr.bf16.mxu0 0
      %1622 = vmatmul.mubr.bf16.gmra.mxu0 %v1504
      %v1623 = vpop.f32.mrf.mxu0
      %v1624 = vadd.f32 0.0, %v1623
      %v1625 = vpop.f32.mrf.mxu0
      %v1626 = vpop.f32.mrf.mxu0
      %v1627 = vadd.f32 0.0, %v1626
      %v1628 = vpop.f32.mrf.mxu0
      %1629 = vmatprep.mubr.bf16.mxu0 0
      %1630 = vmatmul.mubr.bf16.gmra.mxu0 %v1507
      %v1631 = vpop.f32.mrf.mxu0
      %v1632 = vadd.f32 0.0, %v1631
      %v1633 = vpop.f32.mrf.mxu0
      %v1634 = vpop.f32.mrf.mxu0
      %v1635 = vadd.f32 0.0, %v1634
      %v1636 = vpop.f32.mrf.mxu0
      %1637 = vmatprep.mubr.bf16.mxu0 0
      %1638 = vmatmul.mubr.bf16.gmra.mxu0 %v1510
      %v1639 = vpop.f32.mrf.mxu0
      %v1640 = vadd.f32 0.0, %v1639
      %v1641 = vpop.f32.mrf.mxu0
      %v1642 = vpop.f32.mrf.mxu0
      %v1643 = vadd.f32 0.0, %v1642
      %v1644 = vpop.f32.mrf.mxu0
      %1645 = vmatprep.mubr.bf16.mxu0 0
      %1646 = vmatmul.mubr.bf16.gmra.mxu0 %v1513
      %v1647 = vpop.f32.mrf.mxu0
      %v1648 = vadd.f32 0.0, %v1647
      %v1649 = vpop.f32.mrf.mxu0
      %v1650 = vpop.f32.mrf.mxu0
      %v1651 = vadd.f32 0.0, %v1650
      %v1652 = vpop.f32.mrf.mxu0
      %1653 = vmatprep.mubr.bf16.mxu0 0
      %1654 = vmatmul.mubr.bf16.gmra.mxu0 %v1516
      %v1655 = vpop.f32.mrf.mxu0
      %v1656 = vadd.f32 0.0, %v1655
      %v1657 = vpop.f32.mrf.mxu0
      %v1658 = vpop.f32.mrf.mxu0
      %v1659 = vadd.f32 0.0, %v1658
      %v1660 = vpop.f32.mrf.mxu0
      %1661 = vmatprep.mubr.bf16.mxu0 0
      %1662 = vmatmul.mubr.bf16.gmra.mxu0 %v1519
      %v1663 = vpop.f32.mrf.mxu0
      %v1664 = vadd.f32 0.0, %v1663
      %v1665 = vpop.f32.mrf.mxu0
      %v1666 = vpop.f32.mrf.mxu0
      %v1667 = vadd.f32 0.0, %v1666
      %v1668 = vpop.f32.mrf.mxu0
      %1669 = vmatprep.mubr.bf16.mxu0 0
      %1670 = vmatmul.mubr.bf16.gmra.mxu0 %v1522
      %v1671 = vpop.f32.mrf.mxu0
      %v1672 = vadd.f32 0.0, %v1671
      %v1673 = vpop.f32.mrf.mxu0
      %v1674 = vpop.f32.mrf.mxu0
      %v1675 = vadd.f32 0.0, %v1674
      %v1676 = vpop.f32.mrf.mxu0
      %1677 = vmatprep.mubr.bf16.mxu0 0
      %1678 = vmatmul.mubr.bf16.gmra.mxu0 %v1525
      %v1679 = vpop.f32.mrf.mxu0
      %v1680 = vadd.f32 0.0, %v1679
      %v1681 = vpop.f32.mrf.mxu0
      %v1682 = vpop.f32.mrf.mxu0
      %v1683 = vadd.f32 0.0, %v1682
      %v1684 = vpop.f32.mrf.mxu0
      %1685 = vmatprep.mubr.bf16.mxu0 0
      %1686 = vmatmul.mubr.bf16.gmra.mxu0 %v1528
      %v1687 = vpop.f32.mrf.mxu0
      %v1688 = vadd.f32 0.0, %v1687
      %v1689 = vpop.f32.mrf.mxu0
      %v1690 = vpop.f32.mrf.mxu0
      %v1691 = vadd.f32 0.0, %v1690
      %v1692 = vpop.f32.mrf.mxu0
      %1693 = vdwg.mxu0
      %v1694 = vadd.f32 %v1400, %v1568
      %v1695 = vadd.f32 %v1401, %v1571
      %v1696 = vadd.f32 %v1402, %v1576
      %v1697 = vadd.f32 %v1403, %v1579
      %v1698 = vadd.f32 %v1404, %v1584
      %v1699 = vadd.f32 %v1405, %v1587
      %v1700 = vadd.f32 %v1406, %v1592
      %v1701 = vadd.f32 %v1407, %v1595
      %v1702 = vadd.f32 %v1408, %v1600
      %v1703 = vadd.f32 %v1409, %v1603
      %v1704 = vadd.f32 %v1410, %v1608
      %v1705 = vadd.f32 %v1411, %v1611
      %v1706 = vadd.f32 %v1412, %v1616
      %v1707 = vadd.f32 %v1413, %v1619
      %v1708 = vadd.f32 %v1414, %v1624
      %v1709 = vadd.f32 %v1415, %v1627
      %v1710 = vadd.f32 %v1416, %v1632
      %v1711 = vadd.f32 %v1417, %v1635
      %v1712 = vadd.f32 %v1418, %v1640
      %v1713 = vadd.f32 %v1419, %v1643
      %v1714 = vadd.f32 %v1420, %v1648
      %v1715 = vadd.f32 %v1421, %v1651
      %v1716 = vadd.f32 %v1422, %v1656
      %v1717 = vadd.f32 %v1423, %v1659
      %v1718 = vadd.f32 %v1424, %v1664
      %v1719 = vadd.f32 %v1425, %v1667
      %v1720 = vadd.f32 %v1426, %v1672
      %v1721 = vadd.f32 %v1427, %v1675
      %v1722 = vadd.f32 %v1428, %v1680
      %v1723 = vadd.f32 %v1429, %v1683
      %v1724 = vadd.f32 %v1430, %v1688
      %v1725 = vadd.f32 %v1431, %v1691
      %v1726 = vld [vmem:[%s286 + $0x2] sm:$0xff]
      %v1727 = vld [vmem:[%s286 + $0xa] sm:$0xff]
      %v1728 = vld [vmem:[%s286 + $0x1a] sm:$0xff]
      %v1729 = vld [vmem:[%s286 + $0x22] sm:$0xff]
      %v1730 = vld [vmem:[%s286 + $0x32] sm:$0xff]
      %v1731 = vld [vmem:[%s286 + $0x3a] sm:$0xff]
      %v1732 = vld [vmem:[%s286 + $0x4a] sm:$0xff]
      %v1733 = vld [vmem:[%s286 + $0x52] sm:$0xff]
      %v1734 = vld [vmem:[%s286 + $0x62] sm:$0xff]
      %v1735 = vld [vmem:[%s286 + $0x6a] sm:$0xff]
      %v1736 = vld [vmem:[%s286 + $0x7a] sm:$0xff]
      %v1737 = vld [vmem:[%s286 + $0x82] sm:$0xff]
      %v1738 = vld [vmem:[%s286 + $0x92] sm:$0xff]
      %v1739 = vld [vmem:[%s286 + $0x9a] sm:$0xff]
      %v1740 = vld [vmem:[%s286 + $0xaa] sm:$0xff]
      %v1741 = vld [vmem:[%s286 + $0xb2] sm:$0xff]
      %v1742 = vld [vmem:[%s286 + $0xc2] sm:$0xff]
      %v1743 = vld [vmem:[%s286 + $0xca] sm:$0xff]
      %v1744 = vld [vmem:[%s286 + $0xda] sm:$0xff]
      %v1745 = vld [vmem:[%s286 + $0xe2] sm:$0xff]
      %v1746 = vld [vmem:[%s286 + $0xf2] sm:$0xff]
      %v1747 = vld [vmem:[%s286 + $0xfa] sm:$0xff]
      %v1748 = vld [vmem:[%s286 + $0x10a] sm:$0xff]
      %v1749 = vld [vmem:[%s286 + $0x112] sm:$0xff]
      %v1750 = vld [vmem:[%s286 + $0x122] sm:$0xff]
      %v1751 = vld [vmem:[%s286 + $0x12a] sm:$0xff]
      %v1752 = vld [vmem:[%s286 + $0x13a] sm:$0xff]
      %v1753 = vld [vmem:[%s286 + $0x142] sm:$0xff]
      %v1754 = vld [vmem:[%s286 + $0x152] sm:$0xff]
      %v1755 = vld [vmem:[%s286 + $0x15a] sm:$0xff]
      %v1756 = vld [vmem:[%s286 + $0x16a] sm:$0xff]
      %v1757 = vld [vmem:[%s286 + $0x172] sm:$0xff]
      %v1758 = vpack.c.bf16 %v1727, %v1726
      %v1759 = vpack.c.bf16 %v1729, %v1728
      %v1760 = vpack.c.bf16 %v1731, %v1730
      %v1761 = vpack.c.bf16 %v1733, %v1732
      %v1762 = vpack.c.bf16 %v1735, %v1734
      %v1763 = vpack.c.bf16 %v1737, %v1736
      %v1764 = vpack.c.bf16 %v1739, %v1738
      %v1765 = vpack.c.bf16 %v1741, %v1740
      %v1766 = vpack.c.bf16 %v1743, %v1742
      %v1767 = vpack.c.bf16 %v1745, %v1744
      %v1768 = vpack.c.bf16 %v1747, %v1746
      %v1769 = vpack.c.bf16 %v1749, %v1748
      %v1770 = vpack.c.bf16 %v1751, %v1750
      %v1771 = vpack.c.bf16 %v1753, %v1752
      %v1772 = vpack.c.bf16 %v1755, %v1754
      %v1773 = vpack.c.bf16 %v1757, %v1756
      %s1774 = scalar_lea.vmem %s1, 10
      %v1775 = vld [vmem:[%s1774] sm:$0x3]
      %v1777 = vsel %vm287, %v1758, 0
      %v1780 = vsel %vm287, %v1759, 0
      %v1783 = vsel %vm287, %v1760, 0
      %v1786 = vsel %vm287, %v1761, 0
      %v1789 = vsel %vm287, %v1762, 0
      %v1792 = vsel %vm287, %v1763, 0
      %v1795 = vsel %vm287, %v1764, 0
      %v1798 = vsel %vm287, %v1765, 0
      %v1801 = vsel %vm287, %v1766, 0
      %v1804 = vsel %vm287, %v1767, 0
      %v1807 = vsel %vm287, %v1768, 0
      %v1810 = vsel %vm287, %v1769, 0
      %v1813 = vsel %vm287, %v1770, 0
      %v1816 = vsel %vm287, %v1771, 0
      %v1819 = vsel %vm287, %v1772, 0
      %v1822 = vsel %vm287, %v1773, 0
      %v1825 = vsel %vm467, %v1775, 0
      %1827 = vmatprep.subr.bf16.mxu0 0
      %1828 = vmatpush1.bf16.msra.mxu0 0
      %1829 = vmatprep.subr.bf16.mxu0 0
      %1830 = vmatpush1.bf16.msra.mxu0 0
      %1831 = vmatprep.subr.bf16.mxu0 0
      %1832 = vmatpush1.bf16.msra.mxu0 0
      %1833 = vmatprep.subr.bf16.mxu0 0
      %1834 = vmatpush1.bf16.msra.mxu0 0
      %1835 = vmatprep.subr.bf16.mxu0 0
      %1836 = vmatpush1.bf16.msra.mxu0 0
      %1837 = vmatprep.subr.bf16.mxu0 0
      %1838 = vmatpush1.bf16.msra.mxu0 0
      %1839 = vmatprep.subr.bf16.mxu0 0
      %1840 = vmatpush1.bf16.msra.mxu0 0
      %1841 = vmatprep.subr.bf16.mxu0 0
      %1842 = vmatpush1.bf16.msra.mxu0 %v1825
      %1843 = vmatprep.subr.bf16.mxu0 0
      %1844 = vmatpush2.bf16.msra.mxu0 0
      %1845 = vmatprep.subr.bf16.mxu0 0
      %1846 = vmatpush2.bf16.msra.mxu0 0
      %1847 = vmatprep.subr.bf16.mxu0 0
      %1848 = vmatpush2.bf16.msra.mxu0 0
      %1849 = vmatprep.subr.bf16.mxu0 0
      %1850 = vmatpush2.bf16.msra.mxu0 0
      %1851 = vmatprep.subr.bf16.mxu0 0
      %1852 = vmatpush2.bf16.msra.mxu0 0
      %1853 = vmatprep.subr.bf16.mxu0 0
      %1854 = vmatpush2.bf16.msra.mxu0 0
      %1855 = vmatprep.subr.bf16.mxu0 0
      %1856 = vmatpush2.bf16.msra.mxu0 0
      %1857 = vmatprep.subr.bf16.mxu0 0
      %1858 = vmatpush2.bf16.msra.mxu0 0
      %1859 = vmatprep.mubr.bf16.mxu0 0
      %1860 = vmatmul.mubr.bf16.gmra.mxu0 %v1777
      %v1861 = vpop.f32.mrf.mxu0
      %v1862 = vadd.f32 0.0, %v1861
      %v1863 = vpop.f32.mrf.mxu0
      %v1864 = vpop.f32.mrf.mxu0
      %v1865 = vadd.f32 0.0, %v1864
      %v1866 = vpop.f32.mrf.mxu0
      %1867 = vmatprep.mubr.bf16.mxu0 0
      %1868 = vmatmul.mubr.bf16.gmra.mxu0 %v1780
      %v1869 = vpop.f32.mrf.mxu0
      %v1870 = vadd.f32 0.0, %v1869
      %v1871 = vpop.f32.mrf.mxu0
      %v1872 = vpop.f32.mrf.mxu0
      %v1873 = vadd.f32 0.0, %v1872
      %v1874 = vpop.f32.mrf.mxu0
      %1875 = vmatprep.mubr.bf16.mxu0 0
      %1876 = vmatmul.mubr.bf16.gmra.mxu0 %v1783
      %v1877 = vpop.f32.mrf.mxu0
      %v1878 = vadd.f32 0.0, %v1877
      %v1879 = vpop.f32.mrf.mxu0
      %v1880 = vpop.f32.mrf.mxu0
      %v1881 = vadd.f32 0.0, %v1880
      %v1882 = vpop.f32.mrf.mxu0
      %1883 = vmatprep.mubr.bf16.mxu0 0
      %1884 = vmatmul.mubr.bf16.gmra.mxu0 %v1786
      %v1885 = vpop.f32.mrf.mxu0
      %v1886 = vadd.f32 0.0, %v1885
      %v1887 = vpop.f32.mrf.mxu0
      %v1888 = vpop.f32.mrf.mxu0
      %v1889 = vadd.f32 0.0, %v1888
      %v1890 = vpop.f32.mrf.mxu0
      %1891 = vmatprep.mubr.bf16.mxu0 0
      %1892 = vmatmul.mubr.bf16.gmra.mxu0 %v1789
      %v1893 = vpop.f32.mrf.mxu0
      %v1894 = vadd.f32 0.0, %v1893
      %v1895 = vpop.f32.mrf.mxu0
      %v1896 = vpop.f32.mrf.mxu0
      %v1897 = vadd.f32 0.0, %v1896
      %v1898 = vpop.f32.mrf.mxu0
      %1899 = vmatprep.mubr.bf16.mxu0 0
      %1900 = vmatmul.mubr.bf16.gmra.mxu0 %v1792
      %v1901 = vpop.f32.mrf.mxu0
      %v1902 = vadd.f32 0.0, %v1901
      %v1903 = vpop.f32.mrf.mxu0
      %v1904 = vpop.f32.mrf.mxu0
      %v1905 = vadd.f32 0.0, %v1904
      %v1906 = vpop.f32.mrf.mxu0
      %1907 = vmatprep.mubr.bf16.mxu0 0
      %1908 = vmatmul.mubr.bf16.gmra.mxu0 %v1795
      %v1909 = vpop.f32.mrf.mxu0
      %v1910 = vadd.f32 0.0, %v1909
      %v1911 = vpop.f32.mrf.mxu0
      %v1912 = vpop.f32.mrf.mxu0
      %v1913 = vadd.f32 0.0, %v1912
      %v1914 = vpop.f32.mrf.mxu0
      %1915 = vmatprep.mubr.bf16.mxu0 0
      %1916 = vmatmul.mubr.bf16.gmra.mxu0 %v1798
      %v1917 = vpop.f32.mrf.mxu0
      %v1918 = vadd.f32 0.0, %v1917
      %v1919 = vpop.f32.mrf.mxu0
      %v1920 = vpop.f32.mrf.mxu0
      %v1921 = vadd.f32 0.0, %v1920
      %v1922 = vpop.f32.mrf.mxu0
      %1923 = vmatprep.mubr.bf16.mxu0 0
      %1924 = vmatmul.mubr.bf16.gmra.mxu0 %v1801
      %v1925 = vpop.f32.mrf.mxu0
      %v1926 = vadd.f32 0.0, %v1925
      %v1927 = vpop.f32.mrf.mxu0
      %v1928 = vpop.f32.mrf.mxu0
      %v1929 = vadd.f32 0.0, %v1928
      %v1930 = vpop.f32.mrf.mxu0
      %1931 = vmatprep.mubr.bf16.mxu0 0
      %1932 = vmatmul.mubr.bf16.gmra.mxu0 %v1804
      %v1933 = vpop.f32.mrf.mxu0
      %v1934 = vadd.f32 0.0, %v1933
      %v1935 = vpop.f32.mrf.mxu0
      %v1936 = vpop.f32.mrf.mxu0
      %v1937 = vadd.f32 0.0, %v1936
      %v1938 = vpop.f32.mrf.mxu0
      %1939 = vmatprep.mubr.bf16.mxu0 0
      %1940 = vmatmul.mubr.bf16.gmra.mxu0 %v1807
      %v1941 = vpop.f32.mrf.mxu0
      %v1942 = vadd.f32 0.0, %v1941
      %v1943 = vpop.f32.mrf.mxu0
      %v1944 = vpop.f32.mrf.mxu0
      %v1945 = vadd.f32 0.0, %v1944
      %v1946 = vpop.f32.mrf.mxu0
      %1947 = vmatprep.mubr.bf16.mxu0 0
      %1948 = vmatmul.mubr.bf16.gmra.mxu0 %v1810
      %v1949 = vpop.f32.mrf.mxu0
      %v1950 = vadd.f32 0.0, %v1949
      %v1951 = vpop.f32.mrf.mxu0
      %v1952 = vpop.f32.mrf.mxu0
      %v1953 = vadd.f32 0.0, %v1952
      %v1954 = vpop.f32.mrf.mxu0
      %1955 = vmatprep.mubr.bf16.mxu0 0
      %1956 = vmatmul.mubr.bf16.gmra.mxu0 %v1813
      %v1957 = vpop.f32.mrf.mxu0
      %v1958 = vadd.f32 0.0, %v1957
      %v1959 = vpop.f32.mrf.mxu0
      %v1960 = vpop.f32.mrf.mxu0
      %v1961 = vadd.f32 0.0, %v1960
      %v1962 = vpop.f32.mrf.mxu0
      %1963 = vmatprep.mubr.bf16.mxu0 0
      %1964 = vmatmul.mubr.bf16.gmra.mxu0 %v1816
      %v1965 = vpop.f32.mrf.mxu0
      %v1966 = vadd.f32 0.0, %v1965
      %v1967 = vpop.f32.mrf.mxu0
      %v1968 = vpop.f32.mrf.mxu0
      %v1969 = vadd.f32 0.0, %v1968
      %v1970 = vpop.f32.mrf.mxu0
      %1971 = vmatprep.mubr.bf16.mxu0 0
      %1972 = vmatmul.mubr.bf16.gmra.mxu0 %v1819
      %v1973 = vpop.f32.mrf.mxu0
      %v1974 = vadd.f32 0.0, %v1973
      %v1975 = vpop.f32.mrf.mxu0
      %v1976 = vpop.f32.mrf.mxu0
      %v1977 = vadd.f32 0.0, %v1976
      %v1978 = vpop.f32.mrf.mxu0
      %1979 = vmatprep.mubr.bf16.mxu0 0
      %1980 = vmatmul.mubr.bf16.gmra.mxu0 %v1822
      %v1981 = vpop.f32.mrf.mxu0
      %v1982 = vadd.f32 0.0, %v1981
      %v1983 = vpop.f32.mrf.mxu0
      %v1984 = vpop.f32.mrf.mxu0
      %v1985 = vadd.f32 0.0, %v1984
      %v1986 = vpop.f32.mrf.mxu0
      %1987 = vdwg.mxu0
      %v1988 = vadd.f32 %v1694, %v1862
      %v1989 = vadd.f32 %v1695, %v1865
      %v1990 = vadd.f32 %v1696, %v1870
      %v1991 = vadd.f32 %v1697, %v1873
      %v1992 = vadd.f32 %v1698, %v1878
      %v1993 = vadd.f32 %v1699, %v1881
      %v1994 = vadd.f32 %v1700, %v1886
      %v1995 = vadd.f32 %v1701, %v1889
      %v1996 = vadd.f32 %v1702, %v1894
      %v1997 = vadd.f32 %v1703, %v1897
      %v1998 = vadd.f32 %v1704, %v1902
      %v1999 = vadd.f32 %v1705, %v1905
      %v2000 = vadd.f32 %v1706, %v1910
      %v2001 = vadd.f32 %v1707, %v1913
      %v2002 = vadd.f32 %v1708, %v1918
      %v2003 = vadd.f32 %v1709, %v1921
      %v2004 = vadd.f32 %v1710, %v1926
      %v2005 = vadd.f32 %v1711, %v1929
      %v2006 = vadd.f32 %v1712, %v1934
      %v2007 = vadd.f32 %v1713, %v1937
      %v2008 = vadd.f32 %v1714, %v1942
      %v2009 = vadd.f32 %v1715, %v1945
      %v2010 = vadd.f32 %v1716, %v1950
      %v2011 = vadd.f32 %v1717, %v1953
      %v2012 = vadd.f32 %v1718, %v1958
      %v2013 = vadd.f32 %v1719, %v1961
      %v2014 = vadd.f32 %v1720, %v1966
      %v2015 = vadd.f32 %v1721, %v1969
      %v2016 = vadd.f32 %v1722, %v1974
      %v2017 = vadd.f32 %v1723, %v1977
      %v2018 = vadd.f32 %v1724, %v1982
      %v2019 = vadd.f32 %v1725, %v1985
      %s2020 = scalar_lea.vmem [#allocation2], 48
      %v2021 = vld [vmem:[%s2020] sm:$0xff]
      %v2022 = vld [vmem:[%s2020 + $0x8] sm:$0xff]
      %v2023 = vld [vmem:[%s2020 + $0x18] sm:$0xff]
      %v2024 = vld [vmem:[%s2020 + $0x20] sm:$0xff]
      %v2025 = vld [vmem:[%s2020 + $0x30] sm:$0xff]
      %v2026 = vld [vmem:[%s2020 + $0x38] sm:$0xff]
      %v2027 = vld [vmem:[%s2020 + $0x48] sm:$0xff]
      %v2028 = vld [vmem:[%s2020 + $0x50] sm:$0xff]
      %v2029 = vld [vmem:[%s2020 + $0x60] sm:$0xff]
      %v2030 = vld [vmem:[%s2020 + $0x68] sm:$0xff]
      %v2031 = vld [vmem:[%s2020 + $0x78] sm:$0xff]
      %v2032 = vld [vmem:[%s2020 + $0x80] sm:$0xff]
      %v2033 = vld [vmem:[%s2020 + $0x90] sm:$0xff]
      %v2034 = vld [vmem:[%s2020 + $0x98] sm:$0xff]
      %v2035 = vld [vmem:[%s2020 + $0xa8] sm:$0xff]
      %v2036 = vld [vmem:[%s2020 + $0xb0] sm:$0xff]
      %v2037 = vld [vmem:[%s2020 + $0xc0] sm:$0xff]
      %v2038 = vld [vmem:[%s2020 + $0xc8] sm:$0xff]
      %v2039 = vld [vmem:[%s2020 + $0xd8] sm:$0xff]
      %v2040 = vld [vmem:[%s2020 + $0xe0] sm:$0xff]
      %v2041 = vld [vmem:[%s2020 + $0xf0] sm:$0xff]
      %v2042 = vld [vmem:[%s2020 + $0xf8] sm:$0xff]
      %v2043 = vld [vmem:[%s2020 + $0x108] sm:$0xff]
      %v2044 = vld [vmem:[%s2020 + $0x110] sm:$0xff]
      %v2045 = vld [vmem:[%s2020 + $0x120] sm:$0xff]
      %v2046 = vld [vmem:[%s2020 + $0x128] sm:$0xff]
      %v2047 = vld [vmem:[%s2020 + $0x138] sm:$0xff]
      %v2048 = vld [vmem:[%s2020 + $0x140] sm:$0xff]
      %v2049 = vld [vmem:[%s2020 + $0x150] sm:$0xff]
      %v2050 = vld [vmem:[%s2020 + $0x158] sm:$0xff]
      %v2051 = vld [vmem:[%s2020 + $0x168] sm:$0xff]
      %v2052 = vld [vmem:[%s2020 + $0x170] sm:$0xff]
      %v2053 = vpack.c.bf16 %v2022, %v2021
      %v2054 = vpack.c.bf16 %v2024, %v2023
      %v2055 = vpack.c.bf16 %v2026, %v2025
      %v2056 = vpack.c.bf16 %v2028, %v2027
      %v2057 = vpack.c.bf16 %v2030, %v2029
      %v2058 = vpack.c.bf16 %v2032, %v2031
      %v2059 = vpack.c.bf16 %v2034, %v2033
      %v2060 = vpack.c.bf16 %v2036, %v2035
      %v2061 = vpack.c.bf16 %v2038, %v2037
      %v2062 = vpack.c.bf16 %v2040, %v2039
      %v2063 = vpack.c.bf16 %v2042, %v2041
      %v2064 = vpack.c.bf16 %v2044, %v2043
      %v2065 = vpack.c.bf16 %v2046, %v2045
      %v2066 = vpack.c.bf16 %v2048, %v2047
      %v2067 = vpack.c.bf16 %v2050, %v2049
      %v2068 = vpack.c.bf16 %v2052, %v2051
      %s2069 = scalar_lea.vmem %s1, 12
      %v2070 = vld [vmem:[%s2069] sm:$0x3]
      %v2072 = vsel %vm287, %v2053, 0
      %v2075 = vsel %vm287, %v2054, 0
      %v2078 = vsel %vm287, %v2055, 0
      %v2081 = vsel %vm287, %v2056, 0
      %v2084 = vsel %vm287, %v2057, 0
      %v2087 = vsel %vm287, %v2058, 0
      %v2090 = vsel %vm287, %v2059, 0
      %v2093 = vsel %vm287, %v2060, 0
      %v2096 = vsel %vm287, %v2061, 0
      %v2099 = vsel %vm287, %v2062, 0
      %v2102 = vsel %vm287, %v2063, 0
      %v2105 = vsel %vm287, %v2064, 0
      %v2108 = vsel %vm287, %v2065, 0
      %v2111 = vsel %vm287, %v2066, 0
      %v2114 = vsel %vm287, %v2067, 0
      %v2117 = vsel %vm287, %v2068, 0
      %v2120 = vsel %vm467, %v2070, 0
      %2122 = vmatprep.subr.bf16.mxu0 0
      %2123 = vmatpush1.bf16.msra.mxu0 0
      %2124 = vmatprep.subr.bf16.mxu0 0
      %2125 = vmatpush1.bf16.msra.mxu0 0
      %2126 = vmatprep.subr.bf16.mxu0 0
      %2127 = vmatpush1.bf16.msra.mxu0 0
      %2128 = vmatprep.subr.bf16.mxu0 0
      %2129 = vmatpush1.bf16.msra.mxu0 0
      %2130 = vmatprep.subr.bf16.mxu0 0
      %2131 = vmatpush1.bf16.msra.mxu0 0
      %2132 = vmatprep.subr.bf16.mxu0 0
      %2133 = vmatpush1.bf16.msra.mxu0 0
      %2134 = vmatprep.subr.bf16.mxu0 0
      %2135 = vmatpush1.bf16.msra.mxu0 0
      %2136 = vmatprep.subr.bf16.mxu0 0
      %2137 = vmatpush1.bf16.msra.mxu0 %v2120
      %2138 = vmatprep.subr.bf16.mxu0 0
      %2139 = vmatpush2.bf16.msra.mxu0 0
      %2140 = vmatprep.subr.bf16.mxu0 0
      %2141 = vmatpush2.bf16.msra.mxu0 0
      %2142 = vmatprep.subr.bf16.mxu0 0
      %2143 = vmatpush2.bf16.msra.mxu0 0
      %2144 = vmatprep.subr.bf16.mxu0 0
      %2145 = vmatpush2.bf16.msra.mxu0 0
      %2146 = vmatprep.subr.bf16.mxu0 0
      %2147 = vmatpush2.bf16.msra.mxu0 0
      %2148 = vmatprep.subr.bf16.mxu0 0
      %2149 = vmatpush2.bf16.msra.mxu0 0
      %2150 = vmatprep.subr.bf16.mxu0 0
      %2151 = vmatpush2.bf16.msra.mxu0 0
      %2152 = vmatprep.subr.bf16.mxu0 0
      %2153 = vmatpush2.bf16.msra.mxu0 0
      %2154 = vmatprep.mubr.bf16.mxu0 0
      %2155 = vmatmul.mubr.bf16.gmra.mxu0 %v2072
      %v2156 = vpop.f32.mrf.mxu0
      %v2157 = vadd.f32 0.0, %v2156
      %v2158 = vpop.f32.mrf.mxu0
      %v2159 = vpop.f32.mrf.mxu0
      %v2160 = vadd.f32 0.0, %v2159
      %v2161 = vpop.f32.mrf.mxu0
      %2162 = vmatprep.mubr.bf16.mxu0 0
      %2163 = vmatmul.mubr.bf16.gmra.mxu0 %v2075
      %v2164 = vpop.f32.mrf.mxu0
      %v2165 = vadd.f32 0.0, %v2164
      %v2166 = vpop.f32.mrf.mxu0
      %v2167 = vpop.f32.mrf.mxu0
      %v2168 = vadd.f32 0.0, %v2167
      %v2169 = vpop.f32.mrf.mxu0
      %2170 = vmatprep.mubr.bf16.mxu0 0
      %2171 = vmatmul.mubr.bf16.gmra.mxu0 %v2078
      %v2172 = vpop.f32.mrf.mxu0
      %v2173 = vadd.f32 0.0, %v2172
      %v2174 = vpop.f32.mrf.mxu0
      %v2175 = vpop.f32.mrf.mxu0
      %v2176 = vadd.f32 0.0, %v2175
      %v2177 = vpop.f32.mrf.mxu0
      %2178 = vmatprep.mubr.bf16.mxu0 0
      %2179 = vmatmul.mubr.bf16.gmra.mxu0 %v2081
      %v2180 = vpop.f32.mrf.mxu0
      %v2181 = vadd.f32 0.0, %v2180
      %v2182 = vpop.f32.mrf.mxu0
      %v2183 = vpop.f32.mrf.mxu0
      %v2184 = vadd.f32 0.0, %v2183
      %v2185 = vpop.f32.mrf.mxu0
      %2186 = vmatprep.mubr.bf16.mxu0 0
      %2187 = vmatmul.mubr.bf16.gmra.mxu0 %v2084
      %v2188 = vpop.f32.mrf.mxu0
      %v2189 = vadd.f32 0.0, %v2188
      %v2190 = vpop.f32.mrf.mxu0
      %v2191 = vpop.f32.mrf.mxu0
      %v2192 = vadd.f32 0.0, %v2191
      %v2193 = vpop.f32.mrf.mxu0
      %2194 = vmatprep.mubr.bf16.mxu0 0
      %2195 = vmatmul.mubr.bf16.gmra.mxu0 %v2087
      %v2196 = vpop.f32.mrf.mxu0
      %v2197 = vadd.f32 0.0, %v2196
      %v2198 = vpop.f32.mrf.mxu0
      %v2199 = vpop.f32.mrf.mxu0
      %v2200 = vadd.f32 0.0, %v2199
      %v2201 = vpop.f32.mrf.mxu0
      %2202 = vmatprep.mubr.bf16.mxu0 0
      %2203 = vmatmul.mubr.bf16.gmra.mxu0 %v2090
      %v2204 = vpop.f32.mrf.mxu0
      %v2205 = vadd.f32 0.0, %v2204
      %v2206 = vpop.f32.mrf.mxu0
      %v2207 = vpop.f32.mrf.mxu0
      %v2208 = vadd.f32 0.0, %v2207
      %v2209 = vpop.f32.mrf.mxu0
      %2210 = vmatprep.mubr.bf16.mxu0 0
      %2211 = vmatmul.mubr.bf16.gmra.mxu0 %v2093
      %v2212 = vpop.f32.mrf.mxu0
      %v2213 = vadd.f32 0.0, %v2212
      %v2214 = vpop.f32.mrf.mxu0
      %v2215 = vpop.f32.mrf.mxu0
      %v2216 = vadd.f32 0.0, %v2215
      %v2217 = vpop.f32.mrf.mxu0
      %2218 = vmatprep.mubr.bf16.mxu0 0
      %2219 = vmatmul.mubr.bf16.gmra.mxu0 %v2096
      %v2220 = vpop.f32.mrf.mxu0
      %v2221 = vadd.f32 0.0, %v2220
      %v2222 = vpop.f32.mrf.mxu0
      %v2223 = vpop.f32.mrf.mxu0
      %v2224 = vadd.f32 0.0, %v2223
      %v2225 = vpop.f32.mrf.mxu0
      %2226 = vmatprep.mubr.bf16.mxu0 0
      %2227 = vmatmul.mubr.bf16.gmra.mxu0 %v2099
      %v2228 = vpop.f32.mrf.mxu0
      %v2229 = vadd.f32 0.0, %v2228
      %v2230 = vpop.f32.mrf.mxu0
      %v2231 = vpop.f32.mrf.mxu0
      %v2232 = vadd.f32 0.0, %v2231
      %v2233 = vpop.f32.mrf.mxu0
      %2234 = vmatprep.mubr.bf16.mxu0 0
      %2235 = vmatmul.mubr.bf16.gmra.mxu0 %v2102
      %v2236 = vpop.f32.mrf.mxu0
      %v2237 = vadd.f32 0.0, %v2236
      %v2238 = vpop.f32.mrf.mxu0
      %v2239 = vpop.f32.mrf.mxu0
      %v2240 = vadd.f32 0.0, %v2239
      %v2241 = vpop.f32.mrf.mxu0
      %2242 = vmatprep.mubr.bf16.mxu0 0
      %2243 = vmatmul.mubr.bf16.gmra.mxu0 %v2105
      %v2244 = vpop.f32.mrf.mxu0
      %v2245 = vadd.f32 0.0, %v2244
      %v2246 = vpop.f32.mrf.mxu0
      %v2247 = vpop.f32.mrf.mxu0
      %v2248 = vadd.f32 0.0, %v2247
      %v2249 = vpop.f32.mrf.mxu0
      %2250 = vmatprep.mubr.bf16.mxu0 0
      %2251 = vmatmul.mubr.bf16.gmra.mxu0 %v2108
      %v2252 = vpop.f32.mrf.mxu0
      %v2253 = vadd.f32 0.0, %v2252
      %v2254 = vpop.f32.mrf.mxu0
      %v2255 = vpop.f32.mrf.mxu0
      %v2256 = vadd.f32 0.0, %v2255
      %v2257 = vpop.f32.mrf.mxu0
      %2258 = vmatprep.mubr.bf16.mxu0 0
      %2259 = vmatmul.mubr.bf16.gmra.mxu0 %v2111
      %v2260 = vpop.f32.mrf.mxu0
      %v2261 = vadd.f32 0.0, %v2260
      %v2262 = vpop.f32.mrf.mxu0
      %v2263 = vpop.f32.mrf.mxu0
      %v2264 = vadd.f32 0.0, %v2263
      %v2265 = vpop.f32.mrf.mxu0
      %2266 = vmatprep.mubr.bf16.mxu0 0
      %2267 = vmatmul.mubr.bf16.gmra.mxu0 %v2114
      %v2268 = vpop.f32.mrf.mxu0
      %v2269 = vadd.f32 0.0, %v2268
      %v2270 = vpop.f32.mrf.mxu0
      %v2271 = vpop.f32.mrf.mxu0
      %v2272 = vadd.f32 0.0, %v2271
      %v2273 = vpop.f32.mrf.mxu0
      %2274 = vmatprep.mubr.bf16.mxu0 0
      %2275 = vmatmul.mubr.bf16.gmra.mxu0 %v2117
      %v2276 = vpop.f32.mrf.mxu0
      %v2277 = vadd.f32 0.0, %v2276
      %v2278 = vpop.f32.mrf.mxu0
      %v2279 = vpop.f32.mrf.mxu0
      %v2280 = vadd.f32 0.0, %v2279
      %v2281 = vpop.f32.mrf.mxu0
      %2282 = vdwg.mxu0
      %v2283 = vadd.f32 %v1988, %v2157
      %v2284 = vadd.f32 %v1989, %v2160
      %v2285 = vadd.f32 %v1990, %v2165
      %v2286 = vadd.f32 %v1991, %v2168
      %v2287 = vadd.f32 %v1992, %v2173
      %v2288 = vadd.f32 %v1993, %v2176
      %v2289 = vadd.f32 %v1994, %v2181
      %v2290 = vadd.f32 %v1995, %v2184
      %v2291 = vadd.f32 %v1996, %v2189
      %v2292 = vadd.f32 %v1997, %v2192
      %v2293 = vadd.f32 %v1998, %v2197
      %v2294 = vadd.f32 %v1999, %v2200
      %v2295 = vadd.f32 %v2000, %v2205
      %v2296 = vadd.f32 %v2001, %v2208
      %v2297 = vadd.f32 %v2002, %v2213
      %v2298 = vadd.f32 %v2003, %v2216
      %v2299 = vadd.f32 %v2004, %v2221
      %v2300 = vadd.f32 %v2005, %v2224
      %v2301 = vadd.f32 %v2006, %v2229
      %v2302 = vadd.f32 %v2007, %v2232
      %v2303 = vadd.f32 %v2008, %v2237
      %v2304 = vadd.f32 %v2009, %v2240
      %v2305 = vadd.f32 %v2010, %v2245
      %v2306 = vadd.f32 %v2011, %v2248
      %v2307 = vadd.f32 %v2012, %v2253
      %v2308 = vadd.f32 %v2013, %v2256
      %v2309 = vadd.f32 %v2014, %v2261
      %v2310 = vadd.f32 %v2015, %v2264
      %v2311 = vadd.f32 %v2016, %v2269
      %v2312 = vadd.f32 %v2017, %v2272
      %v2313 = vadd.f32 %v2018, %v2277
      %v2314 = vadd.f32 %v2019, %v2280
      %v2315 = vld [vmem:[%s2020 + $0x1] sm:$0xff]
      %v2316 = vld [vmem:[%s2020 + $0x9] sm:$0xff]
      %v2317 = vld [vmem:[%s2020 + $0x19] sm:$0xff]
      %v2318 = vld [vmem:[%s2020 + $0x21] sm:$0xff]
      %v2319 = vld [vmem:[%s2020 + $0x31] sm:$0xff]
      %v2320 = vld [vmem:[%s2020 + $0x39] sm:$0xff]
      %v2321 = vld [vmem:[%s2020 + $0x49] sm:$0xff]
      %v2322 = vld [vmem:[%s2020 + $0x51] sm:$0xff]
      %v2323 = vld [vmem:[%s2020 + $0x61] sm:$0xff]
      %v2324 = vld [vmem:[%s2020 + $0x69] sm:$0xff]
      %v2325 = vld [vmem:[%s2020 + $0x79] sm:$0xff]
      %v2326 = vld [vmem:[%s2020 + $0x81] sm:$0xff]
      %v2327 = vld [vmem:[%s2020 + $0x91] sm:$0xff]
      %v2328 = vld [vmem:[%s2020 + $0x99] sm:$0xff]
      %v2329 = vld [vmem:[%s2020 + $0xa9] sm:$0xff]
      %v2330 = vld [vmem:[%s2020 + $0xb1] sm:$0xff]
      %v2331 = vld [vmem:[%s2020 + $0xc1] sm:$0xff]
      %v2332 = vld [vmem:[%s2020 + $0xc9] sm:$0xff]
      %v2333 = vld [vmem:[%s2020 + $0xd9] sm:$0xff]
      %v2334 = vld [vmem:[%s2020 + $0xe1] sm:$0xff]
      %v2335 = vld [vmem:[%s2020 + $0xf1] sm:$0xff]
      %v2336 = vld [vmem:[%s2020 + $0xf9] sm:$0xff]
      %v2337 = vld [vmem:[%s2020 + $0x109] sm:$0xff]
      %v2338 = vld [vmem:[%s2020 + $0x111] sm:$0xff]
      %v2339 = vld [vmem:[%s2020 + $0x121] sm:$0xff]
      %v2340 = vld [vmem:[%s2020 + $0x129] sm:$0xff]
      %v2341 = vld [vmem:[%s2020 + $0x139] sm:$0xff]
      %v2342 = vld [vmem:[%s2020 + $0x141] sm:$0xff]
      %v2343 = vld [vmem:[%s2020 + $0x151] sm:$0xff]
      %v2344 = vld [vmem:[%s2020 + $0x159] sm:$0xff]
      %v2345 = vld [vmem:[%s2020 + $0x169] sm:$0xff]
      %v2346 = vld [vmem:[%s2020 + $0x171] sm:$0xff]
      %v2347 = vpack.c.bf16 %v2316, %v2315
      %v2348 = vpack.c.bf16 %v2318, %v2317
      %v2349 = vpack.c.bf16 %v2320, %v2319
      %v2350 = vpack.c.bf16 %v2322, %v2321
      %v2351 = vpack.c.bf16 %v2324, %v2323
      %v2352 = vpack.c.bf16 %v2326, %v2325
      %v2353 = vpack.c.bf16 %v2328, %v2327
      %v2354 = vpack.c.bf16 %v2330, %v2329
      %v2355 = vpack.c.bf16 %v2332, %v2331
      %v2356 = vpack.c.bf16 %v2334, %v2333
      %v2357 = vpack.c.bf16 %v2336, %v2335
      %v2358 = vpack.c.bf16 %v2338, %v2337
      %v2359 = vpack.c.bf16 %v2340, %v2339
      %v2360 = vpack.c.bf16 %v2342, %v2341
      %v2361 = vpack.c.bf16 %v2344, %v2343
      %v2362 = vpack.c.bf16 %v2346, %v2345
      %s2363 = scalar_lea.vmem %s1, 14
      %v2364 = vld [vmem:[%s2363] sm:$0x3]
      %v2366 = vsel %vm287, %v2347, 0
      %v2369 = vsel %vm287, %v2348, 0
      %v2372 = vsel %vm287, %v2349, 0
      %v2375 = vsel %vm287, %v2350, 0
      %v2378 = vsel %vm287, %v2351, 0
      %v2381 = vsel %vm287, %v2352, 0
      %v2384 = vsel %vm287, %v2353, 0
      %v2387 = vsel %vm287, %v2354, 0
      %v2390 = vsel %vm287, %v2355, 0
      %v2393 = vsel %vm287, %v2356, 0
      %v2396 = vsel %vm287, %v2357, 0
      %v2399 = vsel %vm287, %v2358, 0
      %v2402 = vsel %vm287, %v2359, 0
      %v2405 = vsel %vm287, %v2360, 0
      %v2408 = vsel %vm287, %v2361, 0
      %v2411 = vsel %vm287, %v2362, 0
      %v2414 = vsel %vm467, %v2364, 0
      %2416 = vmatprep.subr.bf16.mxu0 0
      %2417 = vmatpush1.bf16.msra.mxu0 0
      %2418 = vmatprep.subr.bf16.mxu0 0
      %2419 = vmatpush1.bf16.msra.mxu0 0
      %2420 = vmatprep.subr.bf16.mxu0 0
      %2421 = vmatpush1.bf16.msra.mxu0 0
      %2422 = vmatprep.subr.bf16.mxu0 0
      %2423 = vmatpush1.bf16.msra.mxu0 0
      %2424 = vmatprep.subr.bf16.mxu0 0
      %2425 = vmatpush1.bf16.msra.mxu0 0
      %2426 = vmatprep.subr.bf16.mxu0 0
      %2427 = vmatpush1.bf16.msra.mxu0 0
      %2428 = vmatprep.subr.bf16.mxu0 0
      %2429 = vmatpush1.bf16.msra.mxu0 0
      %2430 = vmatprep.subr.bf16.mxu0 0
      %2431 = vmatpush1.bf16.msra.mxu0 %v2414
      %2432 = vmatprep.subr.bf16.mxu0 0
      %2433 = vmatpush2.bf16.msra.mxu0 0
      %2434 = vmatprep.subr.bf16.mxu0 0
      %2435 = vmatpush2.bf16.msra.mxu0 0
      %2436 = vmatprep.subr.bf16.mxu0 0
      %2437 = vmatpush2.bf16.msra.mxu0 0
      %2438 = vmatprep.subr.bf16.mxu0 0
      %2439 = vmatpush2.bf16.msra.mxu0 0
      %2440 = vmatprep.subr.bf16.mxu0 0
      %2441 = vmatpush2.bf16.msra.mxu0 0
      %2442 = vmatprep.subr.bf16.mxu0 0
      %2443 = vmatpush2.bf16.msra.mxu0 0
      %2444 = vmatprep.subr.bf16.mxu0 0
      %2445 = vmatpush2.bf16.msra.mxu0 0
      %2446 = vmatprep.subr.bf16.mxu0 0
      %2447 = vmatpush2.bf16.msra.mxu0 0
      %2448 = vmatprep.mubr.bf16.mxu0 0
      %2449 = vmatmul.mubr.bf16.gmra.mxu0 %v2366
      %v2450 = vpop.f32.mrf.mxu0
      %v2451 = vadd.f32 0.0, %v2450
      %v2452 = vpop.f32.mrf.mxu0
      %v2453 = vpop.f32.mrf.mxu0
      %v2454 = vadd.f32 0.0, %v2453
      %v2455 = vpop.f32.mrf.mxu0
      %2456 = vmatprep.mubr.bf16.mxu0 0
      %2457 = vmatmul.mubr.bf16.gmra.mxu0 %v2369
      %v2458 = vpop.f32.mrf.mxu0
      %v2459 = vadd.f32 0.0, %v2458
      %v2460 = vpop.f32.mrf.mxu0
      %v2461 = vpop.f32.mrf.mxu0
      %v2462 = vadd.f32 0.0, %v2461
      %v2463 = vpop.f32.mrf.mxu0
      %2464 = vmatprep.mubr.bf16.mxu0 0
      %2465 = vmatmul.mubr.bf16.gmra.mxu0 %v2372
      %v2466 = vpop.f32.mrf.mxu0
      %v2467 = vadd.f32 0.0, %v2466
      %v2468 = vpop.f32.mrf.mxu0
      %v2469 = vpop.f32.mrf.mxu0
      %v2470 = vadd.f32 0.0, %v2469
      %v2471 = vpop.f32.mrf.mxu0
      %2472 = vmatprep.mubr.bf16.mxu0 0
      %2473 = vmatmul.mubr.bf16.gmra.mxu0 %v2375
      %v2474 = vpop.f32.mrf.mxu0
      %v2475 = vadd.f32 0.0, %v2474
      %v2476 = vpop.f32.mrf.mxu0
      %v2477 = vpop.f32.mrf.mxu0
      %v2478 = vadd.f32 0.0, %v2477
      %v2479 = vpop.f32.mrf.mxu0
      %2480 = vmatprep.mubr.bf16.mxu0 0
      %2481 = vmatmul.mubr.bf16.gmra.mxu0 %v2378
      %v2482 = vpop.f32.mrf.mxu0
      %v2483 = vadd.f32 0.0, %v2482
      %v2484 = vpop.f32.mrf.mxu0
      %v2485 = vpop.f32.mrf.mxu0
      %v2486 = vadd.f32 0.0, %v2485
      %v2487 = vpop.f32.mrf.mxu0
      %2488 = vmatprep.mubr.bf16.mxu0 0
      %2489 = vmatmul.mubr.bf16.gmra.mxu0 %v2381
      %v2490 = vpop.f32.mrf.mxu0
      %v2491 = vadd.f32 0.0, %v2490
      %v2492 = vpop.f32.mrf.mxu0
      %v2493 = vpop.f32.mrf.mxu0
      %v2494 = vadd.f32 0.0, %v2493
      %v2495 = vpop.f32.mrf.mxu0
      %2496 = vmatprep.mubr.bf16.mxu0 0
      %2497 = vmatmul.mubr.bf16.gmra.mxu0 %v2384
      %v2498 = vpop.f32.mrf.mxu0
      %v2499 = vadd.f32 0.0, %v2498
      %v2500 = vpop.f32.mrf.mxu0
      %v2501 = vpop.f32.mrf.mxu0
      %v2502 = vadd.f32 0.0, %v2501
      %v2503 = vpop.f32.mrf.mxu0
      %2504 = vmatprep.mubr.bf16.mxu0 0
      %2505 = vmatmul.mubr.bf16.gmra.mxu0 %v2387
      %v2506 = vpop.f32.mrf.mxu0
      %v2507 = vadd.f32 0.0, %v2506
      %v2508 = vpop.f32.mrf.mxu0
      %v2509 = vpop.f32.mrf.mxu0
      %v2510 = vadd.f32 0.0, %v2509
      %v2511 = vpop.f32.mrf.mxu0
      %2512 = vmatprep.mubr.bf16.mxu0 0
      %2513 = vmatmul.mubr.bf16.gmra.mxu0 %v2390
      %v2514 = vpop.f32.mrf.mxu0
      %v2515 = vadd.f32 0.0, %v2514
      %v2516 = vpop.f32.mrf.mxu0
      %v2517 = vpop.f32.mrf.mxu0
      %v2518 = vadd.f32 0.0, %v2517
      %v2519 = vpop.f32.mrf.mxu0
      %2520 = vmatprep.mubr.bf16.mxu0 0
      %2521 = vmatmul.mubr.bf16.gmra.mxu0 %v2393
      %v2522 = vpop.f32.mrf.mxu0
      %v2523 = vadd.f32 0.0, %v2522
      %v2524 = vpop.f32.mrf.mxu0
      %v2525 = vpop.f32.mrf.mxu0
      %v2526 = vadd.f32 0.0, %v2525
      %v2527 = vpop.f32.mrf.mxu0
      %2528 = vmatprep.mubr.bf16.mxu0 0
      %2529 = vmatmul.mubr.bf16.gmra.mxu0 %v2396
      %v2530 = vpop.f32.mrf.mxu0
      %v2531 = vadd.f32 0.0, %v2530
      %v2532 = vpop.f32.mrf.mxu0
      %v2533 = vpop.f32.mrf.mxu0
      %v2534 = vadd.f32 0.0, %v2533
      %v2535 = vpop.f32.mrf.mxu0
      %2536 = vmatprep.mubr.bf16.mxu0 0
      %2537 = vmatmul.mubr.bf16.gmra.mxu0 %v2399
      %v2538 = vpop.f32.mrf.mxu0
      %v2539 = vadd.f32 0.0, %v2538
      %v2540 = vpop.f32.mrf.mxu0
      %v2541 = vpop.f32.mrf.mxu0
      %v2542 = vadd.f32 0.0, %v2541
      %v2543 = vpop.f32.mrf.mxu0
      %2544 = vmatprep.mubr.bf16.mxu0 0
      %2545 = vmatmul.mubr.bf16.gmra.mxu0 %v2402
      %v2546 = vpop.f32.mrf.mxu0
      %v2547 = vadd.f32 0.0, %v2546
      %v2548 = vpop.f32.mrf.mxu0
      %v2549 = vpop.f32.mrf.mxu0
      %v2550 = vadd.f32 0.0, %v2549
      %v2551 = vpop.f32.mrf.mxu0
      %2552 = vmatprep.mubr.bf16.mxu0 0
      %2553 = vmatmul.mubr.bf16.gmra.mxu0 %v2405
      %v2554 = vpop.f32.mrf.mxu0
      %v2555 = vadd.f32 0.0, %v2554
      %v2556 = vpop.f32.mrf.mxu0
      %v2557 = vpop.f32.mrf.mxu0
      %v2558 = vadd.f32 0.0, %v2557
      %v2559 = vpop.f32.mrf.mxu0
      %2560 = vmatprep.mubr.bf16.mxu0 0
      %2561 = vmatmul.mubr.bf16.gmra.mxu0 %v2408
      %v2562 = vpop.f32.mrf.mxu0
      %v2563 = vadd.f32 0.0, %v2562
      %v2564 = vpop.f32.mrf.mxu0
      %v2565 = vpop.f32.mrf.mxu0
      %v2566 = vadd.f32 0.0, %v2565
      %v2567 = vpop.f32.mrf.mxu0
      %2568 = vmatprep.mubr.bf16.mxu0 0
      %2569 = vmatmul.mubr.bf16.gmra.mxu0 %v2411
      %v2570 = vpop.f32.mrf.mxu0
      %v2571 = vadd.f32 0.0, %v2570
      %v2572 = vpop.f32.mrf.mxu0
      %v2573 = vpop.f32.mrf.mxu0
      %v2574 = vadd.f32 0.0, %v2573
      %v2575 = vpop.f32.mrf.mxu0
      %2576 = vdwg.mxu0
      %v2577 = vadd.f32 %v2283, %v2451
      %v2578 = vadd.f32 %v2284, %v2454
      %v2579 = vadd.f32 %v2285, %v2459
      %v2580 = vadd.f32 %v2286, %v2462
      %v2581 = vadd.f32 %v2287, %v2467
      %v2582 = vadd.f32 %v2288, %v2470
      %v2583 = vadd.f32 %v2289, %v2475
      %v2584 = vadd.f32 %v2290, %v2478
      %v2585 = vadd.f32 %v2291, %v2483
      %v2586 = vadd.f32 %v2292, %v2486
      %v2587 = vadd.f32 %v2293, %v2491
      %v2588 = vadd.f32 %v2294, %v2494
      %v2589 = vadd.f32 %v2295, %v2499
      %v2590 = vadd.f32 %v2296, %v2502
      %v2591 = vadd.f32 %v2297, %v2507
      %v2592 = vadd.f32 %v2298, %v2510
      %v2593 = vadd.f32 %v2299, %v2515
      %v2594 = vadd.f32 %v2300, %v2518
      %v2595 = vadd.f32 %v2301, %v2523
      %v2596 = vadd.f32 %v2302, %v2526
      %v2597 = vadd.f32 %v2303, %v2531
      %v2598 = vadd.f32 %v2304, %v2534
      %v2599 = vadd.f32 %v2305, %v2539
      %v2600 = vadd.f32 %v2306, %v2542
      %v2601 = vadd.f32 %v2307, %v2547
      %v2602 = vadd.f32 %v2308, %v2550
      %v2603 = vadd.f32 %v2309, %v2555
      %v2604 = vadd.f32 %v2310, %v2558
      %v2605 = vadd.f32 %v2311, %v2563
      %v2606 = vadd.f32 %v2312, %v2566
      %v2607 = vadd.f32 %v2313, %v2571
      %v2608 = vadd.f32 %v2314, %v2574
      %v2609 = vld [vmem:[%s2020 + $0x2] sm:$0xff]
      %v2610 = vld [vmem:[%s2020 + $0xa] sm:$0xff]
      %v2611 = vld [vmem:[%s2020 + $0x1a] sm:$0xff]
      %v2612 = vld [vmem:[%s2020 + $0x22] sm:$0xff]
      %v2613 = vld [vmem:[%s2020 + $0x32] sm:$0xff]
      %v2614 = vld [vmem:[%s2020 + $0x3a] sm:$0xff]
      %v2615 = vld [vmem:[%s2020 + $0x4a] sm:$0xff]
      %v2616 = vld [vmem:[%s2020 + $0x52] sm:$0xff]
      %v2617 = vld [vmem:[%s2020 + $0x62] sm:$0xff]
      %v2618 = vld [vmem:[%s2020 + $0x6a] sm:$0xff]
      %v2619 = vld [vmem:[%s2020 + $0x7a] sm:$0xff]
      %v2620 = vld [vmem:[%s2020 + $0x82] sm:$0xff]
      %v2621 = vld [vmem:[%s2020 + $0x92] sm:$0xff]
      %v2622 = vld [vmem:[%s2020 + $0x9a] sm:$0xff]
      %v2623 = vld [vmem:[%s2020 + $0xaa] sm:$0xff]
      %v2624 = vld [vmem:[%s2020 + $0xb2] sm:$0xff]
      %v2625 = vld [vmem:[%s2020 + $0xc2] sm:$0xff]
      %v2626 = vld [vmem:[%s2020 + $0xca] sm:$0xff]
      %v2627 = vld [vmem:[%s2020 + $0xda] sm:$0xff]
      %v2628 = vld [vmem:[%s2020 + $0xe2] sm:$0xff]
      %v2629 = vld [vmem:[%s2020 + $0xf2] sm:$0xff]
      %v2630 = vld [vmem:[%s2020 + $0xfa] sm:$0xff]
      %v2631 = vld [vmem:[%s2020 + $0x10a] sm:$0xff]
      %v2632 = vld [vmem:[%s2020 + $0x112] sm:$0xff]
      %v2633 = vld [vmem:[%s2020 + $0x122] sm:$0xff]
      %v2634 = vld [vmem:[%s2020 + $0x12a] sm:$0xff]
      %v2635 = vld [vmem:[%s2020 + $0x13a] sm:$0xff]
      %v2636 = vld [vmem:[%s2020 + $0x142] sm:$0xff]
      %v2637 = vld [vmem:[%s2020 + $0x152] sm:$0xff]
      %v2638 = vld [vmem:[%s2020 + $0x15a] sm:$0xff]
      %v2639 = vld [vmem:[%s2020 + $0x16a] sm:$0xff]
      %v2640 = vld [vmem:[%s2020 + $0x172] sm:$0xff]
      %v2641 = vpack.c.bf16 %v2610, %v2609
      %v2642 = vpack.c.bf16 %v2612, %v2611
      %v2643 = vpack.c.bf16 %v2614, %v2613
      %v2644 = vpack.c.bf16 %v2616, %v2615
      %v2645 = vpack.c.bf16 %v2618, %v2617
      %v2646 = vpack.c.bf16 %v2620, %v2619
      %v2647 = vpack.c.bf16 %v2622, %v2621
      %v2648 = vpack.c.bf16 %v2624, %v2623
      %v2649 = vpack.c.bf16 %v2626, %v2625
      %v2650 = vpack.c.bf16 %v2628, %v2627
      %v2651 = vpack.c.bf16 %v2630, %v2629
      %v2652 = vpack.c.bf16 %v2632, %v2631
      %v2653 = vpack.c.bf16 %v2634, %v2633
      %v2654 = vpack.c.bf16 %v2636, %v2635
      %v2655 = vpack.c.bf16 %v2638, %v2637
      %v2656 = vpack.c.bf16 %v2640, %v2639
      %s2657 = scalar_lea.vmem %s1, 16
      %v2658 = vld [vmem:[%s2657] sm:$0x3]
      %v2660 = vsel %vm287, %v2641, 0
      %v2663 = vsel %vm287, %v2642, 0
      %v2666 = vsel %vm287, %v2643, 0
      %v2669 = vsel %vm287, %v2644, 0
      %v2672 = vsel %vm287, %v2645, 0
      %v2675 = vsel %vm287, %v2646, 0
      %v2678 = vsel %vm287, %v2647, 0
      %v2681 = vsel %vm287, %v2648, 0
      %v2684 = vsel %vm287, %v2649, 0
      %v2687 = vsel %vm287, %v2650, 0
      %v2690 = vsel %vm287, %v2651, 0
      %v2693 = vsel %vm287, %v2652, 0
      %v2696 = vsel %vm287, %v2653, 0
      %v2699 = vsel %vm287, %v2654, 0
      %v2702 = vsel %vm287, %v2655, 0
      %v2705 = vsel %vm287, %v2656, 0
      %v2708 = vsel %vm467, %v2658, 0
      %2710 = vmatprep.subr.bf16.mxu0 0
      %2711 = vmatpush1.bf16.msra.mxu0 0
      %2712 = vmatprep.subr.bf16.mxu0 0
      %2713 = vmatpush1.bf16.msra.mxu0 0
      %2714 = vmatprep.subr.bf16.mxu0 0
      %2715 = vmatpush1.bf16.msra.mxu0 0
      %2716 = vmatprep.subr.bf16.mxu0 0
      %2717 = vmatpush1.bf16.msra.mxu0 0
      %2718 = vmatprep.subr.bf16.mxu0 0
      %2719 = vmatpush1.bf16.msra.mxu0 0
      %2720 = vmatprep.subr.bf16.mxu0 0
      %2721 = vmatpush1.bf16.msra.mxu0 0
      %2722 = vmatprep.subr.bf16.mxu0 0
      %2723 = vmatpush1.bf16.msra.mxu0 0
      %2724 = vmatprep.subr.bf16.mxu0 0
      %2725 = vmatpush1.bf16.msra.mxu0 %v2708
      %2726 = vmatprep.subr.bf16.mxu0 0
      %2727 = vmatpush2.bf16.msra.mxu0 0
      %2728 = vmatprep.subr.bf16.mxu0 0
      %2729 = vmatpush2.bf16.msra.mxu0 0
      %2730 = vmatprep.subr.bf16.mxu0 0
      %2731 = vmatpush2.bf16.msra.mxu0 0
      %2732 = vmatprep.subr.bf16.mxu0 0
      %2733 = vmatpush2.bf16.msra.mxu0 0
      %2734 = vmatprep.subr.bf16.mxu0 0
      %2735 = vmatpush2.bf16.msra.mxu0 0
      %2736 = vmatprep.subr.bf16.mxu0 0
      %2737 = vmatpush2.bf16.msra.mxu0 0
      %2738 = vmatprep.subr.bf16.mxu0 0
      %2739 = vmatpush2.bf16.msra.mxu0 0
      %2740 = vmatprep.subr.bf16.mxu0 0
      %2741 = vmatpush2.bf16.msra.mxu0 0
      %2742 = vmatprep.mubr.bf16.mxu0 0
      %2743 = vmatmul.mubr.bf16.gmra.mxu0 %v2660
      %v2744 = vpop.f32.mrf.mxu0
      %v2745 = vadd.f32 0.0, %v2744
      %v2746 = vpop.f32.mrf.mxu0
      %v2747 = vpop.f32.mrf.mxu0
      %v2748 = vadd.f32 0.0, %v2747
      %v2749 = vpop.f32.mrf.mxu0
      %2750 = vmatprep.mubr.bf16.mxu0 0
      %2751 = vmatmul.mubr.bf16.gmra.mxu0 %v2663
      %v2752 = vpop.f32.mrf.mxu0
      %v2753 = vadd.f32 0.0, %v2752
      %v2754 = vpop.f32.mrf.mxu0
      %v2755 = vpop.f32.mrf.mxu0
      %v2756 = vadd.f32 0.0, %v2755
      %v2757 = vpop.f32.mrf.mxu0
      %2758 = vmatprep.mubr.bf16.mxu0 0
      %2759 = vmatmul.mubr.bf16.gmra.mxu0 %v2666
      %v2760 = vpop.f32.mrf.mxu0
      %v2761 = vadd.f32 0.0, %v2760
      %v2762 = vpop.f32.mrf.mxu0
      %v2763 = vpop.f32.mrf.mxu0
      %v2764 = vadd.f32 0.0, %v2763
      %v2765 = vpop.f32.mrf.mxu0
      %2766 = vmatprep.mubr.bf16.mxu0 0
      %2767 = vmatmul.mubr.bf16.gmra.mxu0 %v2669
      %v2768 = vpop.f32.mrf.mxu0
      %v2769 = vadd.f32 0.0, %v2768
      %v2770 = vpop.f32.mrf.mxu0
      %v2771 = vpop.f32.mrf.mxu0
      %v2772 = vadd.f32 0.0, %v2771
      %v2773 = vpop.f32.mrf.mxu0
      %2774 = vmatprep.mubr.bf16.mxu0 0
      %2775 = vmatmul.mubr.bf16.gmra.mxu0 %v2672
      %v2776 = vpop.f32.mrf.mxu0
      %v2777 = vadd.f32 0.0, %v2776
      %v2778 = vpop.f32.mrf.mxu0
      %v2779 = vpop.f32.mrf.mxu0
      %v2780 = vadd.f32 0.0, %v2779
      %v2781 = vpop.f32.mrf.mxu0
      %2782 = vmatprep.mubr.bf16.mxu0 0
      %2783 = vmatmul.mubr.bf16.gmra.mxu0 %v2675
      %v2784 = vpop.f32.mrf.mxu0
      %v2785 = vadd.f32 0.0, %v2784
      %v2786 = vpop.f32.mrf.mxu0
      %v2787 = vpop.f32.mrf.mxu0
      %v2788 = vadd.f32 0.0, %v2787
      %v2789 = vpop.f32.mrf.mxu0
      %2790 = vmatprep.mubr.bf16.mxu0 0
      %2791 = vmatmul.mubr.bf16.gmra.mxu0 %v2678
      %v2792 = vpop.f32.mrf.mxu0
      %v2793 = vadd.f32 0.0, %v2792
      %v2794 = vpop.f32.mrf.mxu0
      %v2795 = vpop.f32.mrf.mxu0
      %v2796 = vadd.f32 0.0, %v2795
      %v2797 = vpop.f32.mrf.mxu0
      %2798 = vmatprep.mubr.bf16.mxu0 0
      %2799 = vmatmul.mubr.bf16.gmra.mxu0 %v2681
      %v2800 = vpop.f32.mrf.mxu0
      %v2801 = vadd.f32 0.0, %v2800
      %v2802 = vpop.f32.mrf.mxu0
      %v2803 = vpop.f32.mrf.mxu0
      %v2804 = vadd.f32 0.0, %v2803
      %v2805 = vpop.f32.mrf.mxu0
      %2806 = vmatprep.mubr.bf16.mxu0 0
      %2807 = vmatmul.mubr.bf16.gmra.mxu0 %v2684
      %v2808 = vpop.f32.mrf.mxu0
      %v2809 = vadd.f32 0.0, %v2808
      %v2810 = vpop.f32.mrf.mxu0
      %v2811 = vpop.f32.mrf.mxu0
      %v2812 = vadd.f32 0.0, %v2811
      %v2813 = vpop.f32.mrf.mxu0
      %2814 = vmatprep.mubr.bf16.mxu0 0
      %2815 = vmatmul.mubr.bf16.gmra.mxu0 %v2687
      %v2816 = vpop.f32.mrf.mxu0
      %v2817 = vadd.f32 0.0, %v2816
      %v2818 = vpop.f32.mrf.mxu0
      %v2819 = vpop.f32.mrf.mxu0
      %v2820 = vadd.f32 0.0, %v2819
      %v2821 = vpop.f32.mrf.mxu0
      %2822 = vmatprep.mubr.bf16.mxu0 0
      %2823 = vmatmul.mubr.bf16.gmra.mxu0 %v2690
      %v2824 = vpop.f32.mrf.mxu0
      %v2825 = vadd.f32 0.0, %v2824
      %v2826 = vpop.f32.mrf.mxu0
      %v2827 = vpop.f32.mrf.mxu0
      %v2828 = vadd.f32 0.0, %v2827
      %v2829 = vpop.f32.mrf.mxu0
      %2830 = vmatprep.mubr.bf16.mxu0 0
      %2831 = vmatmul.mubr.bf16.gmra.mxu0 %v2693
      %v2832 = vpop.f32.mrf.mxu0
      %v2833 = vadd.f32 0.0, %v2832
      %v2834 = vpop.f32.mrf.mxu0
      %v2835 = vpop.f32.mrf.mxu0
      %v2836 = vadd.f32 0.0, %v2835
      %v2837 = vpop.f32.mrf.mxu0
      %2838 = vmatprep.mubr.bf16.mxu0 0
      %2839 = vmatmul.mubr.bf16.gmra.mxu0 %v2696
      %v2840 = vpop.f32.mrf.mxu0
      %v2841 = vadd.f32 0.0, %v2840
      %v2842 = vpop.f32.mrf.mxu0
      %v2843 = vpop.f32.mrf.mxu0
      %v2844 = vadd.f32 0.0, %v2843
      %v2845 = vpop.f32.mrf.mxu0
      %2846 = vmatprep.mubr.bf16.mxu0 0
      %2847 = vmatmul.mubr.bf16.gmra.mxu0 %v2699
      %v2848 = vpop.f32.mrf.mxu0
      %v2849 = vadd.f32 0.0, %v2848
      %v2850 = vpop.f32.mrf.mxu0
      %v2851 = vpop.f32.mrf.mxu0
      %v2852 = vadd.f32 0.0, %v2851
      %v2853 = vpop.f32.mrf.mxu0
      %2854 = vmatprep.mubr.bf16.mxu0 0
      %2855 = vmatmul.mubr.bf16.gmra.mxu0 %v2702
      %v2856 = vpop.f32.mrf.mxu0
      %v2857 = vadd.f32 0.0, %v2856
      %v2858 = vpop.f32.mrf.mxu0
      %v2859 = vpop.f32.mrf.mxu0
      %v2860 = vadd.f32 0.0, %v2859
      %v2861 = vpop.f32.mrf.mxu0
      %2862 = vmatprep.mubr.bf16.mxu0 0
      %2863 = vmatmul.mubr.bf16.gmra.mxu0 %v2705
      %v2864 = vpop.f32.mrf.mxu0
      %v2865 = vadd.f32 0.0, %v2864
      %v2866 = vpop.f32.mrf.mxu0
      %v2867 = vpop.f32.mrf.mxu0
      %v2868 = vadd.f32 0.0, %v2867
      %v2869 = vpop.f32.mrf.mxu0
      %2870 = vdwg.mxu0
      %v2871 = vadd.f32 %v2577, %v2745
      %v2872 = vadd.f32 %v2578, %v2748
      %v2873 = vadd.f32 %v2579, %v2753
      %v2874 = vadd.f32 %v2580, %v2756
      %v2875 = vadd.f32 %v2581, %v2761
      %v2876 = vadd.f32 %v2582, %v2764
      %v2877 = vadd.f32 %v2583, %v2769
      %v2878 = vadd.f32 %v2584, %v2772
      %v2879 = vadd.f32 %v2585, %v2777
      %v2880 = vadd.f32 %v2586, %v2780
      %v2881 = vadd.f32 %v2587, %v2785
      %v2882 = vadd.f32 %v2588, %v2788
      %v2883 = vadd.f32 %v2589, %v2793
      %v2884 = vadd.f32 %v2590, %v2796
      %v2885 = vadd.f32 %v2591, %v2801
      %v2886 = vadd.f32 %v2592, %v2804
      %v2887 = vadd.f32 %v2593, %v2809
      %v2888 = vadd.f32 %v2594, %v2812
      %v2889 = vadd.f32 %v2595, %v2817
      %v2890 = vadd.f32 %v2596, %v2820
      %v2891 = vadd.f32 %v2597, %v2825
      %v2892 = vadd.f32 %v2598, %v2828
      %v2893 = vadd.f32 %v2599, %v2833
      %v2894 = vadd.f32 %v2600, %v2836
      %v2895 = vadd.f32 %v2601, %v2841
      %v2896 = vadd.f32 %v2602, %v2844
      %v2897 = vadd.f32 %v2603, %v2849
      %v2898 = vadd.f32 %v2604, %v2852
      %v2899 = vadd.f32 %v2605, %v2857
      %v2900 = vadd.f32 %v2606, %v2860
      %v2901 = vadd.f32 %v2607, %v2865
      %v2902 = vadd.f32 %v2608, %v2868
      %vm2903 = vcmask 64512
      %2904 = vst.msk [vmem:[%s192] sm:$0xff] %vm2903, %v2871
      %2905 = vst.msk [vmem:[%s192 + $0x8] sm:$0xff] %vm2903, %v2872
      %2906 = vst.msk [vmem:[%s192 + $0x10] sm:$0xff] %vm2903, %v2873
      %2907 = vst.msk [vmem:[%s192 + $0x18] sm:$0xff] %vm2903, %v2874
      %2908 = vst.msk [vmem:[%s192 + $0x20] sm:$0xff] %vm2903, %v2875
      %2909 = vst.msk [vmem:[%s192 + $0x28] sm:$0xff] %vm2903, %v2876
      %2910 = vst.msk [vmem:[%s192 + $0x30] sm:$0xff] %vm2903, %v2877
      %2911 = vst.msk [vmem:[%s192 + $0x38] sm:$0xff] %vm2903, %v2878
      %2912 = vst.msk [vmem:[%s192 + $0x40] sm:$0xff] %vm2903, %v2879
      %2913 = vst.msk [vmem:[%s192 + $0x48] sm:$0xff] %vm2903, %v2880
      %2914 = vst.msk [vmem:[%s192 + $0x50] sm:$0xff] %vm2903, %v2881
      %2915 = vst.msk [vmem:[%s192 + $0x58] sm:$0xff] %vm2903, %v2882
      %2916 = vst.msk [vmem:[%s192 + $0x60] sm:$0xff] %vm2903, %v2883
      %2917 = vst.msk [vmem:[%s192 + $0x68] sm:$0xff] %vm2903, %v2884
      %2918 = vst.msk [vmem:[%s192 + $0x70] sm:$0xff] %vm2903, %v2885
      %2919 = vst.msk [vmem:[%s192 + $0x78] sm:$0xff] %vm2903, %v2886
      %2920 = vst.msk [vmem:[%s192 + $0x80] sm:$0xff] %vm2903, %v2887
      %2921 = vst.msk [vmem:[%s192 + $0x88] sm:$0xff] %vm2903, %v2888
      %2922 = vst.msk [vmem:[%s192 + $0x90] sm:$0xff] %vm2903, %v2889
      %2923 = vst.msk [vmem:[%s192 + $0x98] sm:$0xff] %vm2903, %v2890
      %2924 = vst.msk [vmem:[%s192 + $0xa0] sm:$0xff] %vm2903, %v2891
      %2925 = vst.msk [vmem:[%s192 + $0xa8] sm:$0xff] %vm2903, %v2892
      %2926 = vst.msk [vmem:[%s192 + $0xb0] sm:$0xff] %vm2903, %v2893
      %2927 = vst.msk [vmem:[%s192 + $0xb8] sm:$0xff] %vm2903, %v2894
      %2928 = vst.msk [vmem:[%s192 + $0xc0] sm:$0xff] %vm2903, %v2895
      %2929 = vst.msk [vmem:[%s192 + $0xc8] sm:$0xff] %vm2903, %v2896
      %2930 = vst.msk [vmem:[%s192 + $0xd0] sm:$0xff] %vm2903, %v2897
      %2931 = vst.msk [vmem:[%s192 + $0xd8] sm:$0xff] %vm2903, %v2898
      %2932 = vst.msk [vmem:[%s192 + $0xe0] sm:$0xff] %vm2903, %v2899
      %2933 = vst.msk [vmem:[%s192 + $0xe8] sm:$0xff] %vm2903, %v2900
      %2934 = vst.msk [vmem:[%s192 + $0xf0] sm:$0xff] %vm2903, %v2901
      %2935 = vst.msk [vmem:[%s192 + $0xf8] sm:$0xff] %vm2903, %v2902
      %v2936 = vsel %vm2903, %v2871, 0.0
      %v2937 = vsel %vm2903, %v2872, 0.0
      %v2938 = vadd.f32 %v2936, %v2937
      %v2939 = vsel %vm2903, %v2873, 0.0
      %v2940 = vadd.f32 %v2938, %v2939
      %v2941 = vsel %vm2903, %v2874, 0.0
      %v2942 = vadd.f32 %v2940, %v2941
      %v2943 = vsel %vm2903, %v2875, 0.0
      %v2944 = vadd.f32 %v2942, %v2943
      %v2945 = vsel %vm2903, %v2876, 0.0
      %v2946 = vadd.f32 %v2944, %v2945
      %v2947 = vsel %vm2903, %v2877, 0.0
      %v2948 = vadd.f32 %v2946, %v2947
      %v2949 = vsel %vm2903, %v2878, 0.0
      %v2950 = vadd.f32 %v2948, %v2949
      %v2951 = vsel %vm2903, %v2879, 0.0
      %v2952 = vadd.f32 %v2950, %v2951
      %v2953 = vsel %vm2903, %v2880, 0.0
      %v2954 = vadd.f32 %v2952, %v2953
      %v2955 = vsel %vm2903, %v2881, 0.0
      %v2956 = vadd.f32 %v2954, %v2955
      %v2957 = vsel %vm2903, %v2882, 0.0
      %v2958 = vadd.f32 %v2956, %v2957
      %v2959 = vsel %vm2903, %v2883, 0.0
      %v2960 = vadd.f32 %v2958, %v2959
      %v2961 = vsel %vm2903, %v2884, 0.0
      %v2962 = vadd.f32 %v2960, %v2961
      %v2963 = vsel %vm2903, %v2885, 0.0
      %v2964 = vadd.f32 %v2962, %v2963
      %v2965 = vsel %vm2903, %v2886, 0.0
      %v2966 = vadd.f32 %v2964, %v2965
      %v2967 = vsel %vm2903, %v2887, 0.0
      %v2968 = vadd.f32 %v2966, %v2967
      %v2969 = vsel %vm2903, %v2888, 0.0
      %v2970 = vadd.f32 %v2968, %v2969
      %v2971 = vsel %vm2903, %v2889, 0.0
      %v2972 = vadd.f32 %v2970, %v2971
      %v2973 = vsel %vm2903, %v2890, 0.0
      %v2974 = vadd.f32 %v2972, %v2973
      %v2975 = vsel %vm2903, %v2891, 0.0
      %v2976 = vadd.f32 %v2974, %v2975
      %v2977 = vsel %vm2903, %v2892, 0.0
      %v2978 = vadd.f32 %v2976, %v2977
      %v2979 = vsel %vm2903, %v2893, 0.0
      %v2980 = vadd.f32 %v2978, %v2979
      %v2981 = vsel %vm2903, %v2894, 0.0
      %v2982 = vadd.f32 %v2980, %v2981
      %v2983 = vsel %vm2903, %v2895, 0.0
      %v2984 = vadd.f32 %v2982, %v2983
      %v2985 = vsel %vm2903, %v2896, 0.0
      %v2986 = vadd.f32 %v2984, %v2985
      %v2987 = vsel %vm2903, %v2897, 0.0
      %v2988 = vadd.f32 %v2986, %v2987
      %v2989 = vsel %vm2903, %v2898, 0.0
      %v2990 = vadd.f32 %v2988, %v2989
      %v2991 = vsel %vm2903, %v2899, 0.0
      %v2992 = vadd.f32 %v2990, %v2991
      %v2993 = vsel %vm2903, %v2900, 0.0
      %v2994 = vadd.f32 %v2992, %v2993
      %v2995 = vsel %vm2903, %v2901, 0.0
      %v2996 = vadd.f32 %v2994, %v2995
      %v2997 = vsel %vm2903, %v2902, 0.0
      %v2998 = vadd.f32 %v2996, %v2997
      %v2999 = vrot.slane %v2998, 4
      %v3000 = vadd.f32 %v2998, %v2999
      %v3001 = vrot.slane %v3000, 2
      %v3002 = vadd.f32 %v3000, %v3001
      %v3003 = vrot.slane %v3002, 1
      %v3004 = vadd.f32 %v3002, %v3003
      %v3005 = vmul.f32 %v2871, %v2871
      %v3006 = vmul.f32 %v2872, %v2872
      %v3007 = vmul.f32 %v2873, %v2873
      %v3008 = vmul.f32 %v2874, %v2874
      %v3009 = vmul.f32 %v2875, %v2875
      %v3010 = vmul.f32 %v2876, %v2876
      %v3011 = vmul.f32 %v2877, %v2877
      %v3012 = vmul.f32 %v2878, %v2878
      %v3013 = vmul.f32 %v2879, %v2879
      %v3014 = vmul.f32 %v2880, %v2880
      %v3015 = vmul.f32 %v2881, %v2881
      %v3016 = vmul.f32 %v2882, %v2882
      %v3017 = vmul.f32 %v2883, %v2883
      %v3018 = vmul.f32 %v2884, %v2884
      %v3019 = vmul.f32 %v2885, %v2885
      %v3020 = vmul.f32 %v2886, %v2886
      %v3021 = vmul.f32 %v2887, %v2887
      %v3022 = vmul.f32 %v2888, %v2888
      %v3023 = vmul.f32 %v2889, %v2889
      %v3024 = vmul.f32 %v2890, %v2890
      %v3025 = vmul.f32 %v2891, %v2891
      %v3026 = vmul.f32 %v2892, %v2892
      %v3027 = vmul.f32 %v2893, %v2893
      %v3028 = vmul.f32 %v2894, %v2894
      %v3029 = vmul.f32 %v2895, %v2895
      %v3030 = vmul.f32 %v2896, %v2896
      %v3031 = vmul.f32 %v2897, %v2897
      %v3032 = vmul.f32 %v2898, %v2898
      %v3033 = vmul.f32 %v2899, %v2899
      %v3034 = vmul.f32 %v2900, %v2900
      %v3035 = vmul.f32 %v2901, %v2901
      %v3036 = vmul.f32 %v2902, %v2902
      %v3037 = vsel %vm2903, %v3005, 0.0
      %v3038 = vsel %vm2903, %v3006, 0.0
      %v3039 = vadd.f32 %v3037, %v3038
      %v3040 = vsel %vm2903, %v3007, 0.0
      %v3041 = vadd.f32 %v3039, %v3040
      %v3042 = vsel %vm2903, %v3008, 0.0
      %v3043 = vadd.f32 %v3041, %v3042
      %v3044 = vsel %vm2903, %v3009, 0.0
      %v3045 = vadd.f32 %v3043, %v3044
      %v3046 = vsel %vm2903, %v3010, 0.0
      %v3047 = vadd.f32 %v3045, %v3046
      %v3048 = vsel %vm2903, %v3011, 0.0
      %v3049 = vadd.f32 %v3047, %v3048
      %v3050 = vsel %vm2903, %v3012, 0.0
      %v3051 = vadd.f32 %v3049, %v3050
      %v3052 = vsel %vm2903, %v3013, 0.0
      %v3053 = vadd.f32 %v3051, %v3052
      %v3054 = vsel %vm2903, %v3014, 0.0
      %v3055 = vadd.f32 %v3053, %v3054
      %v3056 = vsel %vm2903, %v3015, 0.0
      %v3057 = vadd.f32 %v3055, %v3056
      %v3058 = vsel %vm2903, %v3016, 0.0
      %v3059 = vadd.f32 %v3057, %v3058
      %v3060 = vsel %vm2903, %v3017, 0.0
      %v3061 = vadd.f32 %v3059, %v3060
      %v3062 = vsel %vm2903, %v3018, 0.0
      %v3063 = vadd.f32 %v3061, %v3062
      %v3064 = vsel %vm2903, %v3019, 0.0
      %v3065 = vadd.f32 %v3063, %v3064
      %v3066 = vsel %vm2903, %v3020, 0.0
      %v3067 = vadd.f32 %v3065, %v3066
      %v3068 = vsel %vm2903, %v3021, 0.0
      %v3069 = vadd.f32 %v3067, %v3068
      %v3070 = vsel %vm2903, %v3022, 0.0
      %v3071 = vadd.f32 %v3069, %v3070
      %v3072 = vsel %vm2903, %v3023, 0.0
      %v3073 = vadd.f32 %v3071, %v3072
      %v3074 = vsel %vm2903, %v3024, 0.0
      %v3075 = vadd.f32 %v3073, %v3074
      %v3076 = vsel %vm2903, %v3025, 0.0
      %v3077 = vadd.f32 %v3075, %v3076
      %v3078 = vsel %vm2903, %v3026, 0.0
      %v3079 = vadd.f32 %v3077, %v3078
      %v3080 = vsel %vm2903, %v3027, 0.0
      %v3081 = vadd.f32 %v3079, %v3080
      %v3082 = vsel %vm2903, %v3028, 0.0
      %v3083 = vadd.f32 %v3081, %v3082
      %v3084 = vsel %vm2903, %v3029, 0.0
      %v3085 = vadd.f32 %v3083, %v3084
      %v3086 = vsel %vm2903, %v3030, 0.0
      %v3087 = vadd.f32 %v3085, %v3086
      %v3088 = vsel %vm2903, %v3031, 0.0
      %v3089 = vadd.f32 %v3087, %v3088
      %v3090 = vsel %vm2903, %v3032, 0.0
      %v3091 = vadd.f32 %v3089, %v3090
      %v3092 = vsel %vm2903, %v3033, 0.0
      %v3093 = vadd.f32 %v3091, %v3092
      %v3094 = vsel %vm2903, %v3034, 0.0
      %v3095 = vadd.f32 %v3093, %v3094
      %v3096 = vsel %vm2903, %v3035, 0.0
      %v3097 = vadd.f32 %v3095, %v3096
      %v3098 = vsel %vm2903, %v3036, 0.0
      %v3099 = vadd.f32 %v3097, %v3098
      %v3100 = vrot.slane %v3099, 4
      %v3101 = vadd.f32 %v3099, %v3100
      %v3102 = vrot.slane %v3101, 2
      %v3103 = vadd.f32 %v3101, %v3102
      %v3104 = vrot.slane %v3103, 1
      %v3105 = vadd.f32 %v3103, %v3104
      // Predicated region
      $region33: #{basic_conv.2} parent=27 // pred_check
        %p3106 = pneg %p194
      $region34: #{basic_conv.2} parent=27 // pred_check_branch
        %3108 = sbr.rel (%p3106) target = $region36
      $region35: #{basic_conv.2} parent=27 // pred_region
        %vm3109 = vcmask 57344
        %3110 = vst.msk [vmem:[%s3] sm:$0x1] %vm3109, %v3004
        %3111 = vst.msk [vmem:[%s4] sm:$0x1] %vm3109, %v3105
      $region36: #{basic_conv.2} parent=27 // pred_fallthru
        _
      %p3112 = scmp.gt.s32.totalorder %s16, 0
      // Predicated region
      $region37: #{basic_conv.2} parent=27 // pred_check
        %p3113 = pneg %p3112
      $region38: #{basic_conv.2} parent=27 // pred_check_branch
        %3115 = sbr.rel (%p3113) target = $region40
      $region39: #{basic_conv.2} parent=27 // pred_region
        %v3116 = vld [vmem:[%s3] sm:$0x1]
        %v3117 = vadd.f32 %v3116, %v3004
        %vm3118 = vcmask 57344
        %3119 = vst.msk [vmem:[%s3] sm:$0x1] %vm3118, %v3117
        %v3120 = vld [vmem:[%s4] sm:$0x1]
        %v3121 = vadd.f32 %v3120, %v3105
        %3122 = vst.msk [vmem:[%s4] sm:$0x1] %vm3118, %v3121
      $region40: #{basic_conv.2} parent=27 // pred_fallthru
        _
      %p3123 = scmp.lt.s32.totalorder %s16, 1
      %s3124 = scalar_select %p3123, %s16, 1
      %s3125 = smul.addr %s3124, 32
      %s3126 = smul.addr %s3125, 8
      %s3127 = scalar_lea.vmem %s2, %s3126
      // Predicated region
      $region41: #{basic_conv.2} parent=27 // pred_check
        %p3128 = pneg %p81
      $region42: #{basic_conv.2} parent=27 // pred_check_branch
        %3130 = sbr.rel (%p3128) target = $region44
      $region43: #{basic_conv.2} parent=27 // pred_region
        _
      $region44: #{basic_conv.2} parent=27 // pred_fallthru
        _
      // Predicated region
      $region45: #{basic_conv.2} parent=27 // pred_check
        %p3131 = pneg %p102
      $region46: #{basic_conv.2} parent=27 // pred_check_branch
        %3133 = sbr.rel (%p3131) target = $region48
      $region47: #{basic_conv.2} parent=27 // pred_region
        _
      $region48: #{basic_conv.2} parent=27 // pred_fallthru
        _
      // Predicated region
      $region49: #{basic_conv.2} parent=27 // pred_check
        %p3134 = pneg %p123
      $region50: #{basic_conv.2} parent=27 // pred_check_branch
        %3136 = sbr.rel (%p3134) target = $region52
      $region51: #{basic_conv.2} parent=27 // pred_region
        _
      $region52: #{basic_conv.2} parent=27 // pred_fallthru
        _
      // Predicated region
      $region53: #{basic_conv.2} parent=27 // pred_check
        %p3137 = pneg %p102
      $region54: #{basic_conv.2} parent=27 // pred_check_branch
        %3139 = sbr.rel (%p3137) target = $region56
      $region55: #{basic_conv.2} parent=27 // pred_region
        _
      $region56: #{basic_conv.2} parent=27 // pred_fallthru
        _
      // Predicated region
      $region57: #{basic_conv.2} parent=27 // pred_check
        %p3140 = pneg %p123
      $region58: #{basic_conv.2} parent=27 // pred_check_branch
        %3142 = sbr.rel (%p3140) target = $region60
      $region59: #{basic_conv.2} parent=27 // pred_region
        _
      $region60: #{basic_conv.2} parent=27 // pred_fallthru
        _
    $region28: #{basic_conv.2} parent=5 // pred_fallthru
      _
    %p3143 = scmp.le.s32.totalorder 2, %s11
    // Predicated region
    $region61: #{basic_conv.2} parent=5 // pred_check
      %p3144 = pneg %p3143
    $region62: #{basic_conv.2} parent=5 // pred_check_branch
      %3146 = sbr.rel (%p3144) target = $region64
    $region63: #{basic_conv.2} parent=5 // pred_region
      %s3147 = ssub.s32 %s11, 2
      // Predicated region
      $region65: #{basic_conv.2} parent=63 // pred_check
        %p3148 = pneg %p87
      $region66: #{basic_conv.2} parent=63 // pred_check_branch
        %3150 = sbr.rel (%p3148) target = $region68
      $region67: #{basic_conv.2} parent=63 // pred_region
        %p3151 = scmp.lt.s32.totalorder %s17, 1
        %s3152 = scalar_select %p3151, %s17, 1
        %s3153 = smul.addr %s3152, 32
        %s3154 = smul.addr %s3153, 8
        %s3155 = scalar_lea.vmem %s2, %s3154
      $region68: #{basic_conv.2} parent=63 // pred_fallthru
        _
    $region64: #{basic_conv.2} parent=5 // pred_fallthru
      _
  $region6: #{basic_conv.2} parent=0 // loop_footer
    %s15 = sadd.s32 1, %s11
  $region7: #{basic_conv.2} parent=0 // loop_footer_branch
    %10 = sbr.rel target = $region3
  $region8: #{basic_conv.2} parent=0 // loop_exit
    _

</llo_original>
